<compile_context>
chip_gen: v5e
topology: v5e:2x2
jax: 0.10.0
libtpu: 0.0.40
codegen_flags: <defaults>
</compile_context>

<pallas_src>
import functools

import jax
import jax.numpy as jnp
from jax import lax
from jax.experimental import pallas as pl
from jax.experimental.pallas import tpu as pltpu

EPS = 1e-5
LANE = 128
# v7x has 64 MiB VMEM per TensorCore (v5e/v6e: 128 MiB); leave headroom.
VMEM_LIMIT = 40 * 1024 * 1024


def _round_up(x, m):
    return ((x + m - 1) // m) * m


def _pick_row_tile(ho, wo, max_rows):
    """Largest divisor d of ho with d*wo <= max_rows and sublane-dense tiles.

    The flattened row tile (d*wo) must be a multiple of 8 (sublane) so stores
    are unmasked; falls back to one whole-image tile (block == full dim).
    """
    best = None
    for d in range(1, ho + 1):
        rows = d * wo
        if ho % d == 0 and rows <= max_rows and rows % 8 == 0:
            best = d
    return best if best is not None else ho


# ----------------------------- Pallas kernels ------------------------------ #

def _conv3x3_kernel(x_ref, w_ref, z_ref, sum_ref, ssq_ref, *, stride, tr, wo):
    """Implicit-im2col 3x3 conv (no fused input BN) for one (image, row-tile).

    x_ref   : (stride*stride, Hq, Wq, Cin) phase-decomposed, zero-padded
              activations (bf16), resident for the whole image.
    w_ref   : (9, Cin, Cpad) tap-major weights (bf16, Cout lane-padded).
    z_ref   : (tr*Wo, Cpad) raw conv output tile (bf16, flattened rows).
    sum_ref : (1, Cpad) / ssq_ref : (1, Cpad) per-tile BN partial stats (f32).

    The 9 tap matmuls are accumulated as a value expression: no VMEM scratch
    read-modify-write (the old per-tap '+=' saturated the vst slot).
    """
    r0 = pl.program_id(1) * tr
    acc = None
    for kh in range(3):
        for kw in range(3):
            phase = (kh % stride) * stride + (kw % stride)
            dh, dw = kh // stride, kw // stride
            slab = x_ref[phase, pl.ds(r0 + dh, tr), pl.ds(dw, wo), :]
            slab = slab.astype(jnp.bfloat16).reshape(tr * wo, slab.shape[-1])
            d = jnp.dot(slab, w_ref[kh * 3 + kw],
                        preferred_element_type=jnp.float32)
            acc = d if acc is None else acc + d
    z_ref[...] = acc.astype(z_ref.dtype)
    # Per-tile partial statistics -> tiling-safe training-mode BatchNorm.
    sum_ref[...] = jnp.sum(acc, axis=0, keepdims=True)
    ssq_ref[...] = jnp.sum(acc * acc, axis=0, keepdims=True)


def _conv3x3_bnin_kernel(x_ref, w_ref, sc_ref, sh_ref, z_ref, sum_ref, ssq_ref,
                         *, tr, wo, ho):
    """3x3 stride-1 conv with the previous conv's BN-apply + ReLU fused onto
    its input.

    The BN affine + ReLU (f32 VPU) runs ONCE on the (tr+2, Wo+2, C) halo
    window; the zero-padding ring is re-zeroed afterwards because padding must
    be zero AFTER BN+ReLU to match `pad(ReLU(BN(conv1))) -> conv2` semantics.
    """
    r0 = pl.program_id(1) * tr
    halo = x_ref[0, pl.ds(r0, tr + 2), :, :].astype(jnp.float32)   # (tr+2, wo+2, C)
    y = jnp.maximum(halo * sc_ref[...] + sh_ref[...], 0.0)
    rows = lax.broadcasted_iota(jnp.int32, y.shape, 0) + r0         # padded row coord
    cols = lax.broadcasted_iota(jnp.int32, y.shape, 1)              # padded col coord
    interior = (rows >= 1) & (rows <= ho) & (cols >= 1) & (cols <= wo)
    y = jnp.where(interior, y, 0.0).astype(jnp.bfloat16)
    cin = y.shape[-1]
    acc = None
    for kh in range(3):
        for kw in range(3):
            slab = y[kh:kh + tr, kw:kw + wo, :].reshape(tr * wo, cin)
            d = jnp.dot(slab, w_ref[kh * 3 + kw],
                        preferred_element_type=jnp.float32)
            acc = d if acc is None else acc + d
    z_ref[...] = acc.astype(z_ref.dtype)
    sum_ref[...] = jnp.sum(acc, axis=0, keepdims=True)
    ssq_ref[...] = jnp.sum(acc * acc, axis=0, keepdims=True)


def _epilogue_add_kernel(z_ref, sc_ref, sh_ref, xs_ref, o_ref):
    """BN2-apply + ReLU + identity-shortcut add + final ReLU (pure VPU)."""
    y = jnp.maximum(z_ref[...].astype(jnp.float32) * sc_ref[...] + sh_ref[...], 0.0)
    y = y + xs_ref[...].astype(jnp.float32)
    o_ref[...] = jnp.maximum(y, 0.0).astype(o_ref.dtype)


def _epilogue_proj_kernel(z_ref, sc_ref, sh_ref, xs_ref, wsc_ref, o_ref):
    """BN2-apply + ReLU + 1x1-conv shortcut matmul + add + final ReLU."""
    y = jnp.maximum(z_ref[...].astype(jnp.float32) * sc_ref[...] + sh_ref[...], 0.0)
    short = jnp.dot(xs_ref[...], wsc_ref[...], preferred_element_type=jnp.float32)
    o_ref[...] = jnp.maximum(y + short, 0.0).astype(o_ref.dtype)


# ------------------------------ pallas wrappers ----------------------------- #

def _conv3x3(x_phases, w9, bn_in, *, stride, ho, wo, tr):
    """Tiled 3x3 conv -> (flattened bf16 output, per-tile BN partial stats)."""
    n, s2, hq, wq, cin = x_phases.shape
    cpad = w9.shape[2]
    t_tiles = ho // tr
    rows = tr * wo

    base_specs = [
        # Padded activations stay resident per image (index map ignores t).
        pl.BlockSpec((None, s2, hq, wq, cin), lambda i, t: (i, 0, 0, 0, 0)),
        pl.BlockSpec((9, cin, cpad), lambda i, t: (0, 0, 0)),
    ]
    if bn_in is None:
        kernel = functools.partial(_conv3x3_kernel, stride=stride, tr=tr, wo=wo)
        operands = (x_phases, w9)
        in_specs = base_specs
    else:
        assert stride == 1, "fused-input-BN conv is only used for the stride-1 conv2"
        kernel = functools.partial(_conv3x3_bnin_kernel, tr=tr, wo=wo, ho=ho)
        operands = (x_phases, w9, bn_in[0], bn_in[1])
        in_specs = base_specs + [
            pl.BlockSpec((1, cpad), lambda i, t: (0, 0)),
            pl.BlockSpec((1, cpad), lambda i, t: (0, 0)),
        ]

    flops = 2 * n * ho * wo * 9 * cin * cpad
    bytes_accessed = (x_phases.size * 2 + w9.size * 2
                      + n * ho * wo * cpad * 2 + 2 * n * t_tiles * cpad * 4)
    return pl.pallas_call(
        kernel,
        out_shape=(jax.ShapeDtypeStruct((n, ho * wo, cpad), jnp.bfloat16),
                   jax.ShapeDtypeStruct((n, t_tiles, 1, cpad), jnp.float32),
                   jax.ShapeDtypeStruct((n, t_tiles, 1, cpad), jnp.float32)),
        grid=(n, t_tiles),
        in_specs=in_specs,
        out_specs=(
            pl.BlockSpec((None, rows, cpad), lambda i, t: (i, t, 0)),
            pl.BlockSpec((None, None, 1, cpad), lambda i, t: (i, t, 0, 0)),
            pl.BlockSpec((None, None, 1, cpad), lambda i, t: (i, t, 0, 0)),
        ),
        compiler_params=pltpu.CompilerParams(
            dimension_semantics=("parallel", "parallel"),
            vmem_limit_bytes=VMEM_LIMIT),
        cost_estimate=pl.CostEstimate(flops=int(flops), transcendentals=0,
                                      bytes_accessed=int(bytes_accessed)),
    )(*operands)


def _epilogue(z2, scale2, shift2, xs, wsc, *, tr, wo):
    """BN2-apply + ReLU + shortcut (add or 1x1-conv) + residual + final ReLU."""
    n, m, cpad = z2.shape
    rows = tr * wo
    t_tiles = m // rows
    cs = xs.shape[-1]

    common = [
        pl.BlockSpec((None, rows, cpad), lambda i, t: (i, t, 0)),
        pl.BlockSpec((1, cpad), lambda i, t: (0, 0)),
        pl.BlockSpec((1, cpad), lambda i, t: (0, 0)),
        pl.BlockSpec((None, rows, cs), lambda i, t: (i, t, 0)),
    ]
    if wsc is None:
        kernel = _epilogue_add_kernel
        operands = (z2, scale2, shift2, xs)
        in_specs = common
        flops = 2 * n * m * cpad
    else:
        kernel = _epilogue_proj_kernel
        operands = (z2, scale2, shift2, xs, wsc)
        in_specs = common + [pl.BlockSpec((cs, cpad), lambda i, t: (0, 0))]
        flops = 2 * n * m * cs * cpad
    bytes_accessed = z2.size * 2 + xs.size * 2 + n * m * cpad * 2
    return pl.pallas_call(
        kernel,
        out_shape=jax.ShapeDtypeStruct((n, m, cpad), jnp.bfloat16),
        grid=(n, t_tiles),
        in_specs=in_specs,
        out_specs=pl.BlockSpec((None, rows, cpad), lambda i, t: (i, t, 0)),
        compiler_params=pltpu.CompilerParams(
            dimension_semantics=("parallel", "parallel"),
            vmem_limit_bytes=VMEM_LIMIT),
        cost_estimate=pl.CostEstimate(flops=int(flops), transcendentals=0,
                                      bytes_accessed=int(bytes_accessed)),
    )(*operands)


# --------------------------------- JAX glue --------------------------------- #

def _phase_split(xp, stride):
    """(N,Hp,Wp,C) -> (N, s*s, Hp/s, Wp/s, C) so the kernel only does
    contiguous unit-stride slices even for strided convs."""
    n, hp, wp, c = xp.shape
    if stride == 1:
        return xp.reshape(n, 1, hp, wp, c)
    hpad, wpad = (-hp) % stride, (-wp) % stride
    if hpad or wpad:
        xp = jnp.pad(xp, ((0, 0), (0, hpad), (0, wpad), (0, 0)))
    hq, wq = (hp + hpad) // stride, (wp + wpad) // stride
    xr = xp.reshape(n, hq, stride, wq, stride, c)
    xr = jnp.transpose(xr, (0, 2, 4, 1, 3, 5))          # (n, ph, pw, hq, wq, c)
    return xr.reshape(n, stride * stride, hq, wq, c)


def _prep_conv_w(w_oihw, cin_pad, cpad):
    """(Cout,Cin,3,3) -> (9, cin_pad, cpad) bf16, tap-major, lane-padded Cout."""
    cout, cin, kh, kw = w_oihw.shape
    w = jnp.transpose(w_oihw, (2, 3, 1, 0)).reshape(kh * kw, cin, cout)
    w = jnp.pad(w, ((0, 0), (0, cin_pad - cin), (0, cpad - cout)))
    return w.astype(jnp.bfloat16)


def _bn_affine_from_stats(s, q, count, gamma_pad, beta_pad):
    """Reduce per-tile partials into the folded BN affine (training mode).

    Note: variance via E[x^2]-E[x]^2 in f32 (fine at these magnitudes; use a
    centered second pass for real training).  gamma/beta for the lane-padding
    channels MUST be zero-padded so those lanes fold to scale=0, shift=0.
    """
    mean = jnp.sum(s, axis=(0, 1, 2)) / count
    ex2 = jnp.sum(q, axis=(0, 1, 2)) / count
    var = jnp.maximum(ex2 - mean * mean, 0.0)            # biased batch variance
    scale = gamma_pad * lax.rsqrt(var + EPS)
    shift = beta_pad - mean * scale
    return (scale.reshape(1, -1).astype(jnp.float32),
            shift.reshape(1, -1).astype(jnp.float32))


def init_basic_block_params(key, in_channels, out_channels, strides):
    k1, k2, k3 = jax.random.split(key, 3)
    params = {
        "w1": jax.random.normal(k1, (out_channels, in_channels, 3, 3), jnp.float32) * 0.1,
        "g1": jnp.ones((1, out_channels), jnp.float32),
        "b1": jnp.zeros((1, out_channels), jnp.float32),
        "w2": jax.random.normal(k2, (out_channels, out_channels, 3, 3), jnp.float32) * 0.1,
        "g2": jnp.ones((1, out_channels), jnp.float32),
        "b2": jnp.zeros((1, out_channels), jnp.float32),
    }
    if strides != 1:
        params["w_sc"] = (
            jax.random.normal(k3, (out_channels, in_channels, 1, 1), jnp.float32) * 0.1
        )
    return params


def basic_block_forward(params, x_nhwc, strides, *, max_tile_rows=256,
                        trim_channels=True):
    """BasicBlock.forward (is_se=False) on NHWC activations.

    Output is bf16; set trim_channels=False when chaining blocks so the
    lane-padded channels are only trimmed once at the network boundary.
    """
    n, h, w, cin = x_nhwc.shape
    cout = params["w1"].shape[0]
    if strides == 1 and cin != cout:
        raise ValueError("identity shortcut requires in_channels == out_channels")
    cpad = _round_up(cout, LANE)                  # lane-dense output channels
    ho = (h - 1) // strides + 1
    wo = (w - 1) // strides + 1                   # 3x3, pad=1
    tr = _pick_row_tile(ho, wo, max_tile_rows)

    x = x_nhwc.astype(jnp.bfloat16)

    # conv1: raw conv tiles + per-tile batch statistics (tiling-safe train BN).
    # TODO(synk): fold this spatial pad / phase split into the kernel (halo
    #             DMA) to save the extra HBM pass over the activations.
    xp = jnp.pad(x, ((0, 0), (1, 1), (1, 1), (0, 0)))
    z1, s1, q1 = _conv3x3(_phase_split(xp, strides),
                          _prep_conv_w(params["w1"], cin, cpad),
                          None, stride=strides, ho=ho, wo=wo, tr=tr)
    g1 = jnp.pad(params["g1"].reshape(-1), (0, cpad - cout))   # zero-padded lanes
    b1 = jnp.pad(params["b1"].reshape(-1), (0, cpad - cout))
    scale1, shift1 = _bn_affine_from_stats(s1, q1, n * ho * wo, g1, b1)

    # conv2: BN1-apply + ReLU fused once onto its halo input, 3x3 stride-1 conv.
    # TODO(synk): have conv1 write a pre-padded buffer to drop this pad pass.
    z1p = jnp.pad(z1.reshape(n, ho, wo, cpad), ((0, 0), (1, 1), (1, 1), (0, 0)))
    z2, s2, q2 = _conv3x3(z1p.reshape(n, 1, ho + 2, wo + 2, cpad),
                          _prep_conv_w(params["w2"], cpad, cpad),
                          (scale1, shift1), stride=1, ho=ho, wo=wo, tr=tr)
    g2 = jnp.pad(params["g2"].reshape(-1), (0, cpad - cout))
    b2 = jnp.pad(params["b2"].reshape(-1), (0, cpad - cout))
    scale2, shift2 = _bn_affine_from_stats(s2, q2, n * ho * wo, g2, b2)

    # Shortcut: identity -> plain lane-padded add; stride>1 -> bare 1x1 conv.
    if strides == 1:
        xs = jnp.pad(x.reshape(n, h * w, cin), ((0, 0), (0, 0), (0, cpad - cin)))
        wsc = None
    else:
        xs = x[:, ::strides, ::strides, :].reshape(n, ho * wo, cin)
        wsc = jnp.pad(jnp.transpose(params["w_sc"][:, :, 0, 0]),
                      ((0, 0), (0, cpad - cout))).astype(jnp.bfloat16)

    out = _epilogue(z2, scale2, shift2, xs, wsc, tr=tr, wo=wo)   # (n, ho*wo, cpad)
    out = out.reshape(n, ho, wo, cpad)
    return out[..., :cout] if trim_channels else out


def basic_block_forward_nchw(params, x_nchw, strides, **kw):
    """PyTorch-layout adapter: transpose only at the network boundary."""
    x = jnp.transpose(x_nchw, (0, 2, 3, 1))
    out = basic_block_forward(params, x, strides, **kw)
    return jnp.transpose(out, (0, 3, 1, 2))


# ------------------------- pure-JAX reference check ------------------------- #

def _ref_conv(x, w_oihw, stride, pad):
    w = jnp.transpose(w_oihw, (2, 3, 1, 0))       # HWIO
    return lax.conv_general_dilated(
        x, w, window_strides=(stride, stride), padding=((pad, pad), (pad, pad)),
        dimension_numbers=("NHWC", "HWIO", "NHWC"), precision=lax.Precision.HIGHEST)


def _ref_bn_train(y, gamma, beta):
    mean = jnp.mean(y, axis=(0, 1, 2), keepdims=True)
    var = jnp.mean((y - mean) ** 2, axis=(0, 1, 2), keepdims=True)
    return ((y - mean) * lax.rsqrt(var + EPS) * gamma.reshape(1, 1, 1, -1)
            + beta.reshape(1, 1, 1, -1))


def reference_forward(params, x_nhwc, strides):
    x = x_nhwc.astype(jnp.float32)
    y1 = jnp.maximum(_ref_bn_train(_ref_conv(x, params["w1"], strides, 1),
                                   params["g1"].ravel(), params["b1"].ravel()), 0.0)
    y2 = jnp.maximum(_ref_bn_train(_ref_conv(y1, params["w2"], 1, 1),
                                   params["g2"].ravel(), params["b2"].ravel()), 0.0)
    sc = x if strides == 1 else _ref_conv(x, params["w_sc"], strides, 0)
    return jnp.maximum(y2 + sc, 0.0)


# ----------------------------------- main ----------------------------------- #

if __name__ == "__main__":
    key = jax.random.PRNGKey(0)
    kx1, kx2, kp1, kp2 = jax.random.split(key, 4)

    # Case A: downsampling block (stride 2, 1x1-conv shortcut), 4 -> 8 channels.
    # max_tile_rows=32 forces multiple row tiles so the tiling-safe BN and the
    # halo masking between tiles are exercised.
    x_a = jax.random.normal(kx1, (2, 16, 16, 4), jnp.float32)            # NHWC
    params_a = init_basic_block_params(kp1, 4, 8, 2)
    fwd_a = jax.jit(functools.partial(basic_block_forward, strides=2, max_tile_rows=32))
    out_a = jax.block_until_ready(fwd_a(params_a, x_a))
    ref_a = reference_forward(params_a, x_a, 2)
    assert out_a.shape == (2, 8, 8, 8), out_a.shape
    err_a = float(jnp.max(jnp.abs(out_a.astype(jnp.float32) - ref_a)))
    assert jnp.allclose(out_a.astype(jnp.float32), ref_a, atol=1e-1, rtol=1e-1), \
        ("max abs err (case A)", err_a)                                   # bf16 MXU tol

    # Case B: identity shortcut (stride 1, Cin == Cout == 8), 4 row tiles.
    x_b = jax.random.normal(kx2, (2, 16, 16, 8), jnp.float32)
    params_b = init_basic_block_params(kp2, 8, 8, 1)
    fwd_b = jax.jit(functools.partial(basic_block_forward, strides=1, max_tile_rows=64))
    out_b = jax.block_until_ready(fwd_b(params_b, x_b))
    ref_b = reference_forward(params_b, x_b, 1)
    assert out_b.shape == (2, 16, 16, 8), out_b.shape
    err_b = float(jnp.max(jnp.abs(out_b.astype(jnp.float32) - ref_b)))
    assert jnp.allclose(out_b.astype(jnp.float32), ref_b, atol=1e-1, rtol=1e-1), \
        ("max abs err (case B)", err_b)

    print("KERNEL_OK")
</pallas_src>

<mosaic_0001>
module attributes {stable_mosaic.version = 11 : i64} {
  func.func @_conv3x3_kernel(%arg0: i32, %arg1: i32, %arg2: memref<1x4x9x9x4xbf16, #tpu.memory_space<vmem>>, %arg3: memref<9x4x128xbf16, #tpu.memory_space<vmem>>, %arg4: memref<1x32x128xbf16, #tpu.memory_space<vmem>>, %arg5: memref<1x1x1x128xf32, #tpu.memory_space<vmem>>, %arg6: memref<1x1x1x128xf32, #tpu.memory_space<vmem>>) attributes {dimension_semantics = [#tpu.dimension_semantics<parallel>, #tpu.dimension_semantics<parallel>], iteration_bounds = array<i64: 2, 2>, scalar_prefetch = 0 : i64, scratch_operands = 0 : i64, tpu.core_type = #tpu.core_type<tc>, window_params = [{transform_indices = @transform_0, window_bounds = array<i64: 1, 4, 9, 9, 4>}, {pipeline_mode = #tpu.pipeline_mode<synchronous>, transform_indices = @transform_1, window_bounds = array<i64: 9, 4, 128>}, {transform_indices = @transform_2, window_bounds = array<i64: 1, 32, 128>}, {transform_indices = @transform_3, window_bounds = array<i64: 1, 1, 1, 128>}, {transform_indices = @transform_4, window_bounds = array<i64: 1, 1, 1, 128>}]} {
    %c4_i32 = arith.constant 4 : i32
    %0 = arith.muli %arg1, %c4_i32 : i32
    %c0_i32 = arith.constant 0 : i32
    %1 = arith.addi %0, %c0_i32 : i32
    %c0 = arith.constant 0 : index
    %c0_0 = arith.constant 0 : index
    %2 = arith.index_cast %1 : i32 to index
    %c0_1 = arith.constant 0 : index
    %c0_2 = arith.constant 0 : index
    %3 = vector.load %arg2[%c0, %c0_0, %2, %c0_1, %c0_2] : memref<1x4x9x9x4xbf16, #tpu.memory_space<vmem>>, vector<1x1x4x8x4xbf16>
    %4 = vector.shape_cast %3 : vector<1x1x4x8x4xbf16> to vector<4x8x4xbf16>
    %5 = vector.shape_cast %4 : vector<4x8x4xbf16> to vector<32x4xbf16>
    %c0_3 = arith.constant 0 : index
    %c0_4 = arith.constant 0 : index
    %c0_5 = arith.constant 0 : index
    %6 = vector.load %arg3[%c0_3, %c0_4, %c0_5] : memref<9x4x128xbf16, #tpu.memory_space<vmem>>, vector<1x4x128xbf16>
    %7 = vector.shape_cast %6 : vector<1x4x128xbf16> to vector<4x128xbf16>
    %cst = arith.constant dense<0.000000e+00> : vector<32x128xf32>
    %8 = tpu.matmul %5, %7, %cst {dimension_numbers = #tpu.dot_dimension_numbers<[1], [0], [0], [1], [0, 0, 1, 1], [], []>} : vector<32x4xbf16>, vector<4x128xbf16>, vector<32x128xf32> -> vector<32x128xf32>
    %c0_i32_6 = arith.constant 0 : i32
    %9 = arith.addi %0, %c0_i32_6 : i32
    %c0_7 = arith.constant 0 : index
    %c1 = arith.constant 1 : index
    %10 = arith.index_cast %9 : i32 to index
    %c0_8 = arith.constant 0 : index
    %c0_9 = arith.constant 0 : index
    %11 = vector.load %arg2[%c0_7, %c1, %10, %c0_8, %c0_9] : memref<1x4x9x9x4xbf16, #tpu.memory_space<vmem>>, vector<1x1x4x8x4xbf16>
    %12 = vector.shape_cast %11 : vector<1x1x4x8x4xbf16> to vector<4x8x4xbf16>
    %13 = vector.shape_cast %12 : vector<4x8x4xbf16> to vector<32x4xbf16>
    %c1_10 = arith.constant 1 : index
    %c0_11 = arith.constant 0 : index
    %c0_12 = arith.constant 0 : index
    %14 = vector.load %arg3[%c1_10, %c0_11, %c0_12] : memref<9x4x128xbf16, #tpu.memory_space<vmem>>, vector<1x4x128xbf16>
    %15 = vector.shape_cast %14 : vector<1x4x128xbf16> to vector<4x128xbf16>
    %cst_13 = arith.constant dense<0.000000e+00> : vector<32x128xf32>
    %16 = tpu.matmul %13, %15, %cst_13 {dimension_numbers = #tpu.dot_dimension_numbers<[1], [0], [0], [1], [0, 0, 1, 1], [], []>} : vector<32x4xbf16>, vector<4x128xbf16>, vector<32x128xf32> -> vector<32x128xf32>
    %17 = arith.addf %8, %16 : vector<32x128xf32>
    %c0_i32_14 = arith.constant 0 : i32
    %18 = arith.addi %0, %c0_i32_14 : i32
    %c0_15 = arith.constant 0 : index
    %c0_16 = arith.constant 0 : index
    %19 = arith.index_cast %18 : i32 to index
    %c1_17 = arith.constant 1 : index
    %c0_18 = arith.constant 0 : index
    %20 = vector.load %arg2[%c0_15, %c0_16, %19, %c1_17, %c0_18] : memref<1x4x9x9x4xbf16, #tpu.memory_space<vmem>>, vector<1x1x4x8x4xbf16>
    %21 = vector.shape_cast %20 : vector<1x1x4x8x4xbf16> to vector<4x8x4xbf16>
    %22 = vector.shape_cast %21 : vector<4x8x4xbf16> to vector<32x4xbf16>
    %c2 = arith.constant 2 : index
    %c0_19 = arith.constant 0 : index
    %c0_20 = arith.constant 0 : index
    %23 = vector.load %arg3[%c2, %c0_19, %c0_20] : memref<9x4x128xbf16, #tpu.memory_space<vmem>>, vector<1x4x128xbf16>
    %24 = vector.shape_cast %23 : vector<1x4x128xbf16> to vector<4x128xbf16>
    %cst_21 = arith.constant dense<0.000000e+00> : vector<32x128xf32>
    %25 = tpu.matmul %22, %24, %cst_21 {dimension_numbers = #tpu.dot_dimension_numbers<[1], [0], [0], [1], [0, 0, 1, 1], [], []>} : vector<32x4xbf16>, vector<4x128xbf16>, vector<32x128xf32> -> vector<32x128xf32>
    %26 = arith.addf %17, %25 : vector<32x128xf32>
    %c0_i32_22 = arith.constant 0 : i32
    %27 = arith.addi %0, %c0_i32_22 : i32
    %c0_23 = arith.constant 0 : index
    %c2_24 = arith.constant 2 : index
    %28 = arith.index_cast %27 : i32 to index
    %c0_25 = arith.constant 0 : index
    %c0_26 = arith.constant 0 : index
    %29 = vector.load %arg2[%c0_23, %c2_24, %28, %c0_25, %c0_26] : memref<1x4x9x9x4xbf16, #tpu.memory_space<vmem>>, vector<1x1x4x8x4xbf16>
    %30 = vector.shape_cast %29 : vector<1x1x4x8x4xbf16> to vector<4x8x4xbf16>
    %31 = vector.shape_cast %30 : vector<4x8x4xbf16> to vector<32x4xbf16>
    %c3 = arith.constant 3 : index
    %c0_27 = arith.constant 0 : index
    %c0_28 = arith.constant 0 : index
    %32 = vector.load %arg3[%c3, %c0_27, %c0_28] : memref<9x4x128xbf16, #tpu.memory_space<vmem>>, vector<1x4x128xbf16>
    %33 = vector.shape_cast %32 : vector<1x4x128xbf16> to vector<4x128xbf16>
    %cst_29 = arith.constant dense<0.000000e+00> : vector<32x128xf32>
    %34 = tpu.matmul %31, %33, %cst_29 {dimension_numbers = #tpu.dot_dimension_numbers<[1], [0], [0], [1], [0, 0, 1, 1], [], []>} : vector<32x4xbf16>, vector<4x128xbf16>, vector<32x128xf32> -> vector<32x128xf32>
    %35 = arith.addf %26, %34 : vector<32x128xf32>
    %c0_i32_30 = arith.constant 0 : i32
    %36 = arith.addi %0, %c0_i32_30 : i32
    %c0_31 = arith.constant 0 : index
    %c3_32 = arith.constant 3 : index
    %37 = arith.index_cast %36 : i32 to index
    %c0_33 = arith.constant 0 : index
    %c0_34 = arith.constant 0 : index
    %38 = vector.load %arg2[%c0_31, %c3_32, %37, %c0_33, %c0_34] : memref<1x4x9x9x4xbf16, #tpu.memory_space<vmem>>, vector<1x1x4x8x4xbf16>
    %39 = vector.shape_cast %38 : vector<1x1x4x8x4xbf16> to vector<4x8x4xbf16>
    %40 = vector.shape_cast %39 : vector<4x8x4xbf16> to vector<32x4xbf16>
    %c4 = arith.constant 4 : index
    %c0_35 = arith.constant 0 : index
    %c0_36 = arith.constant 0 : index
    %41 = vector.load %arg3[%c4, %c0_35, %c0_36] : memref<9x4x128xbf16, #tpu.memory_space<vmem>>, vector<1x4x128xbf16>
    %42 = vector.shape_cast %41 : vector<1x4x128xbf16> to vector<4x128xbf16>
    %cst_37 = arith.constant dense<0.000000e+00> : vector<32x128xf32>
    %43 = tpu.matmul %40, %42, %cst_37 {dimension_numbers = #tpu.dot_dimension_numbers<[1], [0], [0], [1], [0, 0, 1, 1], [], []>} : vector<32x4xbf16>, vector<4x128xbf16>, vector<32x128xf32> -> vector<32x128xf32>
    %44 = arith.addf %35, %43 : vector<32x128xf32>
    %c0_i32_38 = arith.constant 0 : i32
    %45 = arith.addi %0, %c0_i32_38 : i32
    %c0_39 = arith.constant 0 : index
    %c2_40 = arith.constant 2 : index
    %46 = arith.index_cast %45 : i32 to index
    %c1_41 = arith.constant 1 : index
    %c0_42 = arith.constant 0 : index
    %47 = vector.load %arg2[%c0_39, %c2_40, %46, %c1_41, %c0_42] : memref<1x4x9x9x4xbf16, #tpu.memory_space<vmem>>, vector<1x1x4x8x4xbf16>
    %48 = vector.shape_cast %47 : vector<1x1x4x8x4xbf16> to vector<4x8x4xbf16>
    %49 = vector.shape_cast %48 : vector<4x8x4xbf16> to vector<32x4xbf16>
    %c5 = arith.constant 5 : index
    %c0_43 = arith.constant 0 : index
    %c0_44 = arith.constant 0 : index
    %50 = vector.load %arg3[%c5, %c0_43, %c0_44] : memref<9x4x128xbf16, #tpu.memory_space<vmem>>, vector<1x4x128xbf16>
    %51 = vector.shape_cast %50 : vector<1x4x128xbf16> to vector<4x128xbf16>
    %cst_45 = arith.constant dense<0.000000e+00> : vector<32x128xf32>
    %52 = tpu.matmul %49, %51, %cst_45 {dimension_numbers = #tpu.dot_dimension_numbers<[1], [0], [0], [1], [0, 0, 1, 1], [], []>} : vector<32x4xbf16>, vector<4x128xbf16>, vector<32x128xf32> -> vector<32x128xf32>
    %53 = arith.addf %44, %52 : vector<32x128xf32>
    %c1_i32 = arith.constant 1 : i32
    %54 = arith.addi %0, %c1_i32 : i32
    %c0_46 = arith.constant 0 : index
    %c0_47 = arith.constant 0 : index
    %55 = arith.index_cast %54 : i32 to index
    %c0_48 = arith.constant 0 : index
    %c0_49 = arith.constant 0 : index
    %56 = vector.load %arg2[%c0_46, %c0_47, %55, %c0_48, %c0_49] : memref<1x4x9x9x4xbf16, #tpu.memory_space<vmem>>, vector<1x1x4x8x4xbf16>
    %57 = vector.shape_cast %56 : vector<1x1x4x8x4xbf16> to vector<4x8x4xbf16>
    %58 = vector.shape_cast %57 : vector<4x8x4xbf16> to vector<32x4xbf16>
    %c6 = arith.constant 6 : index
    %c0_50 = arith.constant 0 : index
    %c0_51 = arith.constant 0 : index
    %59 = vector.load %arg3[%c6, %c0_50, %c0_51] : memref<9x4x128xbf16, #tpu.memory_space<vmem>>, vector<1x4x128xbf16>
    %60 = vector.shape_cast %59 : vector<1x4x128xbf16> to vector<4x128xbf16>
    %cst_52 = arith.constant dense<0.000000e+00> : vector<32x128xf32>
    %61 = tpu.matmul %58, %60, %cst_52 {dimension_numbers = #tpu.dot_dimension_numbers<[1], [0], [0], [1], [0, 0, 1, 1], [], []>} : vector<32x4xbf16>, vector<4x128xbf16>, vector<32x128xf32> -> vector<32x128xf32>
    %62 = arith.addf %53, %61 : vector<32x128xf32>
    %c1_i32_53 = arith.constant 1 : i32
    %63 = arith.addi %0, %c1_i32_53 : i32
    %c0_54 = arith.constant 0 : index
    %c1_55 = arith.constant 1 : index
    %64 = arith.index_cast %63 : i32 to index
    %c0_56 = arith.constant 0 : index
    %c0_57 = arith.constant 0 : index
    %65 = vector.load %arg2[%c0_54, %c1_55, %64, %c0_56, %c0_57] : memref<1x4x9x9x4xbf16, #tpu.memory_space<vmem>>, vector<1x1x4x8x4xbf16>
    %66 = vector.shape_cast %65 : vector<1x1x4x8x4xbf16> to vector<4x8x4xbf16>
    %67 = vector.shape_cast %66 : vector<4x8x4xbf16> to vector<32x4xbf16>
    %c7 = arith.constant 7 : index
    %c0_58 = arith.constant 0 : index
    %c0_59 = arith.constant 0 : index
    %68 = vector.load %arg3[%c7, %c0_58, %c0_59] : memref<9x4x128xbf16, #tpu.memory_space<vmem>>, vector<1x4x128xbf16>
    %69 = vector.shape_cast %68 : vector<1x4x128xbf16> to vector<4x128xbf16>
    %cst_60 = arith.constant dense<0.000000e+00> : vector<32x128xf32>
    %70 = tpu.matmul %67, %69, %cst_60 {dimension_numbers = #tpu.dot_dimension_numbers<[1], [0], [0], [1], [0, 0, 1, 1], [], []>} : vector<32x4xbf16>, vector<4x128xbf16>, vector<32x128xf32> -> vector<32x128xf32>
    %71 = arith.addf %62, %70 : vector<32x128xf32>
    %c1_i32_61 = arith.constant 1 : i32
    %72 = arith.addi %0, %c1_i32_61 : i32
    %c0_62 = arith.constant 0 : index
    %c0_63 = arith.constant 0 : index
    %73 = arith.index_cast %72 : i32 to index
    %c1_64 = arith.constant 1 : index
    %c0_65 = arith.constant 0 : index
    %74 = vector.load %arg2[%c0_62, %c0_63, %73, %c1_64, %c0_65] : memref<1x4x9x9x4xbf16, #tpu.memory_space<vmem>>, vector<1x1x4x8x4xbf16>
    %75 = vector.shape_cast %74 : vector<1x1x4x8x4xbf16> to vector<4x8x4xbf16>
    %76 = vector.shape_cast %75 : vector<4x8x4xbf16> to vector<32x4xbf16>
    %c8 = arith.constant 8 : index
    %c0_66 = arith.constant 0 : index
    %c0_67 = arith.constant 0 : index
    %77 = vector.load %arg3[%c8, %c0_66, %c0_67] : memref<9x4x128xbf16, #tpu.memory_space<vmem>>, vector<1x4x128xbf16>
    %78 = vector.shape_cast %77 : vector<1x4x128xbf16> to vector<4x128xbf16>
    %cst_68 = arith.constant dense<0.000000e+00> : vector<32x128xf32>
    %79 = tpu.matmul %76, %78, %cst_68 {dimension_numbers = #tpu.dot_dimension_numbers<[1], [0], [0], [1], [0, 0, 1, 1], [], []>} : vector<32x4xbf16>, vector<4x128xbf16>, vector<32x128xf32> -> vector<32x128xf32>
    %80 = arith.addf %71, %79 : vector<32x128xf32>
    %81 = arith.truncf %80 : vector<32x128xf32> to vector<32x128xbf16>
    %c0_69 = arith.constant 0 : index
    %c0_70 = arith.constant 0 : index
    %c0_71 = arith.constant 0 : index
    %82 = vector.load %arg4[%c0_69, %c0_70, %c0_71] : memref<1x32x128xbf16, #tpu.memory_space<vmem>>, vector<1x32x128xbf16>
    %83 = vector.shape_cast %82 : vector<1x32x128xbf16> to vector<32x128xbf16>
    %84 = vector.shape_cast %81 : vector<32x128xbf16> to vector<1x32x128xbf16>
    tpu.vector_store %arg4[%c0_69, %c0_70, %c0_71], %84 {strides = array<i32>} : memref<1x32x128xbf16, #tpu.memory_space<vmem>>, vector<1x32x128xbf16>,
    %cst_72 = arith.constant dense<0.000000e+00> : vector<128xf32>
    %85 = vector.multi_reduction <add>, %80, %cst_72 [0] : vector<32x128xf32> to vector<128xf32>
    %86 = vector.shape_cast %85 : vector<128xf32> to vector<1x128xf32>
    %c0_73 = arith.constant 0 : index
    %c0_74 = arith.constant 0 : index
    %c0_75 = arith.constant 0 : index
    %c0_76 = arith.constant 0 : index
    %87 = vector.load %arg5[%c0_73, %c0_74, %c0_75, %c0_76] : memref<1x1x1x128xf32, #tpu.memory_space<vmem>>, vector<1x1x1x128xf32>
    %88 = vector.shape_cast %87 : vector<1x1x1x128xf32> to vector<1x128xf32>
    %89 = vector.shape_cast %86 : vector<1x128xf32> to vector<1x1x1x128xf32>
    tpu.vector_store %arg5[%c0_73, %c0_74, %c0_75, %c0_76], %89 {strides = array<i32>} : memref<1x1x1x128xf32, #tpu.memory_space<vmem>>, vector<1x1x1x128xf32>,
    %90 = arith.mulf %80, %80 : vector<32x128xf32>
    %cst_77 = arith.constant dense<0.000000e+00> : vector<128xf32>
    %91 = vector.multi_reduction <add>, %90, %cst_77 [0] : vector<32x128xf32> to vector<128xf32>
    %92 = vector.shape_cast %91 : vector<128xf32> to vector<1x128xf32>
    %c0_78 = arith.constant 0 : index
    %c0_79 = arith.constant 0 : index
    %c0_80 = arith.constant 0 : index
    %c0_81 = arith.constant 0 : index
    %93 = vector.load %arg6[%c0_78, %c0_79, %c0_80, %c0_81] : memref<1x1x1x128xf32, #tpu.memory_space<vmem>>, vector<1x1x1x128xf32>
    %94 = vector.shape_cast %93 : vector<1x1x1x128xf32> to vector<1x128xf32>
    %95 = vector.shape_cast %92 : vector<1x128xf32> to vector<1x1x1x128xf32>
    tpu.vector_store %arg6[%c0_78, %c0_79, %c0_80, %c0_81], %95 {strides = array<i32>} : memref<1x1x1x128xf32, #tpu.memory_space<vmem>>, vector<1x1x1x128xf32>,
    return
  }
  func.func @transform_0(%arg0: i32, %arg1: i32) -> (i32, i32, i32, i32, i32) {
    %c0_i32 = arith.constant 0 : i32
    %c0_i32_0 = arith.constant 0 : i32
    %c0_i32_1 = arith.constant 0 : i32
    %c0_i32_2 = arith.constant 0 : i32
    %c0_i32_3 = arith.constant 0 : i32
    return %arg0, %c0_i32, %c0_i32_0, %c0_i32_1, %c0_i32_2 : i32, i32, i32, i32, i32
  }
  func.func @transform_1(%arg0: i32, %arg1: i32) -> (i32, i32, i32) {
    %c0_i32 = arith.constant 0 : i32
    %c0_i32_0 = arith.constant 0 : i32
    %c0_i32_1 = arith.constant 0 : i32
    %c0_i32_2 = arith.constant 0 : i32
    return %c0_i32, %c0_i32_0, %c0_i32_1 : i32, i32, i32
  }
  func.func @transform_2(%arg0: i32, %arg1: i32) -> (i32, i32, i32) {
    %c0_i32 = arith.constant 0 : i32
    %c0_i32_0 = arith.constant 0 : i32
    return %arg0, %arg1, %c0_i32 : i32, i32, i32
  }
  func.func @transform_3(%arg0: i32, %arg1: i32) -> (i32, i32, i32, i32) {
    %c0_i32 = arith.constant 0 : i32
    %c0_i32_0 = arith.constant 0 : i32
    %c0_i32_1 = arith.constant 0 : i32
    return %arg0, %arg1, %c0_i32, %c0_i32_0 : i32, i32, i32, i32
  }
  func.func @transform_4(%arg0: i32, %arg1: i32) -> (i32, i32, i32, i32) {
    %c0_i32 = arith.constant 0 : i32
    %c0_i32_0 = arith.constant 0 : i32
    %c0_i32_1 = arith.constant 0 : i32
    return %arg0, %arg1, %c0_i32, %c0_i32_0 : i32, i32, i32, i32
  }
}

module attributes {stable_mosaic.version = 11 : i64} {
  func.func @_conv3x3_bnin_kernel(%arg0: i32, %arg1: i32, %arg2: memref<1x1x10x10x128xbf16, #tpu.memory_space<vmem>>, %arg3: memref<9x128x128xbf16, #tpu.memory_space<vmem>>, %arg4: memref<1x128xf32, #tpu.memory_space<vmem>>, %arg5: memref<1x128xf32, #tpu.memory_space<vmem>>, %arg6: memref<1x32x128xbf16, #tpu.memory_space<vmem>>, %arg7: memref<1x1x1x128xf32, #tpu.memory_space<vmem>>, %arg8: memref<1x1x1x128xf32, #tpu.memory_space<vmem>>) attributes {dimension_semantics = [#tpu.dimension_semantics<parallel>, #tpu.dimension_semantics<parallel>], iteration_bounds = array<i64: 2, 2>, scalar_prefetch = 0 : i64, scratch_operands = 0 : i64, tpu.core_type = #tpu.core_type<tc>, window_params = [{transform_indices = @transform_0, window_bounds = array<i64: 1, 1, 10, 10, 128>}, {pipeline_mode = #tpu.pipeline_mode<synchronous>, transform_indices = @transform_1, window_bounds = array<i64: 9, 128, 128>}, {pipeline_mode = #tpu.pipeline_mode<synchronous>, transform_indices = @transform_2, window_bounds = array<i64: 1, 128>}, {pipeline_mode = #tpu.pipeline_mode<synchronous>, transform_indices = @transform_3, window_bounds = array<i64: 1, 128>}, {transform_indices = @transform_4, window_bounds = array<i64: 1, 32, 128>}, {transform_indices = @transform_5, window_bounds = array<i64: 1, 1, 1, 128>}, {transform_indices = @transform_6, window_bounds = array<i64: 1, 1, 1, 128>}]} {
    %c4_i32 = arith.constant 4 : i32
    %0 = arith.muli %arg1, %c4_i32 : i32
    %c0 = arith.constant 0 : index
    %c0_0 = arith.constant 0 : index
    %1 = arith.index_cast %0 : i32 to index
    %c0_1 = arith.constant 0 : index
    %c0_2 = arith.constant 0 : index
    %2 = vector.load %arg2[%c0, %c0_0, %1, %c0_1, %c0_2] : memref<1x1x10x10x128xbf16, #tpu.memory_space<vmem>>, vector<1x1x6x10x128xbf16>
    %3 = vector.shape_cast %2 : vector<1x1x6x10x128xbf16> to vector<6x10x128xbf16>
    %4 = arith.extf %3 : vector<6x10x128xbf16> to vector<6x10x128xf32>
    %c0_3 = arith.constant 0 : index
    %c0_4 = arith.constant 0 : index
    %5 = vector.load %arg4[%c0_3, %c0_4] : memref<1x128xf32, #tpu.memory_space<vmem>>, vector<1x128xf32>
    %6 = vector.shape_cast %5 : vector<1x128xf32> to vector<1x1x128xf32>
    %7 = vector.broadcast %6 : vector<1x1x128xf32> to vector<6x10x128xf32>
    %8 = arith.mulf %4, %7 : vector<6x10x128xf32>
    %c0_5 = arith.constant 0 : index
    %c0_6 = arith.constant 0 : index
    %9 = vector.load %arg5[%c0_5, %c0_6] : memref<1x128xf32, #tpu.memory_space<vmem>>, vector<1x128xf32>
    %10 = vector.shape_cast %9 : vector<1x128xf32> to vector<1x1x128xf32>
    %11 = vector.broadcast %10 : vector<1x1x128xf32> to vector<6x10x128xf32>
    %12 = arith.addf %8, %11 : vector<6x10x128xf32>
    %cst = arith.constant 0.000000e+00 : f32
    %13 = vector.broadcast %cst : f32 to vector<6x10x128xf32>
    %14 = arith.maximumf %12, %13 : vector<6x10x128xf32>
    %15 = tpu.iota {dimensions = array<i32: 0>} : vector<6x10x128xi32>
    %16 = vector.broadcast %0 : i32 to vector<6x10x128xi32>
    %17 = arith.addi %15, %16 : vector<6x10x128xi32>
    %18 = tpu.iota {dimensions = array<i32: 1>} : vector<6x10x128xi32>
    %c1_i32 = arith.constant 1 : i32
    %19 = vector.broadcast %c1_i32 : i32 to vector<6x10x128xi32>
    %20 = arith.cmpi sge, %17, %19 : vector<6x10x128xi32>
    %c8_i32 = arith.constant 8 : i32
    %21 = vector.broadcast %c8_i32 : i32 to vector<6x10x128xi32>
    %22 = arith.cmpi sle, %17, %21 : vector<6x10x128xi32>
    %23 = arith.andi %20, %22 : vector<6x10x128xi1>
    %c1_i32_7 = arith.constant 1 : i32
    %24 = vector.broadcast %c1_i32_7 : i32 to vector<6x10x128xi32>
    %25 = arith.cmpi sge, %18, %24 : vector<6x10x128xi32>
    %26 = arith.andi %23, %25 : vector<6x10x128xi1>
    %c8_i32_8 = arith.constant 8 : i32
    %27 = vector.broadcast %c8_i32_8 : i32 to vector<6x10x128xi32>
    %28 = arith.cmpi sle, %18, %27 : vector<6x10x128xi32>
    %29 = arith.andi %26, %28 : vector<6x10x128xi1>
    %cst_9 = arith.constant 0.000000e+00 : f32
    %30 = vector.broadcast %cst_9 : f32 to vector<6x10x128xf32>
    %31 = arith.select %29, %14, %30 : vector<6x10x128xi1>, vector<6x10x128xf32>
    %32 = arith.truncf %31 : vector<6x10x128xf32> to vector<6x10x128xbf16>
    %33 = vector.extract_strided_slice %32 {offsets = [0, 0, 0], sizes = [4, 8, 128], strides = [1, 1, 1]} : vector<6x10x128xbf16> to vector<4x8x128xbf16>
    %34 = vector.shape_cast %33 : vector<4x8x128xbf16> to vector<32x128xbf16>
    %c0_10 = arith.constant 0 : index
    %c0_11 = arith.constant 0 : index
    %c0_12 = arith.constant 0 : index
    %35 = vector.load %arg3[%c0_10, %c0_11, %c0_12] : memref<9x128x128xbf16, #tpu.memory_space<vmem>>, vector<1x128x128xbf16>
    %36 = vector.shape_cast %35 : vector<1x128x128xbf16> to vector<128x128xbf16>
    %cst_13 = arith.constant dense<0.000000e+00> : vector<32x128xf32>
    %37 = tpu.matmul %34, %36, %cst_13 {dimension_numbers = #tpu.dot_dimension_numbers<[1], [0], [0], [1], [0, 0, 1, 1], [], []>} : vector<32x128xbf16>, vector<128x128xbf16>, vector<32x128xf32> -> vector<32x128xf32>
    %38 = vector.extract_strided_slice %32 {offsets = [0, 1, 0], sizes = [4, 8, 128], strides = [1, 1, 1]} : vector<6x10x128xbf16> to vector<4x8x128xbf16>
    %39 = vector.shape_cast %38 : vector<4x8x128xbf16> to vector<32x128xbf16>
    %c1 = arith.constant 1 : index
    %c0_14 = arith.constant 0 : index
    %c0_15 = arith.constant 0 : index
    %40 = vector.load %arg3[%c1, %c0_14, %c0_15] : memref<9x128x128xbf16, #tpu.memory_space<vmem>>, vector<1x128x128xbf16>
    %41 = vector.shape_cast %40 : vector<1x128x128xbf16> to vector<128x128xbf16>
    %cst_16 = arith.constant dense<0.000000e+00> : vector<32x128xf32>
    %42 = tpu.matmul %39, %41, %cst_16 {dimension_numbers = #tpu.dot_dimension_numbers<[1], [0], [0], [1], [0, 0, 1, 1], [], []>} : vector<32x128xbf16>, vector<128x128xbf16>, vector<32x128xf32> -> vector<32x128xf32>
    %43 = arith.addf %37, %42 : vector<32x128xf32>
    %44 = vector.extract_strided_slice %32 {offsets = [0, 2, 0], sizes = [4, 8, 128], strides = [1, 1, 1]} : vector<6x10x128xbf16> to vector<4x8x128xbf16>
    %45 = vector.shape_cast %44 : vector<4x8x128xbf16> to vector<32x128xbf16>
    %c2 = arith.constant 2 : index
    %c0_17 = arith.constant 0 : index
    %c0_18 = arith.constant 0 : index
    %46 = vector.load %arg3[%c2, %c0_17, %c0_18] : memref<9x128x128xbf16, #tpu.memory_space<vmem>>, vector<1x128x128xbf16>
    %47 = vector.shape_cast %46 : vector<1x128x128xbf16> to vector<128x128xbf16>
    %cst_19 = arith.constant dense<0.000000e+00> : vector<32x128xf32>
    %48 = tpu.matmul %45, %47, %cst_19 {dimension_numbers = #tpu.dot_dimension_numbers<[1], [0], [0], [1], [0, 0, 1, 1], [], []>} : vector<32x128xbf16>, vector<128x128xbf16>, vector<32x128xf32> -> vector<32x128xf32>
    %49 = arith.addf %43, %48 : vector<32x128xf32>
    %50 = vector.extract_strided_slice %32 {offsets = [1, 0, 0], sizes = [4, 8, 128], strides = [1, 1, 1]} : vector<6x10x128xbf16> to vector<4x8x128xbf16>
    %51 = vector.shape_cast %50 : vector<4x8x128xbf16> to vector<32x128xbf16>
    %c3 = arith.constant 3 : index
    %c0_20 = arith.constant 0 : index
    %c0_21 = arith.constant 0 : index
    %52 = vector.load %arg3[%c3, %c0_20, %c0_21] : memref<9x128x128xbf16, #tpu.memory_space<vmem>>, vector<1x128x128xbf16>
    %53 = vector.shape_cast %52 : vector<1x128x128xbf16> to vector<128x128xbf16>
    %cst_22 = arith.constant dense<0.000000e+00> : vector<32x128xf32>
    %54 = tpu.matmul %51, %53, %cst_22 {dimension_numbers = #tpu.dot_dimension_numbers<[1], [0], [0], [1], [0, 0, 1, 1], [], []>} : vector<32x128xbf16>, vector<128x128xbf16>, vector<32x128xf32> -> vector<32x128xf32>
    %55 = arith.addf %49, %54 : vector<32x128xf32>
    %56 = vector.extract_strided_slice %32 {offsets = [1, 1, 0], sizes = [4, 8, 128], strides = [1, 1, 1]} : vector<6x10x128xbf16> to vector<4x8x128xbf16>
    %57 = vector.shape_cast %56 : vector<4x8x128xbf16> to vector<32x128xbf16>
    %c4 = arith.constant 4 : index
    %c0_23 = arith.constant 0 : index
    %c0_24 = arith.constant 0 : index
    %58 = vector.load %arg3[%c4, %c0_23, %c0_24] : memref<9x128x128xbf16, #tpu.memory_space<vmem>>, vector<1x128x128xbf16>
    %59 = vector.shape_cast %58 : vector<1x128x128xbf16> to vector<128x128xbf16>
    %cst_25 = arith.constant dense<0.000000e+00> : vector<32x128xf32>
    %60 = tpu.matmul %57, %59, %cst_25 {dimension_numbers = #tpu.dot_dimension_numbers<[1], [0], [0], [1], [0, 0, 1, 1], [], []>} : vector<32x128xbf16>, vector<128x128xbf16>, vector<32x128xf32> -> vector<32x128xf32>
    %61 = arith.addf %55, %60 : vector<32x128xf32>
    %62 = vector.extract_strided_slice %32 {offsets = [1, 2, 0], sizes = [4, 8, 128], strides = [1, 1, 1]} : vector<6x10x128xbf16> to vector<4x8x128xbf16>
    %63 = vector.shape_cast %62 : vector<4x8x128xbf16> to vector<32x128xbf16>
    %c5 = arith.constant 5 : index
    %c0_26 = arith.constant 0 : index
    %c0_27 = arith.constant 0 : index
    %64 = vector.load %arg3[%c5, %c0_26, %c0_27] : memref<9x128x128xbf16, #tpu.memory_space<vmem>>, vector<1x128x128xbf16>
    %65 = vector.shape_cast %64 : vector<1x128x128xbf16> to vector<128x128xbf16>
    %cst_28 = arith.constant dense<0.000000e+00> : vector<32x128xf32>
    %66 = tpu.matmul %63, %65, %cst_28 {dimension_numbers = #tpu.dot_dimension_numbers<[1], [0], [0], [1], [0, 0, 1, 1], [], []>} : vector<32x128xbf16>, vector<128x128xbf16>, vector<32x128xf32> -> vector<32x128xf32>
    %67 = arith.addf %61, %66 : vector<32x128xf32>
    %68 = vector.extract_strided_slice %32 {offsets = [2, 0, 0], sizes = [4, 8, 128], strides = [1, 1, 1]} : vector<6x10x128xbf16> to vector<4x8x128xbf16>
    %69 = vector.shape_cast %68 : vector<4x8x128xbf16> to vector<32x128xbf16>
    %c6 = arith.constant 6 : index
    %c0_29 = arith.constant 0 : index
    %c0_30 = arith.constant 0 : index
    %70 = vector.load %arg3[%c6, %c0_29, %c0_30] : memref<9x128x128xbf16, #tpu.memory_space<vmem>>, vector<1x128x128xbf16>
    %71 = vector.shape_cast %70 : vector<1x128x128xbf16> to vector<128x128xbf16>
    %cst_31 = arith.constant dense<0.000000e+00> : vector<32x128xf32>
    %72 = tpu.matmul %69, %71, %cst_31 {dimension_numbers = #tpu.dot_dimension_numbers<[1], [0], [0], [1], [0, 0, 1, 1], [], []>} : vector<32x128xbf16>, vector<128x128xbf16>, vector<32x128xf32> -> vector<32x128xf32>
    %73 = arith.addf %67, %72 : vector<32x128xf32>
    %74 = vector.extract_strided_slice %32 {offsets = [2, 1, 0], sizes = [4, 8, 128], strides = [1, 1, 1]} : vector<6x10x128xbf16> to vector<4x8x128xbf16>
    %75 = vector.shape_cast %74 : vector<4x8x128xbf16> to vector<32x128xbf16>
    %c7 = arith.constant 7 : index
    %c0_32 = arith.constant 0 : index
    %c0_33 = arith.constant 0 : index
    %76 = vector.load %arg3[%c7, %c0_32, %c0_33] : memref<9x128x128xbf16, #tpu.memory_space<vmem>>, vector<1x128x128xbf16>
    %77 = vector.shape_cast %76 : vector<1x128x128xbf16> to vector<128x128xbf16>
    %cst_34 = arith.constant dense<0.000000e+00> : vector<32x128xf32>
    %78 = tpu.matmul %75, %77, %cst_34 {dimension_numbers = #tpu.dot_dimension_numbers<[1], [0], [0], [1], [0, 0, 1, 1], [], []>} : vector<32x128xbf16>, vector<128x128xbf16>, vector<32x128xf32> -> vector<32x128xf32>
    %79 = arith.addf %73, %78 : vector<32x128xf32>
    %80 = vector.extract_strided_slice %32 {offsets = [2, 2, 0], sizes = [4, 8, 128], strides = [1, 1, 1]} : vector<6x10x128xbf16> to vector<4x8x128xbf16>
    %81 = vector.shape_cast %80 : vector<4x8x128xbf16> to vector<32x128xbf16>
    %c8 = arith.constant 8 : index
    %c0_35 = arith.constant 0 : index
    %c0_36 = arith.constant 0 : index
    %82 = vector.load %arg3[%c8, %c0_35, %c0_36] : memref<9x128x128xbf16, #tpu.memory_space<vmem>>, vector<1x128x128xbf16>
    %83 = vector.shape_cast %82 : vector<1x128x128xbf16> to vector<128x128xbf16>
    %cst_37 = arith.constant dense<0.000000e+00> : vector<32x128xf32>
    %84 = tpu.matmul %81, %83, %cst_37 {dimension_numbers = #tpu.dot_dimension_numbers<[1], [0], [0], [1], [0, 0, 1, 1], [], []>} : vector<32x128xbf16>, vector<128x128xbf16>, vector<32x128xf32> -> vector<32x128xf32>
    %85 = arith.addf %79, %84 : vector<32x128xf32>
    %86 = arith.truncf %85 : vector<32x128xf32> to vector<32x128xbf16>
    %c0_38 = arith.constant 0 : index
    %c0_39 = arith.constant 0 : index
    %c0_40 = arith.constant 0 : index
    %87 = vector.load %arg6[%c0_38, %c0_39, %c0_40] : memref<1x32x128xbf16, #tpu.memory_space<vmem>>, vector<1x32x128xbf16>
    %88 = vector.shape_cast %87 : vector<1x32x128xbf16> to vector<32x128xbf16>
    %89 = vector.shape_cast %86 : vector<32x128xbf16> to vector<1x32x128xbf16>
    tpu.vector_store %arg6[%c0_38, %c0_39, %c0_40], %89 {strides = array<i32>} : memref<1x32x128xbf16, #tpu.memory_space<vmem>>, vector<1x32x128xbf16>,
    %cst_41 = arith.constant dense<0.000000e+00> : vector<128xf32>
    %90 = vector.multi_reduction <add>, %85, %cst_41 [0] : vector<32x128xf32> to vector<128xf32>
    %91 = vector.shape_cast %90 : vector<128xf32> to vector<1x128xf32>
    %c0_42 = arith.constant 0 : index
    %c0_43 = arith.constant 0 : index
    %c0_44 = arith.constant 0 : index
    %c0_45 = arith.constant 0 : index
    %92 = vector.load %arg7[%c0_42, %c0_43, %c0_44, %c0_45] : memref<1x1x1x128xf32, #tpu.memory_space<vmem>>, vector<1x1x1x128xf32>
    %93 = vector.shape_cast %92 : vector<1x1x1x128xf32> to vector<1x128xf32>
    %94 = vector.shape_cast %91 : vector<1x128xf32> to vector<1x1x1x128xf32>
    tpu.vector_store %arg7[%c0_42, %c0_43, %c0_44, %c0_45], %94 {strides = array<i32>} : memref<1x1x1x128xf32, #tpu.memory_space<vmem>>, vector<1x1x1x128xf32>,
    %95 = arith.mulf %85, %85 : vector<32x128xf32>
    %cst_46 = arith.constant dense<0.000000e+00> : vector<128xf32>
    %96 = vector.multi_reduction <add>, %95, %cst_46 [0] : vector<32x128xf32> to vector<128xf32>
    %97 = vector.shape_cast %96 : vector<128xf32> to vector<1x128xf32>
    %c0_47 = arith.constant 0 : index
    %c0_48 = arith.constant 0 : index
    %c0_49 = arith.constant 0 : index
    %c0_50 = arith.constant 0 : index
    %98 = vector.load %arg8[%c0_47, %c0_48, %c0_49, %c0_50] : memref<1x1x1x128xf32, #tpu.memory_space<vmem>>, vector<1x1x1x128xf32>
    %99 = vector.shape_cast %98 : vector<1x1x1x128xf32> to vector<1x128xf32>
    %100 = vector.shape_cast %97 : vector<1x128xf32> to vector<1x1x1x128xf32>
    tpu.vector_store %arg8[%c0_47, %c0_48, %c0_49, %c0_50], %100 {strides = array<i32>} : memref<1x1x1x128xf32, #tpu.memory_space<vmem>>, vector<1x1x1x128xf32>,
    return
  }
  func.func @transform_0(%arg0: i32, %arg1: i32) -> (i32, i32, i32, i32, i32) {
    %c0_i32 = arith.constant 0 : i32
    %c0_i32_0 = arith.constant 0 : i32
    %c0_i32_1 = arith.constant 0 : i32
    %c0_i32_2 = arith.constant 0 : i32
    %c0_i32_3 = arith.constant 0 : i32
    return %arg0, %c0_i32, %c0_i32_0, %c0_i32_1, %c0_i32_2 : i32, i32, i32, i32, i32
  }
  func.func @transform_1(%arg0: i32, %arg1: i32) -> (i32, i32, i32) {
    %c0_i32 = arith.constant 0 : i32
    %c0_i32_0 = arith.constant 0 : i32
    %c0_i32_1 = arith.constant 0 : i32
    %c0_i32_2 = arith.constant 0 : i32
    return %c0_i32, %c0_i32_0, %c0_i32_1 : i32, i32, i32
  }
  func.func @transform_2(%arg0: i32, %arg1: i32) -> (i32, i32) {
    %c0_i32 = arith.constant 0 : i32
    %c0_i32_0 = arith.constant 0 : i32
    %c0_i32_1 = arith.constant 0 : i32
    return %c0_i32, %c0_i32_0 : i32, i32
  }
  func.func @transform_3(%arg0: i32, %arg1: i32) -> (i32, i32) {
    %c0_i32 = arith.constant 0 : i32
    %c0_i32_0 = arith.constant 0 : i32
    %c0_i32_1 = arith.constant 0 : i32
    return %c0_i32, %c0_i32_0 : i32, i32
  }
  func.func @transform_4(%arg0: i32, %arg1: i32) -> (i32, i32, i32) {
    %c0_i32 = arith.constant 0 : i32
    %c0_i32_0 = arith.constant 0 : i32
    return %arg0, %arg1, %c0_i32 : i32, i32, i32
  }
  func.func @transform_5(%arg0: i32, %arg1: i32) -> (i32, i32, i32, i32) {
    %c0_i32 = arith.constant 0 : i32
    %c0_i32_0 = arith.constant 0 : i32
    %c0_i32_1 = arith.constant 0 : i32
    return %arg0, %arg1, %c0_i32, %c0_i32_0 : i32, i32, i32, i32
  }
  func.func @transform_6(%arg0: i32, %arg1: i32) -> (i32, i32, i32, i32) {
    %c0_i32 = arith.constant 0 : i32
    %c0_i32_0 = arith.constant 0 : i32
    %c0_i32_1 = arith.constant 0 : i32
    return %arg0, %arg1, %c0_i32, %c0_i32_0 : i32, i32, i32, i32
  }
}

module attributes {stable_mosaic.version = 11 : i64} {
  func.func @_epilogue_proj_kernel(%arg0: i32, %arg1: i32, %arg2: memref<1x32x128xbf16, #tpu.memory_space<vmem>>, %arg3: memref<1x128xf32, #tpu.memory_space<vmem>>, %arg4: memref<1x128xf32, #tpu.memory_space<vmem>>, %arg5: memref<1x32x4xbf16, #tpu.memory_space<vmem>>, %arg6: memref<4x128xbf16, #tpu.memory_space<vmem>>, %arg7: memref<1x32x128xbf16, #tpu.memory_space<vmem>>) attributes {dimension_semantics = [#tpu.dimension_semantics<parallel>, #tpu.dimension_semantics<parallel>], iteration_bounds = array<i64: 2, 2>, scalar_prefetch = 0 : i64, scratch_operands = 0 : i64, tpu.core_type = #tpu.core_type<tc>, window_params = [{transform_indices = @transform_0, window_bounds = array<i64: 1, 32, 128>}, {pipeline_mode = #tpu.pipeline_mode<synchronous>, transform_indices = @transform_1, window_bounds = array<i64: 1, 128>}, {pipeline_mode = #tpu.pipeline_mode<synchronous>, transform_indices = @transform_2, window_bounds = array<i64: 1, 128>}, {transform_indices = @transform_3, window_bounds = array<i64: 1, 32, 4>}, {pipeline_mode = #tpu.pipeline_mode<synchronous>, transform_indices = @transform_4, window_bounds = array<i64: 4, 128>}, {transform_indices = @transform_5, window_bounds = array<i64: 1, 32, 128>}]} {
    %c0 = arith.constant 0 : index
    %c0_0 = arith.constant 0 : index
    %c0_1 = arith.constant 0 : index
    %0 = vector.load %arg2[%c0, %c0_0, %c0_1] : memref<1x32x128xbf16, #tpu.memory_space<vmem>>, vector<1x32x128xbf16>
    %1 = vector.shape_cast %0 : vector<1x32x128xbf16> to vector<32x128xbf16>
    %2 = arith.extf %1 : vector<32x128xbf16> to vector<32x128xf32>
    %c0_2 = arith.constant 0 : index
    %c0_3 = arith.constant 0 : index
    %3 = vector.load %arg3[%c0_2, %c0_3] : memref<1x128xf32, #tpu.memory_space<vmem>>, vector<1x128xf32>
    %4 = vector.broadcast %3 : vector<1x128xf32> to vector<32x128xf32>
    %5 = arith.mulf %2, %4 : vector<32x128xf32>
    %c0_4 = arith.constant 0 : index
    %c0_5 = arith.constant 0 : index
    %6 = vector.load %arg4[%c0_4, %c0_5] : memref<1x128xf32, #tpu.memory_space<vmem>>, vector<1x128xf32>
    %7 = vector.broadcast %6 : vector<1x128xf32> to vector<32x128xf32>
    %8 = arith.addf %5, %7 : vector<32x128xf32>
    %cst = arith.constant 0.000000e+00 : f32
    %9 = vector.broadcast %cst : f32 to vector<32x128xf32>
    %10 = arith.maximumf %8, %9 : vector<32x128xf32>
    %c0_6 = arith.constant 0 : index
    %c0_7 = arith.constant 0 : index
    %c0_8 = arith.constant 0 : index
    %11 = vector.load %arg5[%c0_6, %c0_7, %c0_8] : memref<1x32x4xbf16, #tpu.memory_space<vmem>>, vector<1x32x4xbf16>
    %12 = vector.shape_cast %11 : vector<1x32x4xbf16> to vector<32x4xbf16>
    %c0_9 = arith.constant 0 : index
    %c0_10 = arith.constant 0 : index
    %13 = vector.load %arg6[%c0_9, %c0_10] : memref<4x128xbf16, #tpu.memory_space<vmem>>, vector<4x128xbf16>
    %cst_11 = arith.constant dense<0.000000e+00> : vector<32x128xf32>
    %14 = tpu.matmul %12, %13, %cst_11 {dimension_numbers = #tpu.dot_dimension_numbers<[1], [0], [0], [1], [0, 0, 1, 1], [], []>} : vector<32x4xbf16>, vector<4x128xbf16>, vector<32x128xf32> -> vector<32x128xf32>
    %15 = arith.addf %10, %14 : vector<32x128xf32>
    %cst_12 = arith.constant 0.000000e+00 : f32
    %16 = vector.broadcast %cst_12 : f32 to vector<32x128xf32>
    %17 = arith.maximumf %15, %16 : vector<32x128xf32>
    %18 = arith.truncf %17 : vector<32x128xf32> to vector<32x128xbf16>
    %c0_13 = arith.constant 0 : index
    %c0_14 = arith.constant 0 : index
    %c0_15 = arith.constant 0 : index
    %19 = vector.load %arg7[%c0_13, %c0_14, %c0_15] : memref<1x32x128xbf16, #tpu.memory_space<vmem>>, vector<1x32x128xbf16>
    %20 = vector.shape_cast %19 : vector<1x32x128xbf16> to vector<32x128xbf16>
    %21 = vector.shape_cast %18 : vector<32x128xbf16> to vector<1x32x128xbf16>
    tpu.vector_store %arg7[%c0_13, %c0_14, %c0_15], %21 {strides = array<i32>} : memref<1x32x128xbf16, #tpu.memory_space<vmem>>, vector<1x32x128xbf16>,
    return
  }
  func.func @transform_0(%arg0: i32, %arg1: i32) -> (i32, i32, i32) {
    %c0_i32 = arith.constant 0 : i32
    %c0_i32_0 = arith.constant 0 : i32
    return %arg0, %arg1, %c0_i32 : i32, i32, i32
  }
  func.func @transform_1(%arg0: i32, %arg1: i32) -> (i32, i32) {
    %c0_i32 = arith.constant 0 : i32
    %c0_i32_0 = arith.constant 0 : i32
    %c0_i32_1 = arith.constant 0 : i32
    return %c0_i32, %c0_i32_0 : i32, i32
  }
  func.func @transform_2(%arg0: i32, %arg1: i32) -> (i32, i32) {
    %c0_i32 = arith.constant 0 : i32
    %c0_i32_0 = arith.constant 0 : i32
    %c0_i32_1 = arith.constant 0 : i32
    return %c0_i32, %c0_i32_0 : i32, i32
  }
  func.func @transform_3(%arg0: i32, %arg1: i32) -> (i32, i32, i32) {
    %c0_i32 = arith.constant 0 : i32
    %c0_i32_0 = arith.constant 0 : i32
    return %arg0, %arg1, %c0_i32 : i32, i32, i32
  }
  func.func @transform_4(%arg0: i32, %arg1: i32) -> (i32, i32) {
    %c0_i32 = arith.constant 0 : i32
    %c0_i32_0 = arith.constant 0 : i32
    %c0_i32_1 = arith.constant 0 : i32
    return %c0_i32, %c0_i32_0 : i32, i32
  }
  func.func @transform_5(%arg0: i32, %arg1: i32) -> (i32, i32, i32) {
    %c0_i32 = arith.constant 0 : i32
    %c0_i32_0 = arith.constant 0 : i32
    return %arg0, %arg1, %c0_i32 : i32, i32, i32
  }
}

</mosaic_0001>

<llo_original>
// kernel: basic_block_forward.3
$region0: #{basic_block_forward.3}
  #allocation0 [shape = 'u32[]', space=smem, size = 0x4, offset = 0x4, fixed_abs, tag = 'smem constant byte address 0x4 - core index']
  #allocation1 [shape = 'u32[72,128]{1,0:T(1,128)}', space=vmem, size = 0x9000, scoped, tag = 'internal scratch']
  %s0 = inlined_call_operand.vmem [shape: bf16[2,4,9,9,4], index: 0, kind: input, shape index: {}]
  %s1 = inlined_call_operand.vmem [shape: bf16[9,4,128], index: 1, kind: input, shape index: {}]
  %s2 = inlined_call_operand.vmem [shape: bf16[2,64,128], index: 2, kind: output, shape index: {0}]
  %s3 = inlined_call_operand.vmem [shape: f32[2,2,1,128], index: 3, kind: output, shape index: {1}]
  %s4 = inlined_call_operand.vmem [shape: f32[2,2,1,128], index: 4, kind: output, shape index: {2}]
  %5 = xla_tuple %s2, %s3, %s4
  %s6 = sld [smem:[#allocation0]]
  $region57: #{basic_block_forward.3} parent=0
    _
  %s8 = ssub.s32 1, %s6
  %s9 = scalar_select 0, %s8, %s6
  loop: start=0, step=1, limit=6
  $region2: #{basic_block_forward.3} parent=0 // loop_pre_header
    _
  $region3: #{basic_block_forward.3} parent=0 // loop_header
    %s11 = sphi 0, %s15
    %p12 = scmp.ge.s32.totalorder %s11, 6
    %s18 = sphi 0, %s30
    %s19 = sphi 0, %s26
    %s20 = sphi 0, %s18
    %s21 = sphi 0, %s19
    %s22 = sphi 0, %s20
    %s23 = sphi 0, %s21
    %s33 = sphi 0, %s35
    %s36 = sphi 0, %s33
    %s37 = sphi 0, %s36
    %s53 = sphi 0, %s37
    %s57 = sphi 0, %s57
    %s59 = sphi 0, %s57
    %s60 = sphi 0, %s59
    %s74 = sphi 0, %s60
    %s82 = sphi 0, %s84
    %s85 = sphi 0, %s82
    %s86 = sphi 0, %s85
    %s102 = sphi 0, %s86
    %s110 = sphi 0, %s112
    %s113 = sphi 0, %s110
    %s114 = sphi 0, %s113
    %s130 = sphi 0, %s114
    %s138 = sphi 0, %s140
    %s141 = sphi 0, %s138
    %s142 = sphi 0, %s141
    %s158 = sphi 0, %s142
  $region4: #{basic_block_forward.3} parent=0 // loop_header_branch
    %14 = sbr.rel (%p12) target = $region8
  $region5: #{basic_block_forward.3} parent=0 // loop_body
    %s16 = ssub.s32 %s11, 1
    %s17 = ssub.s32 %s11, 2
    %s24 = sadd.s32 1, %s19
    %p25 = scmp.ge.s32.totalorder %s24, 2
    %s26 = scalar_select %p25, 0, %s24
    %s27 = sadd.s32 1, %s18
    %s28 = scalar_select %p25, %s27, %s18
    %p29 = scmp.ge.s32.totalorder %s28, 2
    %s30 = scalar_select %p29, 0, %s28
    %s31 = ssub.s32 %s18, %s30
    %p32 = scmp.eq.s32.totalorder %s31, 0
    %s34 = sadd.s32 %s33, 1
    %s35 = scalar_select %p32, %s33, %s34
    %p38 = pneg %p32
    %p39 = scmp.eq.s32.totalorder %s11, 3
    %p40 = por %p38, %p39
    %p41 = scmp.ne.s32.totalorder %s33, %s36
    %p42 = scmp.eq.s32.totalorder %s11, 0
    %p43 = por %p41, %p42
    %p44 = scmp.ne.s32.totalorder %s33, %s36
    %p45 = scmp.eq.s32.totalorder %s16, 3
    %p46 = por %p44, %p45
    %p47 = scmp.ne.s32.totalorder %s36, %s37
    %p48 = scmp.eq.s32.totalorder %s16, 0
    %p49 = por %p47, %p48
    %p50 = scmp.ne.s32.totalorder %s36, %s37
    %p51 = scmp.eq.s32.totalorder %s17, 3
    %p52 = por %p50, %p51
    %p54 = scmp.ne.s32.totalorder %s37, %s53
    %p55 = scmp.eq.s32.totalorder %s17, 0
    %p56 = por %p54, %p55
    %s58 = sadd.s32 %s57, 1
    %p61 = scmp.eq.s32.totalorder %s11, 3
    %p62 = scmp.ne.s32.totalorder %s57, %s59
    %p63 = scmp.eq.s32.totalorder %s11, 0
    %p64 = por %p62, %p63
    %p65 = scmp.ne.s32.totalorder %s57, %s59
    %p66 = scmp.eq.s32.totalorder %s16, 3
    %p67 = por %p65, %p66
    %p68 = scmp.ne.s32.totalorder %s59, %s60
    %p69 = scmp.eq.s32.totalorder %s16, 0
    %p70 = por %p68, %p69
    %p71 = scmp.ne.s32.totalorder %s59, %s60
    %p72 = scmp.eq.s32.totalorder %s17, 3
    %p73 = por %p71, %p72
    %p75 = scmp.ne.s32.totalorder %s60, %s74
    %p76 = scmp.eq.s32.totalorder %s17, 0
    %p77 = por %p75, %p76
    %s78 = ssub.s32 %s18, %s30
    %s79 = ssub.s32 %s19, %s26
    %s80 = sor.u32 %s78, %s79
    %p81 = scmp.eq.s32.totalorder %s80, 0
    %s83 = sadd.s32 %s82, 1
    %s84 = scalar_select %p81, %s82, %s83
    %p87 = pneg %p81
    %p88 = scmp.eq.s32.totalorder %s11, 3
    %p89 = por %p87, %p88
    %p90 = scmp.ne.s32.totalorder %s82, %s85
    %p91 = scmp.eq.s32.totalorder %s11, 0
    %p92 = por %p90, %p91
    %p93 = scmp.ne.s32.totalorder %s82, %s85
    %p94 = scmp.eq.s32.totalorder %s16, 3
    %p95 = por %p93, %p94
    %p96 = scmp.ne.s32.totalorder %s85, %s86
    %p97 = scmp.eq.s32.totalorder %s16, 0
    %p98 = por %p96, %p97
    %p99 = scmp.ne.s32.totalorder %s85, %s86
    %p100 = scmp.eq.s32.totalorder %s17, 3
    %p101 = por %p99, %p100
    %p103 = scmp.ne.s32.totalorder %s86, %s102
    %p104 = scmp.eq.s32.totalorder %s17, 0
    %p105 = por %p103, %p104
    %s106 = ssub.s32 %s18, %s30
    %s107 = ssub.s32 %s19, %s26
    %s108 = sor.u32 %s106, %s107
    %p109 = scmp.eq.s32.totalorder %s108, 0
    %s111 = sadd.s32 %s110, 1
    %s112 = scalar_select %p109, %s110, %s111
    %p115 = pneg %p109
    %p116 = scmp.eq.s32.totalorder %s11, 3
    %p117 = por %p115, %p116
    %p118 = scmp.ne.s32.totalorder %s110, %s113
    %p119 = scmp.eq.s32.totalorder %s11, 0
    %p120 = por %p118, %p119
    %p121 = scmp.ne.s32.totalorder %s110, %s113
    %p122 = scmp.eq.s32.totalorder %s16, 3
    %p123 = por %p121, %p122
    %p124 = scmp.ne.s32.totalorder %s113, %s114
    %p125 = scmp.eq.s32.totalorder %s16, 0
    %p126 = por %p124, %p125
    %p127 = scmp.ne.s32.totalorder %s113, %s114
    %p128 = scmp.eq.s32.totalorder %s17, 3
    %p129 = por %p127, %p128
    %p131 = scmp.ne.s32.totalorder %s114, %s130
    %p132 = scmp.eq.s32.totalorder %s17, 0
    %p133 = por %p131, %p132
    %s134 = ssub.s32 %s18, %s30
    %s135 = ssub.s32 %s19, %s26
    %s136 = sor.u32 %s134, %s135
    %p137 = scmp.eq.s32.totalorder %s136, 0
    %s139 = sadd.s32 %s138, 1
    %s140 = scalar_select %p137, %s138, %s139
    %p143 = pneg %p137
    %p144 = scmp.eq.s32.totalorder %s11, 3
    %p145 = por %p143, %p144
    %p146 = scmp.ne.s32.totalorder %s138, %s141
    %p147 = scmp.eq.s32.totalorder %s11, 0
    %p148 = por %p146, %p147
    %p149 = scmp.ne.s32.totalorder %s138, %s141
    %p150 = scmp.eq.s32.totalorder %s16, 3
    %p151 = por %p149, %p150
    %p152 = scmp.ne.s32.totalorder %s141, %s142
    %p153 = scmp.eq.s32.totalorder %s16, 0
    %p154 = por %p152, %p153
    %p155 = scmp.ne.s32.totalorder %s141, %s142
    %p156 = scmp.eq.s32.totalorder %s17, 3
    %p157 = por %p155, %p156
    %p159 = scmp.ne.s32.totalorder %s142, %s158
    %p160 = scmp.eq.s32.totalorder %s17, 0
    %p161 = por %p159, %p160
    %p162 = scmp.le.s32.totalorder 1, %s11
    %p163 = scmp.lt.s32.totalorder %s11, 5
    %p164 = pnand %p162, %p163
    %p165 = pneg %p164
    // Predicated region
    $region9: #{basic_block_forward.3} parent=5 // pred_check
      _
    $region10: #{basic_block_forward.3} parent=5 // pred_check_branch
      %167 = sbr.rel (%p164) target = $region12
    $region11: #{basic_block_forward.3} parent=5 // pred_region
      %s168 = ssub.s32 %s11, 1
      // Predicated region
      $region13: #{basic_block_forward.3} parent=11 // pred_check
        %p169 = pneg %p70
      $region14: #{basic_block_forward.3} parent=11 // pred_check_branch
        %171 = sbr.rel (%p169) target = $region16
      $region15: #{basic_block_forward.3} parent=11 // pred_region
        _
      $region16: #{basic_block_forward.3} parent=11 // pred_fallthru
        _
    $region12: #{basic_block_forward.3} parent=5 // pred_fallthru
      _
    %p172 = scmp.lt.s32.totalorder %s11, 4
    // Predicated region
    $region17: #{basic_block_forward.3} parent=5 // pred_check
      %p173 = pneg %p172
    $region18: #{basic_block_forward.3} parent=5 // pred_check_branch
      %175 = sbr.rel (%p173) target = $region20
    $region19: #{basic_block_forward.3} parent=5 // pred_region
      // Predicated region
      $region21: #{basic_block_forward.3} parent=19 // pred_check
        %p176 = pneg %p43
      $region22: #{basic_block_forward.3} parent=19 // pred_check_branch
        %178 = sbr.rel (%p176) target = $region24
      $region23: #{basic_block_forward.3} parent=19 // pred_region
        %p179 = scmp.lt.s32.totalorder %s18, 1
        %s180 = scalar_select %p179, %s18, 1
        %s181 = smul.addr %s180, 72
        %s182 = smul.addr %s181, 4
        %s183 = scalar_lea.vmem %s0, %s182
      $region24: #{basic_block_forward.3} parent=19 // pred_fallthru
        _
    $region20: #{basic_block_forward.3} parent=5 // pred_fallthru
      _
    %p184 = scmp.le.s32.totalorder 1, %s11
    %p185 = scmp.lt.s32.totalorder %s11, 5
    %p186 = pnand %p184, %p185
    %p187 = pneg %p186
    // Predicated region
    $region25: #{basic_block_forward.3} parent=5 // pred_check
      _
    $region26: #{basic_block_forward.3} parent=5 // pred_check_branch
      %189 = sbr.rel (%p186) target = $region28
    $region27: #{basic_block_forward.3} parent=5 // pred_region
      %s190 = ssub.s32 %s11, 1
      %p191 = scmp.lt.s32.totalorder %s20, 1
      %s192 = scalar_select %p191, %s20, 1
      %s193 = smul.addr %s192, 72
      %s194 = smul.addr %s193, 4
      %s195 = scalar_lea.vmem %s0, %s194
      %p196 = pneg %p49
      %p197 = pneg %p46
      %p198 = pneg %p70
      %p199 = pneg %p67
      %p200 = pneg %p98
      %p201 = pneg %p95
      %s202 = smul.u32 4, %s21
      %p203 = scmp.lt.s32.totalorder %s20, 1
      %s204 = scalar_select %p203, %s20, 1
      %p205 = scmp.lt.s32.totalorder %s202, 7
      %s206 = scalar_select %p205, %s202, 7
      %s207 = smul.addr %s204, 8
      %s208 = sadd.s32 %s206, %s207
      %s209 = smul.addr %s208, 4
      %s210 = scalar_lea.vmem %s2, %s209
      %p211 = pneg %p126
      %p212 = pneg %p123
      %p213 = scmp.lt.s32.totalorder %s20, 1
      %s214 = scalar_select %p213, %s20, 1
      %p215 = scmp.lt.s32.totalorder %s21, 1
      %s216 = scalar_select %p215, %s21, 1
      %s217 = smul.addr %s214, 2
      %s218 = sadd.s32 %s216, %s217
      %s219 = scalar_lea.vmem %s3, %s218
      %p220 = pneg %p154
      %p221 = pneg %p151
      %p222 = scmp.lt.s32.totalorder %s20, 1
      %s223 = scalar_select %p222, %s20, 1
      %p224 = scmp.lt.s32.totalorder %s21, 1
      %s225 = scalar_select %p224, %s21, 1
      %s226 = smul.addr %s223, 2
      %s227 = sadd.s32 %s225, %s226
      %s228 = scalar_lea.vmem %s4, %s227
      %p229 = scmp.lt.s32.totalorder %s20, 1
      %s230 = scalar_select %p229, %s20, 1
      %s231 = smul.addr %s230, 72
      %s232 = smul.addr %s231, 4
      %s233 = scalar_lea.vmem %s0, %s232
      %s234 = smul.u32 4, %s21
      %p235 = scmp.lt.s32.totalorder %s20, 1
      %s236 = scalar_select %p235, %s20, 1
      %p237 = scmp.lt.s32.totalorder %s234, 7
      %s238 = scalar_select %p237, %s234, 7
      %s239 = smul.addr %s236, 8
      %s240 = sadd.s32 %s238, %s239
      %s241 = smul.addr %s240, 4
      %s242 = scalar_lea.vmem %s2, %s241
      %s243 = smul.u32 4, %s21
      %p244 = scmp.lt.s32.totalorder %s20, 1
      %s245 = scalar_select %p244, %s20, 1
      %p246 = scmp.lt.s32.totalorder %s21, 1
      %s247 = scalar_select %p246, %s21, 1
      %s248 = smul.addr %s245, 2
      %s249 = sadd.s32 %s247, %s248
      %s250 = scalar_lea.vmem %s3, %s249
      %p251 = scmp.lt.s32.totalorder %s20, 1
      %s252 = scalar_select %p251, %s20, 1
      %p253 = scmp.lt.s32.totalorder %s21, 1
      %s254 = scalar_select %p253, %s21, 1
      %s255 = smul.addr %s252, 2
      %s256 = sadd.s32 %s254, %s255
      %s257 = scalar_lea.vmem %s4, %s256
      %s259 = smul.u32 %s21, 4
      %s260 = smul.u32 %s259, 2
      %s261 = smul.addr %s260, 4
      %s262 = scalar_lea.vmem %s233, %s261
      %v263 = vld [vmem:[%s262] sm:$0xf]
      %v264 = vld [vmem:[%s262 + $0x8] sm:$0xf]
      %v265 = vld [vmem:[%s262 + $0x10] sm:$0xf]
      %v266 = vld [vmem:[%s262 + $0x18] sm:$0xf]
      %v267 = vld [vmem:[%s1] sm:$0x3]
      %s268 = sadd.s32 %s260, 18
      %s269 = smul.addr %s268, 4
      %s270 = scalar_lea.vmem %s233, %s269
      %v271 = vld [vmem:[%s270] sm:$0xf]
      %v272 = vld [vmem:[%s270 + $0x8] sm:$0xf]
      %v273 = vld [vmem:[%s270 + $0x10] sm:$0xf]
      %v274 = vld [vmem:[%s270 + $0x18] sm:$0xf]
      %s275 = scalar_lea.vmem %s1, 2
      %v276 = vld [vmem:[%s275] sm:$0x3]
      %v281 = vunpack.c.l.b16 %v271
      %v282 = vunpack.c.l.b16 %v272
      %v283 = vunpack.c.l.b16 %v273
      %v284 = vunpack.c.l.b16 %v274
      %v285 = vpack.c.b16 %v282, %v281
      %v286 = vpack.c.b16 %v284, %v283
      %vm287 = vcmask 31744
      %v289 = vsel %vm287, %v285, 0
      %v292 = vsel %vm287, %v286, 0
      %vm294 = vcmask 1041408
      %v296 = vsel %vm294, %v276, 0
      %298 = vmatpush.bf16.msra.mxu0 0
      %299 = vmatpush.bf16.msra.mxu0 0
      %300 = vmatpush.bf16.msra.mxu0 0
      %301 = vmatpush.bf16.msra.mxu0 0
      %302 = vmatpush.bf16.msra.mxu0 0
      %303 = vmatpush.bf16.msra.mxu0 0
      %304 = vmatpush.bf16.msra.mxu0 0
      %305 = vmatpush.bf16.msra.mxu0 %v296
      %306 = vmatmul.bf16.gmra.mxu0 %v289
      %v307 = vpop.f32.mrf.mxu0
      %v308 = vadd.f32 0.0, %v307
      %v309 = vpop.f32.mrf.mxu0
      %v310 = vadd.f32 0.0, %v309
      %311 = vmatmul.bf16.gmra.mxu0 %v292
      %v312 = vpop.f32.mrf.mxu0
      %v313 = vadd.f32 0.0, %v312
      %v314 = vpop.f32.mrf.mxu0
      %v315 = vadd.f32 0.0, %v314
      %316 = vdwg.mxu0
      %v321 = vunpack.c.l.b16 %v263
      %v322 = vunpack.c.l.b16 %v264
      %v323 = vunpack.c.l.b16 %v265
      %v324 = vunpack.c.l.b16 %v266
      %v325 = vpack.c.b16 %v322, %v321
      %v326 = vpack.c.b16 %v324, %v323
      %v328 = vsel %vm287, %v325, 0
      %v331 = vsel %vm287, %v326, 0
      %v334 = vsel %vm294, %v267, 0
      %336 = vmatpush.bf16.msra.mxu0 0
      %337 = vmatpush.bf16.msra.mxu0 0
      %338 = vmatpush.bf16.msra.mxu0 0
      %339 = vmatpush.bf16.msra.mxu0 0
      %340 = vmatpush.bf16.msra.mxu0 0
      %341 = vmatpush.bf16.msra.mxu0 0
      %342 = vmatpush.bf16.msra.mxu0 0
      %343 = vmatpush.bf16.msra.mxu0 %v334
      %344 = vmatmul.bf16.gmra.mxu0 %v328
      %v345 = vpop.f32.mrf.mxu0
      %v346 = vadd.f32 %v308, %v345
      %v347 = vpop.f32.mrf.mxu0
      %v348 = vadd.f32 %v310, %v347
      %349 = vmatmul.bf16.gmra.mxu0 %v331
      %v350 = vpop.f32.mrf.mxu0
      %v351 = vadd.f32 %v313, %v350
      %v352 = vpop.f32.mrf.mxu0
      %v353 = vadd.f32 %v315, %v352
      %354 = vdwg.mxu0
      %v355 = vld [vmem:[%s262] sm:$0xf]
      %v356 = vld [vmem:[%s262 + $0x4] sm:$0x1]
      %v357 = vld [vmem:[%s262 + $0x8] sm:$0xf]
      %v358 = vld [vmem:[%s262 + $0xc] sm:$0x1]
      %v359 = vld [vmem:[%s262 + $0x10] sm:$0xf]
      %v360 = vld [vmem:[%s262 + $0x14] sm:$0x1]
      %v361 = vld [vmem:[%s262 + $0x18] sm:$0xf]
      %v362 = vld [vmem:[%s262 + $0x1c] sm:$0x1]
      %vm363 = vsmask.f32 3328
      %vm364 = vsmask.f32 7440
      %vm365 = vmor %vm363, %vm364
      %v367 = vshrl.u32 %v355, 16
      %v369 = vrot.slane %v367, 4
      %v370 = vshll.u32 %v355, 16
      %v372 = vrot.slane %v370, 5
      %v373 = vor.u32 %v369, %v372
      %v374 = vrot.slane %v373, 4
      %v376 = vshll.u32 %v356, 16
      %v378 = vrot.slane %v376, 5
      %v379 = vsel %vm365, %v374, %v378
      %v381 = vshrl.u32 %v357, 16
      %v383 = vrot.slane %v381, 4
      %v384 = vshll.u32 %v357, 16
      %v386 = vrot.slane %v384, 5
      %v387 = vor.u32 %v383, %v386
      %v388 = vrot.slane %v387, 4
      %v390 = vshll.u32 %v358, 16
      %v392 = vrot.slane %v390, 5
      %v393 = vsel %vm365, %v388, %v392
      %v395 = vshrl.u32 %v359, 16
      %v397 = vrot.slane %v395, 4
      %v398 = vshll.u32 %v359, 16
      %v400 = vrot.slane %v398, 5
      %v401 = vor.u32 %v397, %v400
      %v402 = vrot.slane %v401, 4
      %v404 = vshll.u32 %v360, 16
      %v406 = vrot.slane %v404, 5
      %v407 = vsel %vm365, %v402, %v406
      %v409 = vshrl.u32 %v361, 16
      %v411 = vrot.slane %v409, 4
      %v412 = vshll.u32 %v361, 16
      %v414 = vrot.slane %v412, 5
      %v415 = vor.u32 %v411, %v414
      %v416 = vrot.slane %v415, 4
      %v418 = vshll.u32 %v362, 16
      %v420 = vrot.slane %v418, 5
      %v421 = vsel %vm365, %v416, %v420
      %s422 = scalar_lea.vmem %s1, 4
      %v423 = vld [vmem:[%s422] sm:$0x3]
      %v424 = vunpack.c.l.b16 %v379
      %v425 = vunpack.c.l.b16 %v393
      %v426 = vunpack.c.l.b16 %v407
      %v427 = vunpack.c.l.b16 %v421
      %v428 = vpack.c.b16 %v425, %v424
      %v429 = vpack.c.b16 %v427, %v426
      %v431 = vsel %vm287, %v428, 0
      %v434 = vsel %vm287, %v429, 0
      %v437 = vsel %vm294, %v423, 0
      %439 = vmatpush.bf16.msra.mxu0 0
      %440 = vmatpush.bf16.msra.mxu0 0
      %441 = vmatpush.bf16.msra.mxu0 0
      %442 = vmatpush.bf16.msra.mxu0 0
      %443 = vmatpush.bf16.msra.mxu0 0
      %444 = vmatpush.bf16.msra.mxu0 0
      %445 = vmatpush.bf16.msra.mxu0 0
      %446 = vmatpush.bf16.msra.mxu0 %v437
      %447 = vmatmul.bf16.gmra.mxu0 %v431
      %v448 = vpop.f32.mrf.mxu0
      %v449 = vadd.f32 0.0, %v448
      %v450 = vpop.f32.mrf.mxu0
      %v451 = vadd.f32 0.0, %v450
      %452 = vmatmul.bf16.gmra.mxu0 %v434
      %v453 = vpop.f32.mrf.mxu0
      %v454 = vadd.f32 0.0, %v453
      %v455 = vpop.f32.mrf.mxu0
      %v456 = vadd.f32 0.0, %v455
      %457 = vdwg.mxu0
      %v458 = vadd.f32 %v346, %v449
      %v459 = vadd.f32 %v348, %v451
      %v460 = vadd.f32 %v351, %v454
      %v461 = vadd.f32 %v353, %v456
      %s462 = sadd.s32 %s260, 36
      %s463 = smul.addr %s462, 4
      %s464 = scalar_lea.vmem %s233, %s463
      %v465 = vld [vmem:[%s464] sm:$0xf]
      %v466 = vld [vmem:[%s464 + $0x8] sm:$0xf]
      %v467 = vld [vmem:[%s464 + $0x10] sm:$0xf]
      %v468 = vld [vmem:[%s464 + $0x18] sm:$0xf]
      %s469 = scalar_lea.vmem %s1, 6
      %v470 = vld [vmem:[%s469] sm:$0x3]
      %v475 = vunpack.c.l.b16 %v465
      %v476 = vunpack.c.l.b16 %v466
      %v477 = vunpack.c.l.b16 %v467
      %v478 = vunpack.c.l.b16 %v468
      %v479 = vpack.c.b16 %v476, %v475
      %v480 = vpack.c.b16 %v478, %v477
      %v482 = vsel %vm287, %v479, 0
      %v485 = vsel %vm287, %v480, 0
      %v488 = vsel %vm294, %v470, 0
      %490 = vmatpush.bf16.msra.mxu0 0
      %491 = vmatpush.bf16.msra.mxu0 0
      %492 = vmatpush.bf16.msra.mxu0 0
      %493 = vmatpush.bf16.msra.mxu0 0
      %494 = vmatpush.bf16.msra.mxu0 0
      %495 = vmatpush.bf16.msra.mxu0 0
      %496 = vmatpush.bf16.msra.mxu0 0
      %497 = vmatpush.bf16.msra.mxu0 %v488
      %498 = vmatmul.bf16.gmra.mxu0 %v482
      %v499 = vpop.f32.mrf.mxu0
      %v500 = vadd.f32 0.0, %v499
      %v501 = vpop.f32.mrf.mxu0
      %v502 = vadd.f32 0.0, %v501
      %503 = vmatmul.bf16.gmra.mxu0 %v485
      %v504 = vpop.f32.mrf.mxu0
      %v505 = vadd.f32 0.0, %v504
      %v506 = vpop.f32.mrf.mxu0
      %v507 = vadd.f32 0.0, %v506
      %508 = vdwg.mxu0
      %v509 = vadd.f32 %v458, %v500
      %v510 = vadd.f32 %v459, %v502
      %v511 = vadd.f32 %v460, %v505
      %v512 = vadd.f32 %v461, %v507
      %s513 = sadd.s32 %s260, 54
      %s514 = smul.addr %s513, 4
      %s515 = scalar_lea.vmem %s233, %s514
      %v516 = vld [vmem:[%s515] sm:$0xf]
      %v517 = vld [vmem:[%s515 + $0x8] sm:$0xf]
      %v518 = vld [vmem:[%s515 + $0x10] sm:$0xf]
      %v519 = vld [vmem:[%s515 + $0x18] sm:$0xf]
      %s520 = scalar_lea.vmem %s1, 8
      %v521 = vld [vmem:[%s520] sm:$0x3]
      %v526 = vunpack.c.l.b16 %v516
      %v527 = vunpack.c.l.b16 %v517
      %v528 = vunpack.c.l.b16 %v518
      %v529 = vunpack.c.l.b16 %v519
      %v530 = vpack.c.b16 %v527, %v526
      %v531 = vpack.c.b16 %v529, %v528
      %v533 = vsel %vm287, %v530, 0
      %v536 = vsel %vm287, %v531, 0
      %v539 = vsel %vm294, %v521, 0
      %541 = vmatpush.bf16.msra.mxu0 0
      %542 = vmatpush.bf16.msra.mxu0 0
      %543 = vmatpush.bf16.msra.mxu0 0
      %544 = vmatpush.bf16.msra.mxu0 0
      %545 = vmatpush.bf16.msra.mxu0 0
      %546 = vmatpush.bf16.msra.mxu0 0
      %547 = vmatpush.bf16.msra.mxu0 0
      %548 = vmatpush.bf16.msra.mxu0 %v539
      %549 = vmatmul.bf16.gmra.mxu0 %v533
      %v550 = vpop.f32.mrf.mxu0
      %v551 = vadd.f32 0.0, %v550
      %v552 = vpop.f32.mrf.mxu0
      %v553 = vadd.f32 0.0, %v552
      %554 = vmatmul.bf16.gmra.mxu0 %v536
      %v555 = vpop.f32.mrf.mxu0
      %v556 = vadd.f32 0.0, %v555
      %v557 = vpop.f32.mrf.mxu0
      %v558 = vadd.f32 0.0, %v557
      %559 = vdwg.mxu0
      %v560 = vadd.f32 %v509, %v551
      %v561 = vadd.f32 %v510, %v553
      %v562 = vadd.f32 %v511, %v556
      %v563 = vadd.f32 %v512, %v558
      %v564 = vld [vmem:[%s464] sm:$0xf]
      %v565 = vld [vmem:[%s464 + $0x4] sm:$0x1]
      %v566 = vld [vmem:[%s464 + $0x8] sm:$0xf]
      %v567 = vld [vmem:[%s464 + $0xc] sm:$0x1]
      %v568 = vld [vmem:[%s464 + $0x10] sm:$0xf]
      %v569 = vld [vmem:[%s464 + $0x14] sm:$0x1]
      %v570 = vld [vmem:[%s464 + $0x18] sm:$0xf]
      %v571 = vld [vmem:[%s464 + $0x1c] sm:$0x1]
      %v573 = vshrl.u32 %v564, 16
      %v575 = vrot.slane %v573, 4
      %v576 = vshll.u32 %v564, 16
      %v578 = vrot.slane %v576, 5
      %v579 = vor.u32 %v575, %v578
      %v580 = vrot.slane %v579, 4
      %v582 = vshll.u32 %v565, 16
      %v584 = vrot.slane %v582, 5
      %v585 = vsel %vm365, %v580, %v584
      %v587 = vshrl.u32 %v566, 16
      %v589 = vrot.slane %v587, 4
      %v590 = vshll.u32 %v566, 16
      %v592 = vrot.slane %v590, 5
      %v593 = vor.u32 %v589, %v592
      %v594 = vrot.slane %v593, 4
      %v596 = vshll.u32 %v567, 16
      %v598 = vrot.slane %v596, 5
      %v599 = vsel %vm365, %v594, %v598
      %v601 = vshrl.u32 %v568, 16
      %v603 = vrot.slane %v601, 4
      %v604 = vshll.u32 %v568, 16
      %v606 = vrot.slane %v604, 5
      %v607 = vor.u32 %v603, %v606
      %v608 = vrot.slane %v607, 4
      %v610 = vshll.u32 %v569, 16
      %v612 = vrot.slane %v610, 5
      %v613 = vsel %vm365, %v608, %v612
      %v615 = vshrl.u32 %v570, 16
      %v617 = vrot.slane %v615, 4
      %v618 = vshll.u32 %v570, 16
      %v620 = vrot.slane %v618, 5
      %v621 = vor.u32 %v617, %v620
      %v622 = vrot.slane %v621, 4
      %v624 = vshll.u32 %v571, 16
      %v626 = vrot.slane %v624, 5
      %v627 = vsel %vm365, %v622, %v626
      %s628 = scalar_lea.vmem %s1, 10
      %v629 = vld [vmem:[%s628] sm:$0x3]
      %v630 = vunpack.c.l.b16 %v585
      %v631 = vunpack.c.l.b16 %v599
      %v632 = vunpack.c.l.b16 %v613
      %v633 = vunpack.c.l.b16 %v627
      %v634 = vpack.c.b16 %v631, %v630
      %v635 = vpack.c.b16 %v633, %v632
      %v637 = vsel %vm287, %v634, 0
      %v640 = vsel %vm287, %v635, 0
      %v643 = vsel %vm294, %v629, 0
      %645 = vmatpush.bf16.msra.mxu0 0
      %646 = vmatpush.bf16.msra.mxu0 0
      %647 = vmatpush.bf16.msra.mxu0 0
      %648 = vmatpush.bf16.msra.mxu0 0
      %649 = vmatpush.bf16.msra.mxu0 0
      %650 = vmatpush.bf16.msra.mxu0 0
      %651 = vmatpush.bf16.msra.mxu0 0
      %652 = vmatpush.bf16.msra.mxu0 %v643
      %653 = vmatmul.bf16.gmra.mxu0 %v637
      %v654 = vpop.f32.mrf.mxu0
      %v655 = vadd.f32 0.0, %v654
      %v656 = vpop.f32.mrf.mxu0
      %v657 = vadd.f32 0.0, %v656
      %658 = vmatmul.bf16.gmra.mxu0 %v640
      %v659 = vpop.f32.mrf.mxu0
      %v660 = vadd.f32 0.0, %v659
      %v661 = vpop.f32.mrf.mxu0
      %v662 = vadd.f32 0.0, %v661
      %663 = vdwg.mxu0
      %v664 = vadd.f32 %v560, %v655
      %v665 = vadd.f32 %v561, %v657
      %v666 = vadd.f32 %v562, %v660
      %v667 = vadd.f32 %v563, %v662
      %s668 = sadd.s32 %s259, 1
      %s669 = smul.u32 %s668, 2
      %s670 = smul.addr %s669, 4
      %s671 = scalar_lea.vmem %s233, %s670
      %v672 = vld [vmem:[%s671] sm:$0xf]
      %v673 = vld [vmem:[%s671 + $0x8] sm:$0xf]
      %v674 = vld [vmem:[%s671 + $0x10] sm:$0xf]
      %v675 = vld [vmem:[%s671 + $0x18] sm:$0xf]
      %s676 = scalar_lea.vmem %s1, 12
      %v677 = vld [vmem:[%s676] sm:$0x3]
      %v682 = vunpack.c.l.b16 %v672
      %v683 = vunpack.c.l.b16 %v673
      %v684 = vunpack.c.l.b16 %v674
      %v685 = vunpack.c.l.b16 %v675
      %v686 = vpack.c.b16 %v683, %v682
      %v687 = vpack.c.b16 %v685, %v684
      %v689 = vsel %vm287, %v686, 0
      %v692 = vsel %vm287, %v687, 0
      %v695 = vsel %vm294, %v677, 0
      %697 = vmatpush.bf16.msra.mxu0 0
      %698 = vmatpush.bf16.msra.mxu0 0
      %699 = vmatpush.bf16.msra.mxu0 0
      %700 = vmatpush.bf16.msra.mxu0 0
      %701 = vmatpush.bf16.msra.mxu0 0
      %702 = vmatpush.bf16.msra.mxu0 0
      %703 = vmatpush.bf16.msra.mxu0 0
      %704 = vmatpush.bf16.msra.mxu0 %v695
      %705 = vmatmul.bf16.gmra.mxu0 %v689
      %v706 = vpop.f32.mrf.mxu0
      %v707 = vadd.f32 0.0, %v706
      %v708 = vpop.f32.mrf.mxu0
      %v709 = vadd.f32 0.0, %v708
      %710 = vmatmul.bf16.gmra.mxu0 %v692
      %v711 = vpop.f32.mrf.mxu0
      %v712 = vadd.f32 0.0, %v711
      %v713 = vpop.f32.mrf.mxu0
      %v714 = vadd.f32 0.0, %v713
      %715 = vdwg.mxu0
      %v716 = vadd.f32 %v664, %v707
      %v717 = vadd.f32 %v665, %v709
      %v718 = vadd.f32 %v666, %v712
      %v719 = vadd.f32 %v667, %v714
      %s720 = sadd.s32 %s669, 18
      %s721 = smul.addr %s720, 4
      %s722 = scalar_lea.vmem %s233, %s721
      %v723 = vld [vmem:[%s722] sm:$0xf]
      %v724 = vld [vmem:[%s722 + $0x8] sm:$0xf]
      %v725 = vld [vmem:[%s722 + $0x10] sm:$0xf]
      %v726 = vld [vmem:[%s722 + $0x18] sm:$0xf]
      %s727 = scalar_lea.vmem %s1, 14
      %v728 = vld [vmem:[%s727] sm:$0x3]
      %v733 = vunpack.c.l.b16 %v723
      %v734 = vunpack.c.l.b16 %v724
      %v735 = vunpack.c.l.b16 %v725
      %v736 = vunpack.c.l.b16 %v726
      %v737 = vpack.c.b16 %v734, %v733
      %v738 = vpack.c.b16 %v736, %v735
      %v740 = vsel %vm287, %v737, 0
      %v743 = vsel %vm287, %v738, 0
      %v746 = vsel %vm294, %v728, 0
      %748 = vmatpush.bf16.msra.mxu0 0
      %749 = vmatpush.bf16.msra.mxu0 0
      %750 = vmatpush.bf16.msra.mxu0 0
      %751 = vmatpush.bf16.msra.mxu0 0
      %752 = vmatpush.bf16.msra.mxu0 0
      %753 = vmatpush.bf16.msra.mxu0 0
      %754 = vmatpush.bf16.msra.mxu0 0
      %755 = vmatpush.bf16.msra.mxu0 %v746
      %756 = vmatmul.bf16.gmra.mxu0 %v740
      %v757 = vpop.f32.mrf.mxu0
      %v758 = vadd.f32 0.0, %v757
      %v759 = vpop.f32.mrf.mxu0
      %v760 = vadd.f32 0.0, %v759
      %761 = vmatmul.bf16.gmra.mxu0 %v743
      %v762 = vpop.f32.mrf.mxu0
      %v763 = vadd.f32 0.0, %v762
      %v764 = vpop.f32.mrf.mxu0
      %v765 = vadd.f32 0.0, %v764
      %766 = vdwg.mxu0
      %v767 = vadd.f32 %v716, %v758
      %v768 = vadd.f32 %v717, %v760
      %v769 = vadd.f32 %v718, %v763
      %v770 = vadd.f32 %v719, %v765
      %v771 = vld [vmem:[%s671] sm:$0xf]
      %v772 = vld [vmem:[%s671 + $0x4] sm:$0x1]
      %v773 = vld [vmem:[%s671 + $0x8] sm:$0xf]
      %v774 = vld [vmem:[%s671 + $0xc] sm:$0x1]
      %v775 = vld [vmem:[%s671 + $0x10] sm:$0xf]
      %v776 = vld [vmem:[%s671 + $0x14] sm:$0x1]
      %v777 = vld [vmem:[%s671 + $0x18] sm:$0xf]
      %v778 = vld [vmem:[%s671 + $0x1c] sm:$0x1]
      %v780 = vshrl.u32 %v771, 16
      %v782 = vrot.slane %v780, 4
      %v783 = vshll.u32 %v771, 16
      %v785 = vrot.slane %v783, 5
      %v786 = vor.u32 %v782, %v785
      %v787 = vrot.slane %v786, 4
      %v789 = vshll.u32 %v772, 16
      %v791 = vrot.slane %v789, 5
      %v792 = vsel %vm365, %v787, %v791
      %v794 = vshrl.u32 %v773, 16
      %v796 = vrot.slane %v794, 4
      %v797 = vshll.u32 %v773, 16
      %v799 = vrot.slane %v797, 5
      %v800 = vor.u32 %v796, %v799
      %v801 = vrot.slane %v800, 4
      %v803 = vshll.u32 %v774, 16
      %v805 = vrot.slane %v803, 5
      %v806 = vsel %vm365, %v801, %v805
      %v808 = vshrl.u32 %v775, 16
      %v810 = vrot.slane %v808, 4
      %v811 = vshll.u32 %v775, 16
      %v813 = vrot.slane %v811, 5
      %v814 = vor.u32 %v810, %v813
      %v815 = vrot.slane %v814, 4
      %v817 = vshll.u32 %v776, 16
      %v819 = vrot.slane %v817, 5
      %v820 = vsel %vm365, %v815, %v819
      %v822 = vshrl.u32 %v777, 16
      %v824 = vrot.slane %v822, 4
      %v825 = vshll.u32 %v777, 16
      %v827 = vrot.slane %v825, 5
      %v828 = vor.u32 %v824, %v827
      %v829 = vrot.slane %v828, 4
      %v831 = vshll.u32 %v778, 16
      %v833 = vrot.slane %v831, 5
      %v834 = vsel %vm365, %v829, %v833
      %s835 = scalar_lea.vmem %s1, 16
      %v836 = vld [vmem:[%s835] sm:$0x3]
      %v837 = vunpack.c.l.b16 %v792
      %v838 = vunpack.c.l.b16 %v806
      %v839 = vunpack.c.l.b16 %v820
      %v840 = vunpack.c.l.b16 %v834
      %v841 = vpack.c.b16 %v838, %v837
      %v842 = vpack.c.b16 %v840, %v839
      %v844 = vsel %vm287, %v841, 0
      %v847 = vsel %vm287, %v842, 0
      %v850 = vsel %vm294, %v836, 0
      %852 = vmatpush.bf16.msra.mxu0 0
      %853 = vmatpush.bf16.msra.mxu0 0
      %854 = vmatpush.bf16.msra.mxu0 0
      %855 = vmatpush.bf16.msra.mxu0 0
      %856 = vmatpush.bf16.msra.mxu0 0
      %857 = vmatpush.bf16.msra.mxu0 0
      %858 = vmatpush.bf16.msra.mxu0 0
      %859 = vmatpush.bf16.msra.mxu0 %v850
      %860 = vmatmul.bf16.gmra.mxu0 %v844
      %v861 = vpop.f32.mrf.mxu0
      %v862 = vadd.f32 0.0, %v861
      %v863 = vpop.f32.mrf.mxu0
      %v864 = vadd.f32 0.0, %v863
      %865 = vmatmul.bf16.gmra.mxu0 %v847
      %v866 = vpop.f32.mrf.mxu0
      %v867 = vadd.f32 0.0, %v866
      %v868 = vpop.f32.mrf.mxu0
      %v869 = vadd.f32 0.0, %v868
      %870 = vdwg.mxu0
      %v871 = vadd.f32 %v767, %v862
      %v872 = vadd.f32 %v768, %v864
      %v873 = vadd.f32 %v769, %v867
      %v874 = vadd.f32 %v770, %v869
      %v875 = vpack.c.bf16 %v871, %v871
      %v876 = vpack.c.bf16 %v872, %v872
      %v877 = vpack.c.bf16 %v873, %v873
      %v878 = vpack.c.bf16 %v874, %v874
      %879 = vst [vmem:[%s242] sm:$0xf] %v875
      %880 = vst [vmem:[%s242 + $0x4] sm:$0xf] %v876
      %881 = vst [vmem:[%s242 + $0x8] sm:$0xf] %v877
      %882 = vst [vmem:[%s242 + $0xc] sm:$0xf] %v878
      %v883 = vadd.f32 %v871, %v872
      %v884 = vadd.f32 %v883, %v873
      %v885 = vadd.f32 %v884, %v874
      %v886 = vrot.slane %v885, 4
      %v887 = vadd.f32 %v885, %v886
      %v888 = vrot.slane %v887, 2
      %v889 = vadd.f32 %v887, %v888
      %v890 = vrot.slane %v889, 1
      %v891 = vadd.f32 %v889, %v890
      %892 = vst [vmem:[%s250] sm:$0x1] %v891
      %v893 = vmul.f32 %v871, %v871
      %v894 = vmul.f32 %v872, %v872
      %v895 = vmul.f32 %v873, %v873
      %v896 = vmul.f32 %v874, %v874
      %v897 = vadd.f32 %v893, %v894
      %v898 = vadd.f32 %v897, %v895
      %v899 = vadd.f32 %v898, %v896
      %v900 = vrot.slane %v899, 4
      %v901 = vadd.f32 %v899, %v900
      %v902 = vrot.slane %v901, 2
      %v903 = vadd.f32 %v901, %v902
      %v904 = vrot.slane %v903, 1
      %v905 = vadd.f32 %v903, %v904
      %906 = vst [vmem:[%s257] sm:$0x1] %v905
      %s907 = smul.u32 4, %s21
      %p908 = scmp.lt.s32.totalorder %s20, 1
      %s909 = scalar_select %p908, %s20, 1
      %p910 = scmp.lt.s32.totalorder %s907, 7
      %s911 = scalar_select %p910, %s907, 7
      %s912 = smul.addr %s909, 8
      %s913 = sadd.s32 %s911, %s912
      %s914 = smul.addr %s913, 4
      %s915 = scalar_lea.vmem %s2, %s914
      %p916 = scmp.lt.s32.totalorder %s20, 1
      %s917 = scalar_select %p916, %s20, 1
      %p918 = scmp.lt.s32.totalorder %s21, 1
      %s919 = scalar_select %p918, %s21, 1
      %s920 = smul.addr %s917, 2
      %s921 = sadd.s32 %s919, %s920
      %s922 = scalar_lea.vmem %s3, %s921
      %p923 = scmp.lt.s32.totalorder %s20, 1
      %s924 = scalar_select %p923, %s20, 1
      %p925 = scmp.lt.s32.totalorder %s21, 1
      %s926 = scalar_select %p925, %s21, 1
      %s927 = smul.addr %s924, 2
      %s928 = sadd.s32 %s926, %s927
      %s929 = scalar_lea.vmem %s4, %s928
      // Predicated region
      $region29: #{basic_block_forward.3} parent=27 // pred_check
        %p930 = pneg %p95
      $region30: #{basic_block_forward.3} parent=27 // pred_check_branch
        %932 = sbr.rel (%p930) target = $region32
      $region31: #{basic_block_forward.3} parent=27 // pred_region
        %s933 = smul.u32 4, %s21
      $region32: #{basic_block_forward.3} parent=27 // pred_fallthru
        _
      // Predicated region
      $region33: #{basic_block_forward.3} parent=27 // pred_check
        %p934 = pneg %p123
      $region34: #{basic_block_forward.3} parent=27 // pred_check_branch
        %936 = sbr.rel (%p934) target = $region36
      $region35: #{basic_block_forward.3} parent=27 // pred_region
        _
      $region36: #{basic_block_forward.3} parent=27 // pred_fallthru
        _
      // Predicated region
      $region37: #{basic_block_forward.3} parent=27 // pred_check
        %p937 = pneg %p151
      $region38: #{basic_block_forward.3} parent=27 // pred_check_branch
        %939 = sbr.rel (%p937) target = $region40
      $region39: #{basic_block_forward.3} parent=27 // pred_region
        _
      $region40: #{basic_block_forward.3} parent=27 // pred_fallthru
        _
    $region28: #{basic_block_forward.3} parent=5 // pred_fallthru
      _
    %p940 = scmp.le.s32.totalorder 2, %s11
    // Predicated region
    $region41: #{basic_block_forward.3} parent=5 // pred_check
      %p941 = pneg %p940
    $region42: #{basic_block_forward.3} parent=5 // pred_check_branch
      %943 = sbr.rel (%p941) target = $region44
    $region43: #{basic_block_forward.3} parent=5 // pred_region
      %s944 = ssub.s32 %s11, 2
      // Predicated region
      $region45: #{basic_block_forward.3} parent=43 // pred_check
        %p945 = pneg %p101
      $region46: #{basic_block_forward.3} parent=43 // pred_check_branch
        %947 = sbr.rel (%p945) target = $region48
      $region47: #{basic_block_forward.3} parent=43 // pred_region
        %s948 = smul.u32 4, %s23
        %p949 = scmp.lt.s32.totalorder %s22, 1
        %s950 = scalar_select %p949, %s22, 1
        %p951 = scmp.lt.s32.totalorder %s948, 7
        %s952 = scalar_select %p951, %s948, 7
        %s953 = smul.addr %s950, 8
        %s954 = sadd.s32 %s952, %s953
        %s955 = smul.addr %s954, 4
        %s956 = scalar_lea.vmem %s2, %s955
      $region48: #{basic_block_forward.3} parent=43 // pred_fallthru
        _
      // Predicated region
      $region49: #{basic_block_forward.3} parent=43 // pred_check
        %p957 = pneg %p129
      $region50: #{basic_block_forward.3} parent=43 // pred_check_branch
        %959 = sbr.rel (%p957) target = $region52
      $region51: #{basic_block_forward.3} parent=43 // pred_region
        %p960 = scmp.lt.s32.totalorder %s22, 1
        %s961 = scalar_select %p960, %s22, 1
        %p962 = scmp.lt.s32.totalorder %s23, 1
        %s963 = scalar_select %p962, %s23, 1
        %s964 = smul.addr %s961, 2
        %s965 = sadd.s32 %s963, %s964
        %s966 = scalar_lea.vmem %s3, %s965
      $region52: #{basic_block_forward.3} parent=43 // pred_fallthru
        _
      // Predicated region
      $region53: #{basic_block_forward.3} parent=43 // pred_check
        %p967 = pneg %p157
      $region54: #{basic_block_forward.3} parent=43 // pred_check_branch
        %969 = sbr.rel (%p967) target = $region56
      $region55: #{basic_block_forward.3} parent=43 // pred_region
        %p970 = scmp.lt.s32.totalorder %s22, 1
        %s971 = scalar_select %p970, %s22, 1
        %p972 = scmp.lt.s32.totalorder %s23, 1
        %s973 = scalar_select %p972, %s23, 1
        %s974 = smul.addr %s971, 2
        %s975 = sadd.s32 %s973, %s974
        %s976 = scalar_lea.vmem %s4, %s975
      $region56: #{basic_block_forward.3} parent=43 // pred_fallthru
        _
    $region44: #{basic_block_forward.3} parent=5 // pred_fallthru
      _
  $region6: #{basic_block_forward.3} parent=0 // loop_footer
    %s15 = sadd.s32 1, %s11
  $region7: #{basic_block_forward.3} parent=0 // loop_footer_branch
    %10 = sbr.rel target = $region3
  $region8: #{basic_block_forward.3} parent=0 // loop_exit
    _

// kernel: basic_block_forward.5
$region0: #{basic_block_forward.5}
  #allocation0 [shape = 'u32[]', space=smem, size = 0x4, offset = 0x4, fixed_abs, tag = 'smem constant byte address 0x4 - core index']
  #allocation1 [shape = 'u32[72,128]{1,0:T(1,128)}', space=vmem, size = 0x9000, scoped, tag = 'internal scratch']
  %s0 = inlined_call_operand.vmem [shape: bf16[2,64,128], index: 0, kind: input, shape index: {}]
  %s1 = inlined_call_operand.vmem [shape: f32[1,128], index: 1, kind: input, shape index: {}]
  %s2 = inlined_call_operand.vmem [shape: f32[1,128], index: 2, kind: input, shape index: {}]
  %s3 = inlined_call_operand.vmem [shape: bf16[2,64,4], index: 3, kind: input, shape index: {}]
  %s4 = inlined_call_operand.vmem [shape: bf16[4,128], index: 4, kind: input, shape index: {}]
  %s5 = inlined_call_operand.hbm [shape: bf16[2,64,128], index: 5, kind: output, shape index: {}]
  %s6 = sld [smem:[#allocation0]]
  $region53: #{basic_block_forward.5} parent=0
    _
  %s8 = ssub.s32 1, %s6
  %s9 = scalar_select 0, %s8, %s6
  $region1: #{basic_block_forward.5} parent=0
    #allocation2 [shape = 'u8[16384]{0}', space=vmem, size = 0x4000, scoped, tag = 'output window, operand 0']
    #allocation3 [shape = 's32[2]{0}', space=sflag, size = 0x8, scoped, tag = 'scoped memory for basic_block_forward.5']
    %10 = vsyncpa [#allocation3], 0
    %s11 = scalar_lea.sflag [#allocation3], 1
    %12 = vsyncpa %s11, 0
    loop: start=0, step=1, limit=6
    $region2: #{basic_block_forward.5} parent=1 // loop_pre_header
      _
    $region3: #{basic_block_forward.5} parent=1 // loop_header
      %s14 = sphi 0, %s18
      %p15 = scmp.ge.s32.totalorder %s14, 6
      %s21 = sphi 0, %s33
      %s22 = sphi 0, %s29
      %s23 = sphi 0, %s21
      %s24 = sphi 0, %s22
      %s25 = sphi 0, %s23
      %s26 = sphi 0, %s24
      %s38 = sphi 0, %s40
      %s41 = sphi 0, %s38
      %s42 = sphi 0, %s41
      %s58 = sphi 0, %s42
      %s62 = sphi 0, %s62
      %s64 = sphi 0, %s62
      %s65 = sphi 0, %s64
      %s79 = sphi 0, %s65
      %s83 = sphi 0, %s83
      %s85 = sphi 0, %s83
      %s86 = sphi 0, %s85
      %s100 = sphi 0, %s86
      %s108 = sphi 0, %s110
      %s111 = sphi 0, %s108
      %s112 = sphi 0, %s111
      %s128 = sphi 0, %s112
      %s132 = sphi 0, %s132
      %s134 = sphi 0, %s132
      %s135 = sphi 0, %s134
      %s149 = sphi 0, %s135
      %s157 = sphi 0, %s159
      %s160 = sphi 0, %s157
      %s161 = sphi 0, %s160
      %s177 = sphi 0, %s161
    $region4: #{basic_block_forward.5} parent=1 // loop_header_branch
      %17 = sbr.rel (%p15) target = $region8
    $region5: #{basic_block_forward.5} parent=1 // loop_body
      %s19 = ssub.s32 %s14, 1
      %s20 = ssub.s32 %s14, 2
      %s27 = sadd.s32 1, %s22
      %p28 = scmp.ge.s32.totalorder %s27, 2
      %s29 = scalar_select %p28, 0, %s27
      %s30 = sadd.s32 1, %s21
      %s31 = scalar_select %p28, %s30, %s21
      %p32 = scmp.ge.s32.totalorder %s31, 2
      %s33 = scalar_select %p32, 0, %s31
      %s34 = ssub.s32 %s21, %s33
      %s35 = ssub.s32 %s22, %s29
      %s36 = sor.u32 %s34, %s35
      %p37 = scmp.eq.s32.totalorder %s36, 0
      %s39 = sadd.s32 %s38, 1
      %s40 = scalar_select %p37, %s38, %s39
      %p43 = pneg %p37
      %p44 = scmp.eq.s32.totalorder %s14, 3
      %p45 = por %p43, %p44
      %p46 = scmp.ne.s32.totalorder %s38, %s41
      %p47 = scmp.eq.s32.totalorder %s14, 0
      %p48 = por %p46, %p47
      %p49 = scmp.ne.s32.totalorder %s38, %s41
      %p50 = scmp.eq.s32.totalorder %s19, 3
      %p51 = por %p49, %p50
      %p52 = scmp.ne.s32.totalorder %s41, %s42
      %p53 = scmp.eq.s32.totalorder %s19, 0
      %p54 = por %p52, %p53
      %p55 = scmp.ne.s32.totalorder %s41, %s42
      %p56 = scmp.eq.s32.totalorder %s20, 3
      %p57 = por %p55, %p56
      %p59 = scmp.ne.s32.totalorder %s42, %s58
      %p60 = scmp.eq.s32.totalorder %s20, 0
      %p61 = por %p59, %p60
      %s63 = sadd.s32 %s62, 1
      %p66 = scmp.eq.s32.totalorder %s14, 3
      %p67 = scmp.ne.s32.totalorder %s62, %s64
      %p68 = scmp.eq.s32.totalorder %s14, 0
      %p69 = por %p67, %p68
      %p70 = scmp.ne.s32.totalorder %s62, %s64
      %p71 = scmp.eq.s32.totalorder %s19, 3
      %p72 = por %p70, %p71
      %p73 = scmp.ne.s32.totalorder %s64, %s65
      %p74 = scmp.eq.s32.totalorder %s19, 0
      %p75 = por %p73, %p74
      %p76 = scmp.ne.s32.totalorder %s64, %s65
      %p77 = scmp.eq.s32.totalorder %s20, 3
      %p78 = por %p76, %p77
      %p80 = scmp.ne.s32.totalorder %s65, %s79
      %p81 = scmp.eq.s32.totalorder %s20, 0
      %p82 = por %p80, %p81
      %s84 = sadd.s32 %s83, 1
      %p87 = scmp.eq.s32.totalorder %s14, 3
      %p88 = scmp.ne.s32.totalorder %s83, %s85
      %p89 = scmp.eq.s32.totalorder %s14, 0
      %p90 = por %p88, %p89
      %p91 = scmp.ne.s32.totalorder %s83, %s85
      %p92 = scmp.eq.s32.totalorder %s19, 3
      %p93 = por %p91, %p92
      %p94 = scmp.ne.s32.totalorder %s85, %s86
      %p95 = scmp.eq.s32.totalorder %s19, 0
      %p96 = por %p94, %p95
      %p97 = scmp.ne.s32.totalorder %s85, %s86
      %p98 = scmp.eq.s32.totalorder %s20, 3
      %p99 = por %p97, %p98
      %p101 = scmp.ne.s32.totalorder %s86, %s100
      %p102 = scmp.eq.s32.totalorder %s20, 0
      %p103 = por %p101, %p102
      %s104 = ssub.s32 %s21, %s33
      %s105 = ssub.s32 %s22, %s29
      %s106 = sor.u32 %s104, %s105
      %p107 = scmp.eq.s32.totalorder %s106, 0
      %s109 = sadd.s32 %s108, 1
      %s110 = scalar_select %p107, %s108, %s109
      %p113 = pneg %p107
      %p114 = scmp.eq.s32.totalorder %s14, 3
      %p115 = por %p113, %p114
      %p116 = scmp.ne.s32.totalorder %s108, %s111
      %p117 = scmp.eq.s32.totalorder %s14, 0
      %p118 = por %p116, %p117
      %p119 = scmp.ne.s32.totalorder %s108, %s111
      %p120 = scmp.eq.s32.totalorder %s19, 3
      %p121 = por %p119, %p120
      %p122 = scmp.ne.s32.totalorder %s111, %s112
      %p123 = scmp.eq.s32.totalorder %s19, 0
      %p124 = por %p122, %p123
      %p125 = scmp.ne.s32.totalorder %s111, %s112
      %p126 = scmp.eq.s32.totalorder %s20, 3
      %p127 = por %p125, %p126
      %p129 = scmp.ne.s32.totalorder %s112, %s128
      %p130 = scmp.eq.s32.totalorder %s20, 0
      %p131 = por %p129, %p130
      %s133 = sadd.s32 %s132, 1
      %p136 = scmp.eq.s32.totalorder %s14, 3
      %p137 = scmp.ne.s32.totalorder %s132, %s134
      %p138 = scmp.eq.s32.totalorder %s14, 0
      %p139 = por %p137, %p138
      %p140 = scmp.ne.s32.totalorder %s132, %s134
      %p141 = scmp.eq.s32.totalorder %s19, 3
      %p142 = por %p140, %p141
      %p143 = scmp.ne.s32.totalorder %s134, %s135
      %p144 = scmp.eq.s32.totalorder %s19, 0
      %p145 = por %p143, %p144
      %p146 = scmp.ne.s32.totalorder %s134, %s135
      %p147 = scmp.eq.s32.totalorder %s20, 3
      %p148 = por %p146, %p147
      %p150 = scmp.ne.s32.totalorder %s135, %s149
      %p151 = scmp.eq.s32.totalorder %s20, 0
      %p152 = por %p150, %p151
      %s153 = ssub.s32 %s21, %s33
      %s154 = ssub.s32 %s22, %s29
      %s155 = sor.u32 %s153, %s154
      %p156 = scmp.eq.s32.totalorder %s155, 0
      %s158 = sadd.s32 %s157, 1
      %s159 = scalar_select %p156, %s157, %s158
      %p162 = pneg %p156
      %p163 = scmp.eq.s32.totalorder %s14, 3
      %p164 = por %p162, %p163
      %p165 = scmp.ne.s32.totalorder %s157, %s160
      %p166 = scmp.eq.s32.totalorder %s14, 0
      %p167 = por %p165, %p166
      %p168 = scmp.ne.s32.totalorder %s157, %s160
      %p169 = scmp.eq.s32.totalorder %s19, 3
      %p170 = por %p168, %p169
      %p171 = scmp.ne.s32.totalorder %s160, %s161
      %p172 = scmp.eq.s32.totalorder %s19, 0
      %p173 = por %p171, %p172
      %p174 = scmp.ne.s32.totalorder %s160, %s161
      %p175 = scmp.eq.s32.totalorder %s20, 3
      %p176 = por %p174, %p175
      %p178 = scmp.ne.s32.totalorder %s161, %s177
      %p179 = scmp.eq.s32.totalorder %s20, 0
      %p180 = por %p178, %p179
      %p181 = scmp.le.s32.totalorder 1, %s14
      %p182 = scmp.lt.s32.totalorder %s14, 5
      %p183 = pnand %p181, %p182
      %p184 = pneg %p183
      // Predicated region
      $region9: #{basic_block_forward.5} parent=5 // pred_check
        _
      $region10: #{basic_block_forward.5} parent=5 // pred_check_branch
        %186 = sbr.rel (%p183) target = $region12
      $region11: #{basic_block_forward.5} parent=5 // pred_region
        %s187 = ssub.s32 %s14, 1
        // Predicated region
        $region13: #{basic_block_forward.5} parent=11 // pred_check
          %p188 = pneg %p75
        $region14: #{basic_block_forward.5} parent=11 // pred_check_branch
          %190 = sbr.rel (%p188) target = $region16
        $region15: #{basic_block_forward.5} parent=11 // pred_region
          _
        $region16: #{basic_block_forward.5} parent=11 // pred_fallthru
          _
        // Predicated region
        $region17: #{basic_block_forward.5} parent=11 // pred_check
          %p191 = pneg %p96
        $region18: #{basic_block_forward.5} parent=11 // pred_check_branch
          %193 = sbr.rel (%p191) target = $region20
        $region19: #{basic_block_forward.5} parent=11 // pred_region
          _
        $region20: #{basic_block_forward.5} parent=11 // pred_fallthru
          _
        // Predicated region
        $region21: #{basic_block_forward.5} parent=11 // pred_check
          %p194 = pneg %p145
        $region22: #{basic_block_forward.5} parent=11 // pred_check_branch
          %196 = sbr.rel (%p194) target = $region24
        $region23: #{basic_block_forward.5} parent=11 // pred_region
          _
        $region24: #{basic_block_forward.5} parent=11 // pred_fallthru
          _
      $region12: #{basic_block_forward.5} parent=5 // pred_fallthru
        _
      %p197 = scmp.lt.s32.totalorder %s14, 4
      // Predicated region
      $region25: #{basic_block_forward.5} parent=5 // pred_check
        %p198 = pneg %p197
      $region26: #{basic_block_forward.5} parent=5 // pred_check_branch
        %200 = sbr.rel (%p198) target = $region28
      $region27: #{basic_block_forward.5} parent=5 // pred_region
        // Predicated region
        $region29: #{basic_block_forward.5} parent=27 // pred_check
          %p201 = pneg %p48
        $region30: #{basic_block_forward.5} parent=27 // pred_check_branch
          %203 = sbr.rel (%p201) target = $region32
        $region31: #{basic_block_forward.5} parent=27 // pred_region
          %s204 = smul.u32 4, %s22
          %p205 = scmp.lt.s32.totalorder %s21, 1
          %s206 = scalar_select %p205, %s21, 1
          %p207 = scmp.lt.s32.totalorder %s204, 7
          %s208 = scalar_select %p207, %s204, 7
          %s209 = smul.addr %s206, 8
          %s210 = sadd.s32 %s208, %s209
          %s211 = smul.addr %s210, 4
          %s212 = scalar_lea.vmem %s0, %s211
          %s213 = smul.u32 4, %s22
        $region32: #{basic_block_forward.5} parent=27 // pred_fallthru
          _
        // Predicated region
        $region33: #{basic_block_forward.5} parent=27 // pred_check
          %p214 = pneg %p118
        $region34: #{basic_block_forward.5} parent=27 // pred_check_branch
          %216 = sbr.rel (%p214) target = $region36
        $region35: #{basic_block_forward.5} parent=27 // pred_region
          %s217 = smul.u32 4, %s22
          %p218 = scmp.lt.s32.totalorder %s21, 1
          %s219 = scalar_select %p218, %s21, 1
          %p220 = scmp.lt.s32.totalorder %s217, 7
          %s221 = scalar_select %p220, %s217, 7
          %s222 = smul.addr %s219, 8
          %s223 = sadd.s32 %s221, %s222
          %s224 = smul.addr %s223, 4
          %s225 = scalar_lea.vmem %s3, %s224
          %s226 = smul.u32 4, %s22
        $region36: #{basic_block_forward.5} parent=27 // pred_fallthru
          _
      $region28: #{basic_block_forward.5} parent=5 // pred_fallthru
        _
      %p227 = scmp.le.s32.totalorder 1, %s14
      %p228 = scmp.lt.s32.totalorder %s14, 5
      %p229 = pnand %p227, %p228
      %p230 = pneg %p229
      // Predicated region
      $region37: #{basic_block_forward.5} parent=5 // pred_check
        _
      $region38: #{basic_block_forward.5} parent=5 // pred_check_branch
        %232 = sbr.rel (%p229) target = $region40
      $region39: #{basic_block_forward.5} parent=5 // pred_region
        %s233 = ssub.s32 %s14, 1
        %s234 = smul.u32 4, %s24
        %p235 = scmp.lt.s32.totalorder %s23, 1
        %s236 = scalar_select %p235, %s23, 1
        %p237 = scmp.lt.s32.totalorder %s234, 7
        %s238 = scalar_select %p237, %s234, 7
        %s239 = smul.addr %s236, 8
        %s240 = sadd.s32 %s238, %s239
        %s241 = smul.addr %s240, 4
        %s242 = scalar_lea.vmem %s0, %s241
        %p243 = pneg %p54
        %p244 = pneg %p51
        %p245 = pneg %p75
        %p246 = pneg %p72
        %p247 = pneg %p96
        %p248 = pneg %p93
        %s249 = smul.u32 4, %s24
        %p250 = scmp.lt.s32.totalorder %s23, 1
        %s251 = scalar_select %p250, %s23, 1
        %p252 = scmp.lt.s32.totalorder %s249, 7
        %s253 = scalar_select %p252, %s249, 7
        %s254 = smul.addr %s251, 8
        %s255 = sadd.s32 %s253, %s254
        %s256 = smul.addr %s255, 4
        %s257 = scalar_lea.vmem %s3, %s256
        %p258 = pneg %p124
        %p259 = pneg %p121
        %p260 = pneg %p145
        %p261 = pneg %p142
        %p262 = pneg %p173
        %p263 = pneg %p170
        %s264 = sand.u32 %s160, 1
        %s265 = scalar_lea.sflag [#allocation3], %s264
        %s266 = sand.u32 %s160, 1
        %s267 = smul.addr %s266, 16
        %s268 = scalar_lea.vmem [#allocation2], %s267
        %s269 = smul.u32 4, %s24
        %p270 = scmp.lt.s32.totalorder %s23, 1
        %s271 = scalar_select %p270, %s23, 1
        %p272 = scmp.lt.s32.totalorder %s269, 7
        %s273 = scalar_select %p272, %s269, 7
        %s274 = smul.addr %s271, 8
        %s275 = sadd.s32 %s273, %s274
        %s276 = smul.addr %s275, 4
        %s277 = scalar_lea.vmem %s0, %s276
        %s278 = smul.u32 4, %s24
        %s279 = smul.u32 4, %s24
        %p280 = scmp.lt.s32.totalorder %s23, 1
        %s281 = scalar_select %p280, %s23, 1
        %p282 = scmp.lt.s32.totalorder %s279, 7
        %s283 = scalar_select %p282, %s279, 7
        %s284 = smul.addr %s281, 8
        %s285 = sadd.s32 %s283, %s284
        %s286 = smul.addr %s285, 4
        %s287 = scalar_lea.vmem %s3, %s286
        %s288 = smul.u32 4, %s24
        %s289 = smul.u32 4, %s24
        %v291 = vld [vmem:[%s277] sm:$0xf]
        %v292 = vld [vmem:[%s277 + $0x4] sm:$0xf]
        %v293 = vld [vmem:[%s277 + $0x8] sm:$0xf]
        %v294 = vld [vmem:[%s277 + $0xc] sm:$0xf]
        %v295 = vunpack.c.l.bf16 %v291
        %v296 = vunpack.c.l.bf16 %v292
        %v297 = vunpack.c.l.bf16 %v293
        %v298 = vunpack.c.l.bf16 %v294
        %v299 = vld [vmem:[%s1] sm:$0x1]
        %v301 = vperm.slane %v299, 0
        %v303 = vmul.f32 %v295, %v301
        %v304 = vmul.f32 %v296, %v301
        %v305 = vmul.f32 %v297, %v301
        %v306 = vmul.f32 %v298, %v301
        %v307 = vld [vmem:[%s2] sm:$0x1]
        %v309 = vperm.slane %v307, 0
        %v311 = vadd.f32 %v303, %v309
        %v312 = vadd.f32 %v304, %v309
        %v313 = vadd.f32 %v305, %v309
        %v314 = vadd.f32 %v306, %v309
        %v315 = vmax.f32 %v311, 0.0
        %v316 = vmax.f32 %v312, 0.0
        %v317 = vmax.f32 %v313, 0.0
        %v318 = vmax.f32 %v314, 0.0
        %v319 = vld [vmem:[%s287] sm:$0xf]
        %v320 = vld [vmem:[%s287 + $0x4] sm:$0xf]
        %v321 = vld [vmem:[%s287 + $0x8] sm:$0xf]
        %v322 = vld [vmem:[%s287 + $0xc] sm:$0xf]
        %v323 = vld [vmem:[%s4] sm:$0x3]
        %v328 = vunpack.c.l.b16 %v319
        %v329 = vunpack.c.l.b16 %v320
        %v330 = vunpack.c.l.b16 %v321
        %v331 = vunpack.c.l.b16 %v322
        %v332 = vpack.c.b16 %v329, %v328
        %v333 = vpack.c.b16 %v331, %v330
        %vm334 = vcmask 31744
        %v336 = vsel %vm334, %v332, 0
        %v339 = vsel %vm334, %v333, 0
        %vm341 = vcmask 1041408
        %v343 = vsel %vm341, %v323, 0
        %345 = vmatpush.bf16.msra.mxu0 0
        %346 = vmatpush.bf16.msra.mxu0 0
        %347 = vmatpush.bf16.msra.mxu0 0
        %348 = vmatpush.bf16.msra.mxu0 0
        %349 = vmatpush.bf16.msra.mxu0 0
        %350 = vmatpush.bf16.msra.mxu0 0
        %351 = vmatpush.bf16.msra.mxu0 0
        %352 = vmatpush.bf16.msra.mxu0 %v343
        %353 = vmatmul.bf16.gmra.mxu0 %v336
        %v354 = vpop.f32.mrf.mxu0
        %v355 = vadd.f32 0.0, %v354
        %v356 = vpop.f32.mrf.mxu0
        %v357 = vadd.f32 0.0, %v356
        %358 = vmatmul.bf16.gmra.mxu0 %v339
        %v359 = vpop.f32.mrf.mxu0
        %v360 = vadd.f32 0.0, %v359
        %v361 = vpop.f32.mrf.mxu0
        %v362 = vadd.f32 0.0, %v361
        %363 = vdwg.mxu0
        %v364 = vadd.f32 %v315, %v355
        %v365 = vadd.f32 %v316, %v357
        %v366 = vadd.f32 %v317, %v360
        %v367 = vadd.f32 %v318, %v362
        %v368 = vmax.f32 %v364, 0.0
        %v369 = vmax.f32 %v365, 0.0
        %v370 = vmax.f32 %v366, 0.0
        %v371 = vmax.f32 %v367, 0.0
        %v372 = vpack.c.bf16 %v368, %v368
        %v373 = vpack.c.bf16 %v369, %v369
        %v374 = vpack.c.bf16 %v370, %v370
        %v375 = vpack.c.bf16 %v371, %v371
        %376 = vst [vmem:[%s268] sm:$0xf] %v372
        %377 = vst [vmem:[%s268 + $0x4] sm:$0xf] %v373
        %378 = vst [vmem:[%s268 + $0x8] sm:$0xf] %v374
        %379 = vst [vmem:[%s268 + $0xc] sm:$0xf] %v375
        %s380 = sand.u32 %s160, 1
        %s381 = scalar_lea.sflag [#allocation3], %s380
        %s382 = sand.u32 %s160, 1
        %s383 = smul.addr %s382, 16
        %s384 = scalar_lea.vmem [#allocation2], %s383
        // Predicated region
        $region41: #{basic_block_forward.5} parent=39 // pred_check
          %p385 = pneg %p170
        $region42: #{basic_block_forward.5} parent=39 // pred_check_branch
          %387 = sbr.rel (%p385) target = $region44
        $region43: #{basic_block_forward.5} parent=39 // pred_region
          %s388 = smul.u32 4, %s24
          %390 = vsyncadd %s381, 0
          %s391 = smul.addr %s23, 8
          %s392 = sadd.s32 %s388, %s391
          %s393 = smul.addr %s392, 4
          %s394 = scalar_lea.hbm %s5, %s393
          %s395 = sshll.u32 %s384, 4
          %s396 = int_to_ptr.vmem [resolvable:$true] %s395
          %s397 = sshll.u32 %s394, 4
          %s398 = int_to_ptr.hbm [resolvable:$true] %s397
          %403 = dma.vmem_to_hbm [thread:$0]  %s396, 256, %s398, %s381, 64, 64, 4
        $region44: #{basic_block_forward.5} parent=39 // pred_fallthru
          _
      $region40: #{basic_block_forward.5} parent=5 // pred_fallthru
        _
      %p404 = scmp.le.s32.totalorder 2, %s14
      // Predicated region
      $region45: #{basic_block_forward.5} parent=5 // pred_check
        %p405 = pneg %p404
      $region46: #{basic_block_forward.5} parent=5 // pred_check_branch
        %407 = sbr.rel (%p405) target = $region48
      $region47: #{basic_block_forward.5} parent=5 // pred_region
        %s408 = ssub.s32 %s14, 2
        // Predicated region
        $region49: #{basic_block_forward.5} parent=47 // pred_check
          %p409 = pneg %p176
        $region50: #{basic_block_forward.5} parent=47 // pred_check_branch
          %411 = sbr.rel (%p409) target = $region52
        $region51: #{basic_block_forward.5} parent=47 // pred_region
          %s412 = sand.u32 %s161, 1
          %s413 = scalar_lea.sflag [#allocation3], %s412
          %s414 = sand.u32 %s161, 1
          %s415 = smul.addr %s414, 16
          %s416 = scalar_lea.vmem [#allocation2], %s415
          %418 = dma.done %s413, 256
        $region52: #{basic_block_forward.5} parent=47 // pred_fallthru
          _
      $region48: #{basic_block_forward.5} parent=5 // pred_fallthru
        _
    $region6: #{basic_block_forward.5} parent=1 // loop_footer
      %s18 = sadd.s32 1, %s14
    $region7: #{basic_block_forward.5} parent=1 // loop_footer_branch
      %13 = sbr.rel target = $region3
    $region8: #{basic_block_forward.5} parent=1 // loop_exit
      _
    %419 = vsyncpa [#allocation3], 1
    %s420 = scalar_lea.sflag [#allocation3], 1
    %421 = vsyncpa %s420, 1

// kernel: basic_block_forward.4
$region0: #{basic_block_forward.4}
  #allocation0 [shape = 'u32[]', space=smem, size = 0x4, offset = 0x4, fixed_abs, tag = 'smem constant byte address 0x4 - core index']
  #allocation1 [shape = 'u32[72,128]{1,0:T(1,128)}', space=vmem, size = 0x9000, scoped, tag = 'internal scratch']
  %s0 = inlined_call_operand.vmem [shape: bf16[2,1,10,10,128], index: 0, kind: input, shape index: {}]
  %s1 = inlined_call_operand.vmem [shape: bf16[9,128,128], index: 1, kind: input, shape index: {}]
  %s2 = inlined_call_operand.vmem [shape: f32[1,128], index: 2, kind: input, shape index: {}]
  %s3 = inlined_call_operand.vmem [shape: f32[1,128], index: 3, kind: input, shape index: {}]
  %s4 = inlined_call_operand.vmem [shape: bf16[2,64,128], index: 4, kind: output, shape index: {0}]
  %s5 = inlined_call_operand.vmem [shape: f32[2,2,1,128], index: 5, kind: output, shape index: {1}]
  %s6 = inlined_call_operand.vmem [shape: f32[2,2,1,128], index: 6, kind: output, shape index: {2}]
  %7 = xla_tuple %s4, %s5, %s6
  %s8 = sld [smem:[#allocation0]]
  $region65: #{basic_block_forward.4} parent=0
    _
  %s10 = ssub.s32 1, %s8
  %s11 = scalar_select 0, %s10, %s8
  loop: start=0, step=1, limit=6
  $region2: #{basic_block_forward.4} parent=0 // loop_pre_header
    _
  $region3: #{basic_block_forward.4} parent=0 // loop_header
    %s13 = sphi 0, %s17
    %p14 = scmp.ge.s32.totalorder %s13, 6
    %s20 = sphi 0, %s32
    %s21 = sphi 0, %s28
    %s22 = sphi 0, %s20
    %s23 = sphi 0, %s21
    %s24 = sphi 0, %s22
    %s25 = sphi 0, %s23
    %s35 = sphi 0, %s37
    %s38 = sphi 0, %s35
    %s39 = sphi 0, %s38
    %s55 = sphi 0, %s39
    %s59 = sphi 0, %s59
    %s61 = sphi 0, %s59
    %s62 = sphi 0, %s61
    %s76 = sphi 0, %s62
    %s80 = sphi 0, %s80
    %s82 = sphi 0, %s80
    %s83 = sphi 0, %s82
    %s97 = sphi 0, %s83
    %s101 = sphi 0, %s101
    %s103 = sphi 0, %s101
    %s104 = sphi 0, %s103
    %s118 = sphi 0, %s104
    %s126 = sphi 0, %s128
    %s129 = sphi 0, %s126
    %s130 = sphi 0, %s129
    %s146 = sphi 0, %s130
    %s154 = sphi 0, %s156
    %s157 = sphi 0, %s154
    %s158 = sphi 0, %s157
    %s174 = sphi 0, %s158
    %s182 = sphi 0, %s184
    %s185 = sphi 0, %s182
    %s186 = sphi 0, %s185
    %s202 = sphi 0, %s186
  $region4: #{basic_block_forward.4} parent=0 // loop_header_branch
    %16 = sbr.rel (%p14) target = $region8
  $region5: #{basic_block_forward.4} parent=0 // loop_body
    %s18 = ssub.s32 %s13, 1
    %s19 = ssub.s32 %s13, 2
    %s26 = sadd.s32 1, %s21
    %p27 = scmp.ge.s32.totalorder %s26, 2
    %s28 = scalar_select %p27, 0, %s26
    %s29 = sadd.s32 1, %s20
    %s30 = scalar_select %p27, %s29, %s20
    %p31 = scmp.ge.s32.totalorder %s30, 2
    %s32 = scalar_select %p31, 0, %s30
    %s33 = ssub.s32 %s20, %s32
    %p34 = scmp.eq.s32.totalorder %s33, 0
    %s36 = sadd.s32 %s35, 1
    %s37 = scalar_select %p34, %s35, %s36
    %p40 = pneg %p34
    %p41 = scmp.eq.s32.totalorder %s13, 3
    %p42 = por %p40, %p41
    %p43 = scmp.ne.s32.totalorder %s35, %s38
    %p44 = scmp.eq.s32.totalorder %s13, 0
    %p45 = por %p43, %p44
    %p46 = scmp.ne.s32.totalorder %s35, %s38
    %p47 = scmp.eq.s32.totalorder %s18, 3
    %p48 = por %p46, %p47
    %p49 = scmp.ne.s32.totalorder %s38, %s39
    %p50 = scmp.eq.s32.totalorder %s18, 0
    %p51 = por %p49, %p50
    %p52 = scmp.ne.s32.totalorder %s38, %s39
    %p53 = scmp.eq.s32.totalorder %s19, 3
    %p54 = por %p52, %p53
    %p56 = scmp.ne.s32.totalorder %s39, %s55
    %p57 = scmp.eq.s32.totalorder %s19, 0
    %p58 = por %p56, %p57
    %s60 = sadd.s32 %s59, 1
    %p63 = scmp.eq.s32.totalorder %s13, 3
    %p64 = scmp.ne.s32.totalorder %s59, %s61
    %p65 = scmp.eq.s32.totalorder %s13, 0
    %p66 = por %p64, %p65
    %p67 = scmp.ne.s32.totalorder %s59, %s61
    %p68 = scmp.eq.s32.totalorder %s18, 3
    %p69 = por %p67, %p68
    %p70 = scmp.ne.s32.totalorder %s61, %s62
    %p71 = scmp.eq.s32.totalorder %s18, 0
    %p72 = por %p70, %p71
    %p73 = scmp.ne.s32.totalorder %s61, %s62
    %p74 = scmp.eq.s32.totalorder %s19, 3
    %p75 = por %p73, %p74
    %p77 = scmp.ne.s32.totalorder %s62, %s76
    %p78 = scmp.eq.s32.totalorder %s19, 0
    %p79 = por %p77, %p78
    %s81 = sadd.s32 %s80, 1
    %p84 = scmp.eq.s32.totalorder %s13, 3
    %p85 = scmp.ne.s32.totalorder %s80, %s82
    %p86 = scmp.eq.s32.totalorder %s13, 0
    %p87 = por %p85, %p86
    %p88 = scmp.ne.s32.totalorder %s80, %s82
    %p89 = scmp.eq.s32.totalorder %s18, 3
    %p90 = por %p88, %p89
    %p91 = scmp.ne.s32.totalorder %s82, %s83
    %p92 = scmp.eq.s32.totalorder %s18, 0
    %p93 = por %p91, %p92
    %p94 = scmp.ne.s32.totalorder %s82, %s83
    %p95 = scmp.eq.s32.totalorder %s19, 3
    %p96 = por %p94, %p95
    %p98 = scmp.ne.s32.totalorder %s83, %s97
    %p99 = scmp.eq.s32.totalorder %s19, 0
    %p100 = por %p98, %p99
    %s102 = sadd.s32 %s101, 1
    %p105 = scmp.eq.s32.totalorder %s13, 3
    %p106 = scmp.ne.s32.totalorder %s101, %s103
    %p107 = scmp.eq.s32.totalorder %s13, 0
    %p108 = por %p106, %p107
    %p109 = scmp.ne.s32.totalorder %s101, %s103
    %p110 = scmp.eq.s32.totalorder %s18, 3
    %p111 = por %p109, %p110
    %p112 = scmp.ne.s32.totalorder %s103, %s104
    %p113 = scmp.eq.s32.totalorder %s18, 0
    %p114 = por %p112, %p113
    %p115 = scmp.ne.s32.totalorder %s103, %s104
    %p116 = scmp.eq.s32.totalorder %s19, 3
    %p117 = por %p115, %p116
    %p119 = scmp.ne.s32.totalorder %s104, %s118
    %p120 = scmp.eq.s32.totalorder %s19, 0
    %p121 = por %p119, %p120
    %s122 = ssub.s32 %s20, %s32
    %s123 = ssub.s32 %s21, %s28
    %s124 = sor.u32 %s122, %s123
    %p125 = scmp.eq.s32.totalorder %s124, 0
    %s127 = sadd.s32 %s126, 1
    %s128 = scalar_select %p125, %s126, %s127
    %p131 = pneg %p125
    %p132 = scmp.eq.s32.totalorder %s13, 3
    %p133 = por %p131, %p132
    %p134 = scmp.ne.s32.totalorder %s126, %s129
    %p135 = scmp.eq.s32.totalorder %s13, 0
    %p136 = por %p134, %p135
    %p137 = scmp.ne.s32.totalorder %s126, %s129
    %p138 = scmp.eq.s32.totalorder %s18, 3
    %p139 = por %p137, %p138
    %p140 = scmp.ne.s32.totalorder %s129, %s130
    %p141 = scmp.eq.s32.totalorder %s18, 0
    %p142 = por %p140, %p141
    %p143 = scmp.ne.s32.totalorder %s129, %s130
    %p144 = scmp.eq.s32.totalorder %s19, 3
    %p145 = por %p143, %p144
    %p147 = scmp.ne.s32.totalorder %s130, %s146
    %p148 = scmp.eq.s32.totalorder %s19, 0
    %p149 = por %p147, %p148
    %s150 = ssub.s32 %s20, %s32
    %s151 = ssub.s32 %s21, %s28
    %s152 = sor.u32 %s150, %s151
    %p153 = scmp.eq.s32.totalorder %s152, 0
    %s155 = sadd.s32 %s154, 1
    %s156 = scalar_select %p153, %s154, %s155
    %p159 = pneg %p153
    %p160 = scmp.eq.s32.totalorder %s13, 3
    %p161 = por %p159, %p160
    %p162 = scmp.ne.s32.totalorder %s154, %s157
    %p163 = scmp.eq.s32.totalorder %s13, 0
    %p164 = por %p162, %p163
    %p165 = scmp.ne.s32.totalorder %s154, %s157
    %p166 = scmp.eq.s32.totalorder %s18, 3
    %p167 = por %p165, %p166
    %p168 = scmp.ne.s32.totalorder %s157, %s158
    %p169 = scmp.eq.s32.totalorder %s18, 0
    %p170 = por %p168, %p169
    %p171 = scmp.ne.s32.totalorder %s157, %s158
    %p172 = scmp.eq.s32.totalorder %s19, 3
    %p173 = por %p171, %p172
    %p175 = scmp.ne.s32.totalorder %s158, %s174
    %p176 = scmp.eq.s32.totalorder %s19, 0
    %p177 = por %p175, %p176
    %s178 = ssub.s32 %s20, %s32
    %s179 = ssub.s32 %s21, %s28
    %s180 = sor.u32 %s178, %s179
    %p181 = scmp.eq.s32.totalorder %s180, 0
    %s183 = sadd.s32 %s182, 1
    %s184 = scalar_select %p181, %s182, %s183
    %p187 = pneg %p181
    %p188 = scmp.eq.s32.totalorder %s13, 3
    %p189 = por %p187, %p188
    %p190 = scmp.ne.s32.totalorder %s182, %s185
    %p191 = scmp.eq.s32.totalorder %s13, 0
    %p192 = por %p190, %p191
    %p193 = scmp.ne.s32.totalorder %s182, %s185
    %p194 = scmp.eq.s32.totalorder %s18, 3
    %p195 = por %p193, %p194
    %p196 = scmp.ne.s32.totalorder %s185, %s186
    %p197 = scmp.eq.s32.totalorder %s18, 0
    %p198 = por %p196, %p197
    %p199 = scmp.ne.s32.totalorder %s185, %s186
    %p200 = scmp.eq.s32.totalorder %s19, 3
    %p201 = por %p199, %p200
    %p203 = scmp.ne.s32.totalorder %s186, %s202
    %p204 = scmp.eq.s32.totalorder %s19, 0
    %p205 = por %p203, %p204
    %p206 = scmp.le.s32.totalorder 1, %s13
    %p207 = scmp.lt.s32.totalorder %s13, 5
    %p208 = pnand %p206, %p207
    %p209 = pneg %p208
    // Predicated region
    $region9: #{basic_block_forward.4} parent=5 // pred_check
      _
    $region10: #{basic_block_forward.4} parent=5 // pred_check_branch
      %211 = sbr.rel (%p208) target = $region12
    $region11: #{basic_block_forward.4} parent=5 // pred_region
      %s212 = ssub.s32 %s13, 1
      // Predicated region
      $region13: #{basic_block_forward.4} parent=11 // pred_check
        %p213 = pneg %p72
      $region14: #{basic_block_forward.4} parent=11 // pred_check_branch
        %215 = sbr.rel (%p213) target = $region16
      $region15: #{basic_block_forward.4} parent=11 // pred_region
        _
      $region16: #{basic_block_forward.4} parent=11 // pred_fallthru
        _
      // Predicated region
      $region17: #{basic_block_forward.4} parent=11 // pred_check
        %p216 = pneg %p93
      $region18: #{basic_block_forward.4} parent=11 // pred_check_branch
        %218 = sbr.rel (%p216) target = $region20
      $region19: #{basic_block_forward.4} parent=11 // pred_region
        _
      $region20: #{basic_block_forward.4} parent=11 // pred_fallthru
        _
      // Predicated region
      $region21: #{basic_block_forward.4} parent=11 // pred_check
        %p219 = pneg %p114
      $region22: #{basic_block_forward.4} parent=11 // pred_check_branch
        %221 = sbr.rel (%p219) target = $region24
      $region23: #{basic_block_forward.4} parent=11 // pred_region
        _
      $region24: #{basic_block_forward.4} parent=11 // pred_fallthru
        _
    $region12: #{basic_block_forward.4} parent=5 // pred_fallthru
      _
    %p222 = scmp.lt.s32.totalorder %s13, 4
    // Predicated region
    $region25: #{basic_block_forward.4} parent=5 // pred_check
      %p223 = pneg %p222
    $region26: #{basic_block_forward.4} parent=5 // pred_check_branch
      %225 = sbr.rel (%p223) target = $region28
    $region27: #{basic_block_forward.4} parent=5 // pred_region
      // Predicated region
      $region29: #{basic_block_forward.4} parent=27 // pred_check
        %p226 = pneg %p45
      $region30: #{basic_block_forward.4} parent=27 // pred_check_branch
        %228 = sbr.rel (%p226) target = $region32
      $region31: #{basic_block_forward.4} parent=27 // pred_region
        %p229 = scmp.lt.s32.totalorder %s20, 1
        %s230 = scalar_select %p229, %s20, 1
        %s231 = smul.addr %s230, 20
        %s232 = smul.addr %s231, 4
        %s233 = scalar_lea.vmem %s0, %s232
      $region32: #{basic_block_forward.4} parent=27 // pred_fallthru
        _
    $region28: #{basic_block_forward.4} parent=5 // pred_fallthru
      _
    %p234 = scmp.le.s32.totalorder 1, %s13
    %p235 = scmp.lt.s32.totalorder %s13, 5
    %p236 = pnand %p234, %p235
    %p237 = pneg %p236
    // Predicated region
    $region33: #{basic_block_forward.4} parent=5 // pred_check
      _
    $region34: #{basic_block_forward.4} parent=5 // pred_check_branch
      %239 = sbr.rel (%p236) target = $region36
    $region35: #{basic_block_forward.4} parent=5 // pred_region
      %s240 = ssub.s32 %s13, 1
      %p241 = scmp.lt.s32.totalorder %s22, 1
      %s242 = scalar_select %p241, %s22, 1
      %s243 = smul.addr %s242, 20
      %s244 = smul.addr %s243, 4
      %s245 = scalar_lea.vmem %s0, %s244
      %p246 = pneg %p51
      %p247 = pneg %p48
      %p248 = pneg %p72
      %p249 = pneg %p69
      %p250 = pneg %p93
      %p251 = pneg %p90
      %p252 = pneg %p114
      %p253 = pneg %p111
      %p254 = pneg %p142
      %p255 = pneg %p139
      %s256 = smul.u32 4, %s23
      %p257 = scmp.lt.s32.totalorder %s22, 1
      %s258 = scalar_select %p257, %s22, 1
      %p259 = scmp.lt.s32.totalorder %s256, 7
      %s260 = scalar_select %p259, %s256, 7
      %s261 = smul.addr %s258, 8
      %s262 = sadd.s32 %s260, %s261
      %s263 = smul.addr %s262, 4
      %s264 = scalar_lea.vmem %s4, %s263
      %p265 = pneg %p170
      %p266 = pneg %p167
      %p267 = scmp.lt.s32.totalorder %s22, 1
      %s268 = scalar_select %p267, %s22, 1
      %p269 = scmp.lt.s32.totalorder %s23, 1
      %s270 = scalar_select %p269, %s23, 1
      %s271 = smul.addr %s268, 2
      %s272 = sadd.s32 %s270, %s271
      %s273 = scalar_lea.vmem %s5, %s272
      %p274 = pneg %p198
      %p275 = pneg %p195
      %p276 = scmp.lt.s32.totalorder %s22, 1
      %s277 = scalar_select %p276, %s22, 1
      %p278 = scmp.lt.s32.totalorder %s23, 1
      %s279 = scalar_select %p278, %s23, 1
      %s280 = smul.addr %s277, 2
      %s281 = sadd.s32 %s279, %s280
      %s282 = scalar_lea.vmem %s6, %s281
      %p283 = scmp.lt.s32.totalorder %s22, 1
      %s284 = scalar_select %p283, %s22, 1
      %s285 = smul.addr %s284, 20
      %s286 = smul.addr %s285, 4
      %s287 = scalar_lea.vmem %s0, %s286
      %s288 = smul.u32 4, %s23
      %p289 = scmp.lt.s32.totalorder %s22, 1
      %s290 = scalar_select %p289, %s22, 1
      %p291 = scmp.lt.s32.totalorder %s288, 7
      %s292 = scalar_select %p291, %s288, 7
      %s293 = smul.addr %s290, 8
      %s294 = sadd.s32 %s292, %s293
      %s295 = smul.addr %s294, 4
      %s296 = scalar_lea.vmem %s4, %s295
      %s297 = smul.u32 4, %s23
      %p298 = scmp.lt.s32.totalorder %s22, 1
      %s299 = scalar_select %p298, %s22, 1
      %p300 = scmp.lt.s32.totalorder %s23, 1
      %s301 = scalar_select %p300, %s23, 1
      %s302 = smul.addr %s299, 2
      %s303 = sadd.s32 %s301, %s302
      %s304 = scalar_lea.vmem %s5, %s303
      %p305 = scmp.lt.s32.totalorder %s22, 1
      %s306 = scalar_select %p305, %s22, 1
      %p307 = scmp.lt.s32.totalorder %s23, 1
      %s308 = scalar_select %p307, %s23, 1
      %s309 = smul.addr %s306, 2
      %s310 = sadd.s32 %s308, %s309
      %s311 = scalar_lea.vmem %s6, %s310
      %s312 = smul.u32 %s23, 4
      %s313 = smul.u32 %s312, 2
      %s314 = smul.addr %s313, 4
      %s315 = scalar_lea.vmem %s287, %s314
      %v316 = vld [vmem:[%s315] sm:$0xf]
      %v317 = vld [vmem:[%s315 + $0x4] sm:$0x1]
      %v318 = vld [vmem:[%s315 + $0x8] sm:$0xf]
      %v319 = vld [vmem:[%s315 + $0xc] sm:$0x1]
      %v320 = vld [vmem:[%s315 + $0x10] sm:$0xf]
      %v321 = vld [vmem:[%s315 + $0x14] sm:$0x1]
      %v322 = vld [vmem:[%s315 + $0x18] sm:$0xf]
      %v323 = vld [vmem:[%s315 + $0x1c] sm:$0x1]
      %v324 = vld [vmem:[%s315 + $0x20] sm:$0xf]
      %v325 = vld [vmem:[%s315 + $0x24] sm:$0x1]
      %v326 = vld [vmem:[%s315 + $0x28] sm:$0xf]
      %v327 = vld [vmem:[%s315 + $0x2c] sm:$0x1]
      %v328 = vunpack.c.l.bf16 %v316
      %v329 = vunpack.c.l.bf16 %v317
      %v330 = vunpack.c.l.bf16 %v318
      %v331 = vunpack.c.l.bf16 %v319
      %v332 = vunpack.c.l.bf16 %v320
      %v333 = vunpack.c.l.bf16 %v321
      %v334 = vunpack.c.l.bf16 %v322
      %v335 = vunpack.c.l.bf16 %v323
      %v336 = vunpack.c.l.bf16 %v324
      %v337 = vunpack.c.l.bf16 %v325
      %v338 = vunpack.c.l.bf16 %v326
      %v339 = vunpack.c.l.bf16 %v327
      %v340 = vld [vmem:[%s2] sm:$0x1]
      %v342 = vperm.slane %v340, 0
      %v344 = vmul.f32 %v328, %v342
      %v345 = vmul.f32 %v329, %v342
      %v346 = vmul.f32 %v330, %v342
      %v347 = vmul.f32 %v331, %v342
      %v348 = vmul.f32 %v332, %v342
      %v349 = vmul.f32 %v333, %v342
      %v350 = vmul.f32 %v334, %v342
      %v351 = vmul.f32 %v335, %v342
      %v352 = vmul.f32 %v336, %v342
      %v353 = vmul.f32 %v337, %v342
      %v354 = vmul.f32 %v338, %v342
      %v355 = vmul.f32 %v339, %v342
      %v356 = vld [vmem:[%s3] sm:$0x1]
      %v358 = vperm.slane %v356, 0
      %v360 = vadd.f32 %v344, %v358
      %v361 = vadd.f32 %v345, %v358
      %v362 = vadd.f32 %v346, %v358
      %v363 = vadd.f32 %v347, %v358
      %v364 = vadd.f32 %v348, %v358
      %v365 = vadd.f32 %v349, %v358
      %v366 = vadd.f32 %v350, %v358
      %v367 = vadd.f32 %v351, %v358
      %v368 = vadd.f32 %v352, %v358
      %v369 = vadd.f32 %v353, %v358
      %v370 = vadd.f32 %v354, %v358
      %v371 = vadd.f32 %v355, %v358
      %v372 = vmax.f32 %v360, 0.0
      %v373 = vmax.f32 %v361, 0.0
      %v374 = vmax.f32 %v362, 0.0
      %v375 = vmax.f32 %v363, 0.0
      %v376 = vmax.f32 %v364, 0.0
      %v377 = vmax.f32 %v365, 0.0
      %v378 = vmax.f32 %v366, 0.0
      %v379 = vmax.f32 %v367, 0.0
      %v380 = vmax.f32 %v368, 0.0
      %v381 = vmax.f32 %v369, 0.0
      %v382 = vmax.f32 %v370, 0.0
      %v383 = vmax.f32 %v371, 0.0
      %v384 = vstv %s312
      %v385 = vadd.s32 %v384, 1
      %v386 = vadd.s32 %v384, 2
      %v387 = vadd.s32 %v384, 3
      %v388 = vadd.s32 %v384, 4
      %v389 = vadd.s32 %v384, 5
      %v390 = vlaneseq
      %v391 = vshrl.u32 %v390, 7
      %v392 = vadd.s32 %v391, 8
      %vm393 = vcmp.ge.s32.totalorder %v384, 1
      %vm394 = vcmp.ge.s32.totalorder %v385, 1
      %vm395 = vcmp.ge.s32.totalorder %v386, 1
      %vm396 = vcmp.ge.s32.totalorder %v387, 1
      %vm397 = vcmp.ge.s32.totalorder %v388, 1
      %vm398 = vcmp.ge.s32.totalorder %v389, 1
      %vm399 = vcmp.le.s32.totalorder %v384, 8
      %vm400 = vcmp.le.s32.totalorder %v385, 8
      %vm401 = vcmp.le.s32.totalorder %v386, 8
      %vm402 = vcmp.le.s32.totalorder %v387, 8
      %vm403 = vcmp.le.s32.totalorder %v388, 8
      %vm404 = vcmp.le.s32.totalorder %v389, 8
      %vm405 = vmand %vm393, %vm399
      %vm406 = vmand %vm394, %vm400
      %vm407 = vmand %vm395, %vm401
      %vm408 = vmand %vm396, %vm402
      %vm409 = vmand %vm397, %vm403
      %vm410 = vmand %vm398, %vm404
      %vm411 = vcmp.ge.s32.totalorder %v391, 1
      %vm412 = vcmp.ge.s32.totalorder %v392, 1
      %vm413 = vmand %vm405, %vm411
      %vm414 = vmand %vm405, %vm412
      %vm415 = vmand %vm406, %vm411
      %vm416 = vmand %vm406, %vm412
      %vm417 = vmand %vm407, %vm411
      %vm418 = vmand %vm407, %vm412
      %vm419 = vmand %vm408, %vm411
      %vm420 = vmand %vm408, %vm412
      %vm421 = vmand %vm409, %vm411
      %vm422 = vmand %vm409, %vm412
      %vm423 = vmand %vm410, %vm411
      %vm424 = vmand %vm410, %vm412
      %vm425 = vcmp.le.s32.totalorder %v391, 8
      %vm426 = vcmp.le.s32.totalorder %v392, 8
      %vm427 = vmand %vm413, %vm425
      %vm428 = vmand %vm414, %vm426
      %vm429 = vmand %vm415, %vm425
      %vm430 = vmand %vm416, %vm426
      %vm431 = vmand %vm417, %vm425
      %vm432 = vmand %vm418, %vm426
      %vm433 = vmand %vm419, %vm425
      %vm434 = vmand %vm420, %vm426
      %vm435 = vmand %vm421, %vm425
      %vm436 = vmand %vm422, %vm426
      %vm437 = vmand %vm423, %vm425
      %vm438 = vmand %vm424, %vm426
      %v439 = vsel %vm427, %v372, 0.0
      %v440 = vsel %vm428, %v373, 0.0
      %v441 = vsel %vm429, %v374, 0.0
      %v442 = vsel %vm430, %v375, 0.0
      %v443 = vsel %vm431, %v376, 0.0
      %v444 = vsel %vm432, %v377, 0.0
      %v445 = vsel %vm433, %v378, 0.0
      %v446 = vsel %vm434, %v379, 0.0
      %v447 = vsel %vm435, %v380, 0.0
      %v448 = vsel %vm436, %v381, 0.0
      %v449 = vsel %vm437, %v382, 0.0
      %v450 = vsel %vm438, %v383, 0.0
      %v451 = vpack.c.bf16 %v439, %v439
      %v452 = vpack.c.bf16 %v440, %v440
      %v453 = vpack.c.bf16 %v441, %v441
      %v454 = vpack.c.bf16 %v442, %v442
      %v455 = vpack.c.bf16 %v443, %v443
      %v456 = vpack.c.bf16 %v444, %v444
      %v457 = vpack.c.bf16 %v445, %v445
      %v458 = vpack.c.bf16 %v446, %v446
      %v459 = vpack.c.bf16 %v447, %v447
      %v460 = vpack.c.bf16 %v448, %v448
      %v461 = vpack.c.bf16 %v449, %v449
      %v462 = vpack.c.bf16 %v450, %v450
      %v463 = vld [vmem:[%s1] sm:$0xf]
      %v464 = vld [vmem:[%s1 + $0x4] sm:$0xf]
      %v465 = vld [vmem:[%s1 + $0x8] sm:$0xf]
      %v466 = vld [vmem:[%s1 + $0xc] sm:$0xf]
      %v467 = vld [vmem:[%s1 + $0x10] sm:$0xf]
      %v468 = vld [vmem:[%s1 + $0x14] sm:$0xf]
      %v469 = vld [vmem:[%s1 + $0x18] sm:$0xf]
      %v470 = vld [vmem:[%s1 + $0x1c] sm:$0xf]
      %v471 = vld [vmem:[%s1 + $0x20] sm:$0xf]
      %v472 = vld [vmem:[%s1 + $0x24] sm:$0xf]
      %v473 = vld [vmem:[%s1 + $0x28] sm:$0xf]
      %v474 = vld [vmem:[%s1 + $0x2c] sm:$0xf]
      %v475 = vld [vmem:[%s1 + $0x30] sm:$0xf]
      %v476 = vld [vmem:[%s1 + $0x34] sm:$0xf]
      %v477 = vld [vmem:[%s1 + $0x38] sm:$0xf]
      %v478 = vld [vmem:[%s1 + $0x3c] sm:$0xf]
      %vm479 = vsmask.f32 3328
      %vm480 = vsmask.f32 7440
      %vm481 = vmor %vm479, %vm480
      %v483 = vshrl.u32 %v451, 16
      %v485 = vrot.slane %v483, 4
      %v486 = vshll.u32 %v451, 16
      %v488 = vrot.slane %v486, 5
      %v489 = vor.u32 %v485, %v488
      %v490 = vrot.slane %v489, 4
      %v492 = vshll.u32 %v452, 16
      %v494 = vrot.slane %v492, 5
      %v495 = vsel %vm481, %v490, %v494
      %v497 = vshrl.u32 %v453, 16
      %v499 = vrot.slane %v497, 4
      %v500 = vshll.u32 %v453, 16
      %v502 = vrot.slane %v500, 5
      %v503 = vor.u32 %v499, %v502
      %v504 = vrot.slane %v503, 4
      %v506 = vshll.u32 %v454, 16
      %v508 = vrot.slane %v506, 5
      %v509 = vsel %vm481, %v504, %v508
      %v511 = vshrl.u32 %v455, 16
      %v513 = vrot.slane %v511, 4
      %v514 = vshll.u32 %v455, 16
      %v516 = vrot.slane %v514, 5
      %v517 = vor.u32 %v513, %v516
      %v518 = vrot.slane %v517, 4
      %v520 = vshll.u32 %v456, 16
      %v522 = vrot.slane %v520, 5
      %v523 = vsel %vm481, %v518, %v522
      %v525 = vshrl.u32 %v457, 16
      %v527 = vrot.slane %v525, 4
      %v528 = vshll.u32 %v457, 16
      %v530 = vrot.slane %v528, 5
      %v531 = vor.u32 %v527, %v530
      %v532 = vrot.slane %v531, 4
      %v534 = vshll.u32 %v458, 16
      %v536 = vrot.slane %v534, 5
      %v537 = vsel %vm481, %v532, %v536
      %s538 = scalar_lea.vmem %s1, 64
      %v539 = vld [vmem:[%s538] sm:$0xf]
      %v540 = vld [vmem:[%s538 + $0x4] sm:$0xf]
      %v541 = vld [vmem:[%s538 + $0x8] sm:$0xf]
      %v542 = vld [vmem:[%s538 + $0xc] sm:$0xf]
      %v543 = vld [vmem:[%s538 + $0x10] sm:$0xf]
      %v544 = vld [vmem:[%s538 + $0x14] sm:$0xf]
      %v545 = vld [vmem:[%s538 + $0x18] sm:$0xf]
      %v546 = vld [vmem:[%s538 + $0x1c] sm:$0xf]
      %v547 = vld [vmem:[%s538 + $0x20] sm:$0xf]
      %v548 = vld [vmem:[%s538 + $0x24] sm:$0xf]
      %v549 = vld [vmem:[%s538 + $0x28] sm:$0xf]
      %v550 = vld [vmem:[%s538 + $0x2c] sm:$0xf]
      %v551 = vld [vmem:[%s538 + $0x30] sm:$0xf]
      %v552 = vld [vmem:[%s538 + $0x34] sm:$0xf]
      %v553 = vld [vmem:[%s538 + $0x38] sm:$0xf]
      %v554 = vld [vmem:[%s538 + $0x3c] sm:$0xf]
      %v555 = vunpack.c.l.b16 %v495
      %v556 = vunpack.c.l.b16 %v509
      %v557 = vunpack.c.l.b16 %v523
      %v558 = vunpack.c.l.b16 %v537
      %v559 = vpack.c.b16 %v556, %v555
      %v560 = vpack.c.b16 %v558, %v557
      %v579 = vunpack.c.l.b16 %v539
      %v580 = vunpack.c.l.b16 %v540
      %v581 = vunpack.c.l.b16 %v541
      %v582 = vunpack.c.l.b16 %v542
      %v583 = vunpack.c.l.b16 %v543
      %v584 = vunpack.c.l.b16 %v544
      %v585 = vunpack.c.l.b16 %v545
      %v586 = vunpack.c.l.b16 %v546
      %v587 = vunpack.c.l.b16 %v547
      %v588 = vunpack.c.l.b16 %v548
      %v589 = vunpack.c.l.b16 %v549
      %v590 = vunpack.c.l.b16 %v550
      %v591 = vunpack.c.l.b16 %v551
      %v592 = vunpack.c.l.b16 %v552
      %v593 = vunpack.c.l.b16 %v553
      %v594 = vunpack.c.l.b16 %v554
      %v595 = vpack.c.b16 %v580, %v579
      %v596 = vpack.c.b16 %v582, %v581
      %v597 = vpack.c.b16 %v584, %v583
      %v598 = vpack.c.b16 %v586, %v585
      %v599 = vpack.c.b16 %v588, %v587
      %v600 = vpack.c.b16 %v590, %v589
      %v601 = vpack.c.b16 %v592, %v591
      %v602 = vpack.c.b16 %v594, %v593
      %611 = vmatpush.bf16.msra.mxu0 %v602
      %612 = vmatpush.bf16.msra.mxu0 %v601
      %613 = vmatpush.bf16.msra.mxu0 %v600
      %614 = vmatpush.bf16.msra.mxu0 %v599
      %615 = vmatpush.bf16.msra.mxu0 %v598
      %616 = vmatpush.bf16.msra.mxu0 %v597
      %617 = vmatpush.bf16.msra.mxu0 %v596
      %618 = vmatpush.bf16.msra.mxu0 %v595
      %619 = vmatmul.bf16.gmra.mxu0 %v559
      %v620 = vpop.f32.mrf.mxu0
      %v621 = vadd.f32 0.0, %v620
      %v622 = vpop.f32.mrf.mxu0
      %v623 = vadd.f32 0.0, %v622
      %624 = vmatmul.bf16.gmra.mxu0 %v560
      %v625 = vpop.f32.mrf.mxu0
      %v626 = vadd.f32 0.0, %v625
      %v627 = vpop.f32.mrf.mxu0
      %v628 = vadd.f32 0.0, %v627
      %629 = vdwg.mxu0
      %v634 = vunpack.c.l.b16 %v451
      %v635 = vunpack.c.l.b16 %v453
      %v636 = vunpack.c.l.b16 %v455
      %v637 = vunpack.c.l.b16 %v457
      %v638 = vpack.c.b16 %v635, %v634
      %v639 = vpack.c.b16 %v637, %v636
      %v658 = vunpack.c.l.b16 %v463
      %v659 = vunpack.c.l.b16 %v464
      %v660 = vunpack.c.l.b16 %v465
      %v661 = vunpack.c.l.b16 %v466
      %v662 = vunpack.c.l.b16 %v467
      %v663 = vunpack.c.l.b16 %v468
      %v664 = vunpack.c.l.b16 %v469
      %v665 = vunpack.c.l.b16 %v470
      %v666 = vunpack.c.l.b16 %v471
      %v667 = vunpack.c.l.b16 %v472
      %v668 = vunpack.c.l.b16 %v473
      %v669 = vunpack.c.l.b16 %v474
      %v670 = vunpack.c.l.b16 %v475
      %v671 = vunpack.c.l.b16 %v476
      %v672 = vunpack.c.l.b16 %v477
      %v673 = vunpack.c.l.b16 %v478
      %v674 = vpack.c.b16 %v659, %v658
      %v675 = vpack.c.b16 %v661, %v660
      %v676 = vpack.c.b16 %v663, %v662
      %v677 = vpack.c.b16 %v665, %v664
      %v678 = vpack.c.b16 %v667, %v666
      %v679 = vpack.c.b16 %v669, %v668
      %v680 = vpack.c.b16 %v671, %v670
      %v681 = vpack.c.b16 %v673, %v672
      %690 = vmatpush.bf16.msra.mxu0 %v681
      %691 = vmatpush.bf16.msra.mxu0 %v680
      %692 = vmatpush.bf16.msra.mxu0 %v679
      %693 = vmatpush.bf16.msra.mxu0 %v678
      %694 = vmatpush.bf16.msra.mxu0 %v677
      %695 = vmatpush.bf16.msra.mxu0 %v676
      %696 = vmatpush.bf16.msra.mxu0 %v675
      %697 = vmatpush.bf16.msra.mxu0 %v674
      %698 = vmatmul.bf16.gmra.mxu0 %v638
      %v699 = vpop.f32.mrf.mxu0
      %v700 = vadd.f32 %v621, %v699
      %v701 = vpop.f32.mrf.mxu0
      %v702 = vadd.f32 %v623, %v701
      %703 = vmatmul.bf16.gmra.mxu0 %v639
      %v704 = vpop.f32.mrf.mxu0
      %v705 = vadd.f32 %v626, %v704
      %v706 = vpop.f32.mrf.mxu0
      %v707 = vadd.f32 %v628, %v706
      %708 = vdwg.mxu0
      %vm713 = vcmask 1042432
      %vm714 = vcmask 1046532
      %vm715 = vmor %vm713, %vm714
      %v716 = vrot.slane %v451, 5
      %v717 = vrot.slane %v716, 4
      %v718 = vrot.slane %v452, 5
      %v719 = vsel %vm715, %v717, %v718
      %v720 = vrot.slane %v453, 5
      %v721 = vrot.slane %v720, 4
      %v722 = vrot.slane %v454, 5
      %v723 = vsel %vm715, %v721, %v722
      %v724 = vrot.slane %v455, 5
      %v725 = vrot.slane %v724, 4
      %v726 = vrot.slane %v456, 5
      %v727 = vsel %vm715, %v725, %v726
      %v728 = vrot.slane %v457, 5
      %v729 = vrot.slane %v728, 4
      %v730 = vrot.slane %v458, 5
      %v731 = vsel %vm715, %v729, %v730
      %s732 = scalar_lea.vmem %s1, 128
      %v733 = vld [vmem:[%s732] sm:$0xf]
      %v734 = vld [vmem:[%s732 + $0x4] sm:$0xf]
      %v735 = vld [vmem:[%s732 + $0x8] sm:$0xf]
      %v736 = vld [vmem:[%s732 + $0xc] sm:$0xf]
      %v737 = vld [vmem:[%s732 + $0x10] sm:$0xf]
      %v738 = vld [vmem:[%s732 + $0x14] sm:$0xf]
      %v739 = vld [vmem:[%s732 + $0x18] sm:$0xf]
      %v740 = vld [vmem:[%s732 + $0x1c] sm:$0xf]
      %v741 = vld [vmem:[%s732 + $0x20] sm:$0xf]
      %v742 = vld [vmem:[%s732 + $0x24] sm:$0xf]
      %v743 = vld [vmem:[%s732 + $0x28] sm:$0xf]
      %v744 = vld [vmem:[%s732 + $0x2c] sm:$0xf]
      %v745 = vld [vmem:[%s732 + $0x30] sm:$0xf]
      %v746 = vld [vmem:[%s732 + $0x34] sm:$0xf]
      %v747 = vld [vmem:[%s732 + $0x38] sm:$0xf]
      %v748 = vld [vmem:[%s732 + $0x3c] sm:$0xf]
      %v749 = vunpack.c.l.b16 %v719
      %v750 = vunpack.c.l.b16 %v723
      %v751 = vunpack.c.l.b16 %v727
      %v752 = vunpack.c.l.b16 %v731
      %v753 = vpack.c.b16 %v750, %v749
      %v754 = vpack.c.b16 %v752, %v751
      %v773 = vunpack.c.l.b16 %v733
      %v774 = vunpack.c.l.b16 %v734
      %v775 = vunpack.c.l.b16 %v735
      %v776 = vunpack.c.l.b16 %v736
      %v777 = vunpack.c.l.b16 %v737
      %v778 = vunpack.c.l.b16 %v738
      %v779 = vunpack.c.l.b16 %v739
      %v780 = vunpack.c.l.b16 %v740
      %v781 = vunpack.c.l.b16 %v741
      %v782 = vunpack.c.l.b16 %v742
      %v783 = vunpack.c.l.b16 %v743
      %v784 = vunpack.c.l.b16 %v744
      %v785 = vunpack.c.l.b16 %v745
      %v786 = vunpack.c.l.b16 %v746
      %v787 = vunpack.c.l.b16 %v747
      %v788 = vunpack.c.l.b16 %v748
      %v789 = vpack.c.b16 %v774, %v773
      %v790 = vpack.c.b16 %v776, %v775
      %v791 = vpack.c.b16 %v778, %v777
      %v792 = vpack.c.b16 %v780, %v779
      %v793 = vpack.c.b16 %v782, %v781
      %v794 = vpack.c.b16 %v784, %v783
      %v795 = vpack.c.b16 %v786, %v785
      %v796 = vpack.c.b16 %v788, %v787
      %805 = vmatpush.bf16.msra.mxu0 %v796
      %806 = vmatpush.bf16.msra.mxu0 %v795
      %807 = vmatpush.bf16.msra.mxu0 %v794
      %808 = vmatpush.bf16.msra.mxu0 %v793
      %809 = vmatpush.bf16.msra.mxu0 %v792
      %810 = vmatpush.bf16.msra.mxu0 %v791
      %811 = vmatpush.bf16.msra.mxu0 %v790
      %812 = vmatpush.bf16.msra.mxu0 %v789
      %813 = vmatmul.bf16.gmra.mxu0 %v753
      %v814 = vpop.f32.mrf.mxu0
      %v815 = vadd.f32 0.0, %v814
      %v816 = vpop.f32.mrf.mxu0
      %v817 = vadd.f32 0.0, %v816
      %818 = vmatmul.bf16.gmra.mxu0 %v754
      %v819 = vpop.f32.mrf.mxu0
      %v820 = vadd.f32 0.0, %v819
      %v821 = vpop.f32.mrf.mxu0
      %v822 = vadd.f32 0.0, %v821
      %823 = vdwg.mxu0
      %v824 = vadd.f32 %v700, %v815
      %v825 = vadd.f32 %v702, %v817
      %v826 = vadd.f32 %v705, %v820
      %v827 = vadd.f32 %v707, %v822
      %s828 = scalar_lea.vmem %s1, 192
      %v829 = vld [vmem:[%s828] sm:$0xf]
      %v830 = vld [vmem:[%s828 + $0x4] sm:$0xf]
      %v831 = vld [vmem:[%s828 + $0x8] sm:$0xf]
      %v832 = vld [vmem:[%s828 + $0xc] sm:$0xf]
      %v833 = vld [vmem:[%s828 + $0x10] sm:$0xf]
      %v834 = vld [vmem:[%s828 + $0x14] sm:$0xf]
      %v835 = vld [vmem:[%s828 + $0x18] sm:$0xf]
      %v836 = vld [vmem:[%s828 + $0x1c] sm:$0xf]
      %v837 = vld [vmem:[%s828 + $0x20] sm:$0xf]
      %v838 = vld [vmem:[%s828 + $0x24] sm:$0xf]
      %v839 = vld [vmem:[%s828 + $0x28] sm:$0xf]
      %v840 = vld [vmem:[%s828 + $0x2c] sm:$0xf]
      %v841 = vld [vmem:[%s828 + $0x30] sm:$0xf]
      %v842 = vld [vmem:[%s828 + $0x34] sm:$0xf]
      %v843 = vld [vmem:[%s828 + $0x38] sm:$0xf]
      %v844 = vld [vmem:[%s828 + $0x3c] sm:$0xf]
      %v846 = vunpack.c.l.b16 %v459
      %v847 = vpack.c.b16 %v636, %v635
      %v848 = vpack.c.b16 %v846, %v637
      %v867 = vunpack.c.l.b16 %v829
      %v868 = vunpack.c.l.b16 %v830
      %v869 = vunpack.c.l.b16 %v831
      %v870 = vunpack.c.l.b16 %v832
      %v871 = vunpack.c.l.b16 %v833
      %v872 = vunpack.c.l.b16 %v834
      %v873 = vunpack.c.l.b16 %v835
      %v874 = vunpack.c.l.b16 %v836
      %v875 = vunpack.c.l.b16 %v837
      %v876 = vunpack.c.l.b16 %v838
      %v877 = vunpack.c.l.b16 %v839
      %v878 = vunpack.c.l.b16 %v840
      %v879 = vunpack.c.l.b16 %v841
      %v880 = vunpack.c.l.b16 %v842
      %v881 = vunpack.c.l.b16 %v843
      %v882 = vunpack.c.l.b16 %v844
      %v883 = vpack.c.b16 %v868, %v867
      %v884 = vpack.c.b16 %v870, %v869
      %v885 = vpack.c.b16 %v872, %v871
      %v886 = vpack.c.b16 %v874, %v873
      %v887 = vpack.c.b16 %v876, %v875
      %v888 = vpack.c.b16 %v878, %v877
      %v889 = vpack.c.b16 %v880, %v879
      %v890 = vpack.c.b16 %v882, %v881
      %899 = vmatpush.bf16.msra.mxu0 %v890
      %900 = vmatpush.bf16.msra.mxu0 %v889
      %901 = vmatpush.bf16.msra.mxu0 %v888
      %902 = vmatpush.bf16.msra.mxu0 %v887
      %903 = vmatpush.bf16.msra.mxu0 %v886
      %904 = vmatpush.bf16.msra.mxu0 %v885
      %905 = vmatpush.bf16.msra.mxu0 %v884
      %906 = vmatpush.bf16.msra.mxu0 %v883
      %907 = vmatmul.bf16.gmra.mxu0 %v847
      %v908 = vpop.f32.mrf.mxu0
      %v909 = vadd.f32 0.0, %v908
      %v910 = vpop.f32.mrf.mxu0
      %v911 = vadd.f32 0.0, %v910
      %912 = vmatmul.bf16.gmra.mxu0 %v848
      %v913 = vpop.f32.mrf.mxu0
      %v914 = vadd.f32 0.0, %v913
      %v915 = vpop.f32.mrf.mxu0
      %v916 = vadd.f32 0.0, %v915
      %917 = vdwg.mxu0
      %v918 = vadd.f32 %v824, %v909
      %v919 = vadd.f32 %v825, %v911
      %v920 = vadd.f32 %v826, %v914
      %v921 = vadd.f32 %v827, %v916
      %v923 = vshrl.u32 %v459, 16
      %v925 = vrot.slane %v923, 4
      %v926 = vshll.u32 %v459, 16
      %v928 = vrot.slane %v926, 5
      %v929 = vor.u32 %v925, %v928
      %v930 = vrot.slane %v929, 4
      %v932 = vshll.u32 %v460, 16
      %v934 = vrot.slane %v932, 5
      %v935 = vsel %vm481, %v930, %v934
      %s936 = scalar_lea.vmem %s1, 256
      %v937 = vld [vmem:[%s936] sm:$0xf]
      %v938 = vld [vmem:[%s936 + $0x4] sm:$0xf]
      %v939 = vld [vmem:[%s936 + $0x8] sm:$0xf]
      %v940 = vld [vmem:[%s936 + $0xc] sm:$0xf]
      %v941 = vld [vmem:[%s936 + $0x10] sm:$0xf]
      %v942 = vld [vmem:[%s936 + $0x14] sm:$0xf]
      %v943 = vld [vmem:[%s936 + $0x18] sm:$0xf]
      %v944 = vld [vmem:[%s936 + $0x1c] sm:$0xf]
      %v945 = vld [vmem:[%s936 + $0x20] sm:$0xf]
      %v946 = vld [vmem:[%s936 + $0x24] sm:$0xf]
      %v947 = vld [vmem:[%s936 + $0x28] sm:$0xf]
      %v948 = vld [vmem:[%s936 + $0x2c] sm:$0xf]
      %v949 = vld [vmem:[%s936 + $0x30] sm:$0xf]
      %v950 = vld [vmem:[%s936 + $0x34] sm:$0xf]
      %v951 = vld [vmem:[%s936 + $0x38] sm:$0xf]
      %v952 = vld [vmem:[%s936 + $0x3c] sm:$0xf]
      %v953 = vunpack.c.l.b16 %v935
      %v954 = vpack.c.b16 %v557, %v556
      %v955 = vpack.c.b16 %v953, %v558
      %v974 = vunpack.c.l.b16 %v937
      %v975 = vunpack.c.l.b16 %v938
      %v976 = vunpack.c.l.b16 %v939
      %v977 = vunpack.c.l.b16 %v940
      %v978 = vunpack.c.l.b16 %v941
      %v979 = vunpack.c.l.b16 %v942
      %v980 = vunpack.c.l.b16 %v943
      %v981 = vunpack.c.l.b16 %v944
      %v982 = vunpack.c.l.b16 %v945
      %v983 = vunpack.c.l.b16 %v946
      %v984 = vunpack.c.l.b16 %v947
      %v985 = vunpack.c.l.b16 %v948
      %v986 = vunpack.c.l.b16 %v949
      %v987 = vunpack.c.l.b16 %v950
      %v988 = vunpack.c.l.b16 %v951
      %v989 = vunpack.c.l.b16 %v952
      %v990 = vpack.c.b16 %v975, %v974
      %v991 = vpack.c.b16 %v977, %v976
      %v992 = vpack.c.b16 %v979, %v978
      %v993 = vpack.c.b16 %v981, %v980
      %v994 = vpack.c.b16 %v983, %v982
      %v995 = vpack.c.b16 %v985, %v984
      %v996 = vpack.c.b16 %v987, %v986
      %v997 = vpack.c.b16 %v989, %v988
      %1006 = vmatpush.bf16.msra.mxu0 %v997
      %1007 = vmatpush.bf16.msra.mxu0 %v996
      %1008 = vmatpush.bf16.msra.mxu0 %v995
      %1009 = vmatpush.bf16.msra.mxu0 %v994
      %1010 = vmatpush.bf16.msra.mxu0 %v993
      %1011 = vmatpush.bf16.msra.mxu0 %v992
      %1012 = vmatpush.bf16.msra.mxu0 %v991
      %1013 = vmatpush.bf16.msra.mxu0 %v990
      %1014 = vmatmul.bf16.gmra.mxu0 %v954
      %v1015 = vpop.f32.mrf.mxu0
      %v1016 = vadd.f32 0.0, %v1015
      %v1017 = vpop.f32.mrf.mxu0
      %v1018 = vadd.f32 0.0, %v1017
      %1019 = vmatmul.bf16.gmra.mxu0 %v955
      %v1020 = vpop.f32.mrf.mxu0
      %v1021 = vadd.f32 0.0, %v1020
      %v1022 = vpop.f32.mrf.mxu0
      %v1023 = vadd.f32 0.0, %v1022
      %1024 = vdwg.mxu0
      %v1025 = vadd.f32 %v918, %v1016
      %v1026 = vadd.f32 %v919, %v1018
      %v1027 = vadd.f32 %v920, %v1021
      %v1028 = vadd.f32 %v921, %v1023
      %v1030 = vrot.slane %v459, 5
      %v1031 = vrot.slane %v1030, 4
      %v1032 = vrot.slane %v460, 5
      %v1033 = vsel %vm715, %v1031, %v1032
      %s1034 = scalar_lea.vmem %s1, 320
      %v1035 = vld [vmem:[%s1034] sm:$0xf]
      %v1036 = vld [vmem:[%s1034 + $0x4] sm:$0xf]
      %v1037 = vld [vmem:[%s1034 + $0x8] sm:$0xf]
      %v1038 = vld [vmem:[%s1034 + $0xc] sm:$0xf]
      %v1039 = vld [vmem:[%s1034 + $0x10] sm:$0xf]
      %v1040 = vld [vmem:[%s1034 + $0x14] sm:$0xf]
      %v1041 = vld [vmem:[%s1034 + $0x18] sm:$0xf]
      %v1042 = vld [vmem:[%s1034 + $0x1c] sm:$0xf]
      %v1043 = vld [vmem:[%s1034 + $0x20] sm:$0xf]
      %v1044 = vld [vmem:[%s1034 + $0x24] sm:$0xf]
      %v1045 = vld [vmem:[%s1034 + $0x28] sm:$0xf]
      %v1046 = vld [vmem:[%s1034 + $0x2c] sm:$0xf]
      %v1047 = vld [vmem:[%s1034 + $0x30] sm:$0xf]
      %v1048 = vld [vmem:[%s1034 + $0x34] sm:$0xf]
      %v1049 = vld [vmem:[%s1034 + $0x38] sm:$0xf]
      %v1050 = vld [vmem:[%s1034 + $0x3c] sm:$0xf]
      %v1051 = vunpack.c.l.b16 %v1033
      %v1052 = vpack.c.b16 %v751, %v750
      %v1053 = vpack.c.b16 %v1051, %v752
      %v1072 = vunpack.c.l.b16 %v1035
      %v1073 = vunpack.c.l.b16 %v1036
      %v1074 = vunpack.c.l.b16 %v1037
      %v1075 = vunpack.c.l.b16 %v1038
      %v1076 = vunpack.c.l.b16 %v1039
      %v1077 = vunpack.c.l.b16 %v1040
      %v1078 = vunpack.c.l.b16 %v1041
      %v1079 = vunpack.c.l.b16 %v1042
      %v1080 = vunpack.c.l.b16 %v1043
      %v1081 = vunpack.c.l.b16 %v1044
      %v1082 = vunpack.c.l.b16 %v1045
      %v1083 = vunpack.c.l.b16 %v1046
      %v1084 = vunpack.c.l.b16 %v1047
      %v1085 = vunpack.c.l.b16 %v1048
      %v1086 = vunpack.c.l.b16 %v1049
      %v1087 = vunpack.c.l.b16 %v1050
      %v1088 = vpack.c.b16 %v1073, %v1072
      %v1089 = vpack.c.b16 %v1075, %v1074
      %v1090 = vpack.c.b16 %v1077, %v1076
      %v1091 = vpack.c.b16 %v1079, %v1078
      %v1092 = vpack.c.b16 %v1081, %v1080
      %v1093 = vpack.c.b16 %v1083, %v1082
      %v1094 = vpack.c.b16 %v1085, %v1084
      %v1095 = vpack.c.b16 %v1087, %v1086
      %1104 = vmatpush.bf16.msra.mxu0 %v1095
      %1105 = vmatpush.bf16.msra.mxu0 %v1094
      %1106 = vmatpush.bf16.msra.mxu0 %v1093
      %1107 = vmatpush.bf16.msra.mxu0 %v1092
      %1108 = vmatpush.bf16.msra.mxu0 %v1091
      %1109 = vmatpush.bf16.msra.mxu0 %v1090
      %1110 = vmatpush.bf16.msra.mxu0 %v1089
      %1111 = vmatpush.bf16.msra.mxu0 %v1088
      %1112 = vmatmul.bf16.gmra.mxu0 %v1052
      %v1113 = vpop.f32.mrf.mxu0
      %v1114 = vadd.f32 0.0, %v1113
      %v1115 = vpop.f32.mrf.mxu0
      %v1116 = vadd.f32 0.0, %v1115
      %1117 = vmatmul.bf16.gmra.mxu0 %v1053
      %v1118 = vpop.f32.mrf.mxu0
      %v1119 = vadd.f32 0.0, %v1118
      %v1120 = vpop.f32.mrf.mxu0
      %v1121 = vadd.f32 0.0, %v1120
      %1122 = vdwg.mxu0
      %v1123 = vadd.f32 %v1025, %v1114
      %v1124 = vadd.f32 %v1026, %v1116
      %v1125 = vadd.f32 %v1027, %v1119
      %v1126 = vadd.f32 %v1028, %v1121
      %s1127 = scalar_lea.vmem %s1, 384
      %v1128 = vld [vmem:[%s1127] sm:$0xf]
      %v1129 = vld [vmem:[%s1127 + $0x4] sm:$0xf]
      %v1130 = vld [vmem:[%s1127 + $0x8] sm:$0xf]
      %v1131 = vld [vmem:[%s1127 + $0xc] sm:$0xf]
      %v1132 = vld [vmem:[%s1127 + $0x10] sm:$0xf]
      %v1133 = vld [vmem:[%s1127 + $0x14] sm:$0xf]
      %v1134 = vld [vmem:[%s1127 + $0x18] sm:$0xf]
      %v1135 = vld [vmem:[%s1127 + $0x1c] sm:$0xf]
      %v1136 = vld [vmem:[%s1127 + $0x20] sm:$0xf]
      %v1137 = vld [vmem:[%s1127 + $0x24] sm:$0xf]
      %v1138 = vld [vmem:[%s1127 + $0x28] sm:$0xf]
      %v1139 = vld [vmem:[%s1127 + $0x2c] sm:$0xf]
      %v1140 = vld [vmem:[%s1127 + $0x30] sm:$0xf]
      %v1141 = vld [vmem:[%s1127 + $0x34] sm:$0xf]
      %v1142 = vld [vmem:[%s1127 + $0x38] sm:$0xf]
      %v1143 = vld [vmem:[%s1127 + $0x3c] sm:$0xf]
      %v1145 = vunpack.c.l.b16 %v461
      %v1146 = vpack.c.b16 %v1145, %v846
      %v1164 = vunpack.c.l.b16 %v1128
      %v1165 = vunpack.c.l.b16 %v1129
      %v1166 = vunpack.c.l.b16 %v1130
      %v1167 = vunpack.c.l.b16 %v1131
      %v1168 = vunpack.c.l.b16 %v1132
      %v1169 = vunpack.c.l.b16 %v1133
      %v1170 = vunpack.c.l.b16 %v1134
      %v1171 = vunpack.c.l.b16 %v1135
      %v1172 = vunpack.c.l.b16 %v1136
      %v1173 = vunpack.c.l.b16 %v1137
      %v1174 = vunpack.c.l.b16 %v1138
      %v1175 = vunpack.c.l.b16 %v1139
      %v1176 = vunpack.c.l.b16 %v1140
      %v1177 = vunpack.c.l.b16 %v1141
      %v1178 = vunpack.c.l.b16 %v1142
      %v1179 = vunpack.c.l.b16 %v1143
      %v1180 = vpack.c.b16 %v1165, %v1164
      %v1181 = vpack.c.b16 %v1167, %v1166
      %v1182 = vpack.c.b16 %v1169, %v1168
      %v1183 = vpack.c.b16 %v1171, %v1170
      %v1184 = vpack.c.b16 %v1173, %v1172
      %v1185 = vpack.c.b16 %v1175, %v1174
      %v1186 = vpack.c.b16 %v1177, %v1176
      %v1187 = vpack.c.b16 %v1179, %v1178
      %1196 = vmatpush.bf16.msra.mxu0 %v1187
      %1197 = vmatpush.bf16.msra.mxu0 %v1186
      %1198 = vmatpush.bf16.msra.mxu0 %v1185
      %1199 = vmatpush.bf16.msra.mxu0 %v1184
      %1200 = vmatpush.bf16.msra.mxu0 %v1183
      %1201 = vmatpush.bf16.msra.mxu0 %v1182
      %1202 = vmatpush.bf16.msra.mxu0 %v1181
      %1203 = vmatpush.bf16.msra.mxu0 %v1180
      %1204 = vmatmul.bf16.gmra.mxu0 %v639
      %v1205 = vpop.f32.mrf.mxu0
      %v1206 = vadd.f32 0.0, %v1205
      %v1207 = vpop.f32.mrf.mxu0
      %v1208 = vadd.f32 0.0, %v1207
      %1209 = vmatmul.bf16.gmra.mxu0 %v1146
      %v1210 = vpop.f32.mrf.mxu0
      %v1211 = vadd.f32 0.0, %v1210
      %v1212 = vpop.f32.mrf.mxu0
      %v1213 = vadd.f32 0.0, %v1212
      %1214 = vdwg.mxu0
      %v1215 = vadd.f32 %v1123, %v1206
      %v1216 = vadd.f32 %v1124, %v1208
      %v1217 = vadd.f32 %v1125, %v1211
      %v1218 = vadd.f32 %v1126, %v1213
      %v1220 = vshrl.u32 %v461, 16
      %v1222 = vrot.slane %v1220, 4
      %v1223 = vshll.u32 %v461, 16
      %v1225 = vrot.slane %v1223, 5
      %v1226 = vor.u32 %v1222, %v1225
      %v1227 = vrot.slane %v1226, 4
      %v1229 = vshll.u32 %v462, 16
      %v1231 = vrot.slane %v1229, 5
      %v1232 = vsel %vm481, %v1227, %v1231
      %s1233 = scalar_lea.vmem %s1, 448
      %v1234 = vld [vmem:[%s1233] sm:$0xf]
      %v1235 = vld [vmem:[%s1233 + $0x4] sm:$0xf]
      %v1236 = vld [vmem:[%s1233 + $0x8] sm:$0xf]
      %v1237 = vld [vmem:[%s1233 + $0xc] sm:$0xf]
      %v1238 = vld [vmem:[%s1233 + $0x10] sm:$0xf]
      %v1239 = vld [vmem:[%s1233 + $0x14] sm:$0xf]
      %v1240 = vld [vmem:[%s1233 + $0x18] sm:$0xf]
      %v1241 = vld [vmem:[%s1233 + $0x1c] sm:$0xf]
      %v1242 = vld [vmem:[%s1233 + $0x20] sm:$0xf]
      %v1243 = vld [vmem:[%s1233 + $0x24] sm:$0xf]
      %v1244 = vld [vmem:[%s1233 + $0x28] sm:$0xf]
      %v1245 = vld [vmem:[%s1233 + $0x2c] sm:$0xf]
      %v1246 = vld [vmem:[%s1233 + $0x30] sm:$0xf]
      %v1247 = vld [vmem:[%s1233 + $0x34] sm:$0xf]
      %v1248 = vld [vmem:[%s1233 + $0x38] sm:$0xf]
      %v1249 = vld [vmem:[%s1233 + $0x3c] sm:$0xf]
      %v1250 = vunpack.c.l.b16 %v1232
      %v1251 = vpack.c.b16 %v1250, %v953
      %v1269 = vunpack.c.l.b16 %v1234
      %v1270 = vunpack.c.l.b16 %v1235
      %v1271 = vunpack.c.l.b16 %v1236
      %v1272 = vunpack.c.l.b16 %v1237
      %v1273 = vunpack.c.l.b16 %v1238
      %v1274 = vunpack.c.l.b16 %v1239
      %v1275 = vunpack.c.l.b16 %v1240
      %v1276 = vunpack.c.l.b16 %v1241
      %v1277 = vunpack.c.l.b16 %v1242
      %v1278 = vunpack.c.l.b16 %v1243
      %v1279 = vunpack.c.l.b16 %v1244
      %v1280 = vunpack.c.l.b16 %v1245
      %v1281 = vunpack.c.l.b16 %v1246
      %v1282 = vunpack.c.l.b16 %v1247
      %v1283 = vunpack.c.l.b16 %v1248
      %v1284 = vunpack.c.l.b16 %v1249
      %v1285 = vpack.c.b16 %v1270, %v1269
      %v1286 = vpack.c.b16 %v1272, %v1271
      %v1287 = vpack.c.b16 %v1274, %v1273
      %v1288 = vpack.c.b16 %v1276, %v1275
      %v1289 = vpack.c.b16 %v1278, %v1277
      %v1290 = vpack.c.b16 %v1280, %v1279
      %v1291 = vpack.c.b16 %v1282, %v1281
      %v1292 = vpack.c.b16 %v1284, %v1283
      %1301 = vmatpush.bf16.msra.mxu0 %v1292
      %1302 = vmatpush.bf16.msra.mxu0 %v1291
      %1303 = vmatpush.bf16.msra.mxu0 %v1290
      %1304 = vmatpush.bf16.msra.mxu0 %v1289
      %1305 = vmatpush.bf16.msra.mxu0 %v1288
      %1306 = vmatpush.bf16.msra.mxu0 %v1287
      %1307 = vmatpush.bf16.msra.mxu0 %v1286
      %1308 = vmatpush.bf16.msra.mxu0 %v1285
      %1309 = vmatmul.bf16.gmra.mxu0 %v560
      %v1310 = vpop.f32.mrf.mxu0
      %v1311 = vadd.f32 0.0, %v1310
      %v1312 = vpop.f32.mrf.mxu0
      %v1313 = vadd.f32 0.0, %v1312
      %1314 = vmatmul.bf16.gmra.mxu0 %v1251
      %v1315 = vpop.f32.mrf.mxu0
      %v1316 = vadd.f32 0.0, %v1315
      %v1317 = vpop.f32.mrf.mxu0
      %v1318 = vadd.f32 0.0, %v1317
      %1319 = vdwg.mxu0
      %v1320 = vadd.f32 %v1215, %v1311
      %v1321 = vadd.f32 %v1216, %v1313
      %v1322 = vadd.f32 %v1217, %v1316
      %v1323 = vadd.f32 %v1218, %v1318
      %v1325 = vrot.slane %v461, 5
      %v1326 = vrot.slane %v1325, 4
      %v1327 = vrot.slane %v462, 5
      %v1328 = vsel %vm715, %v1326, %v1327
      %s1329 = scalar_lea.vmem %s1, 512
      %v1330 = vld [vmem:[%s1329] sm:$0xf]
      %v1331 = vld [vmem:[%s1329 + $0x4] sm:$0xf]
      %v1332 = vld [vmem:[%s1329 + $0x8] sm:$0xf]
      %v1333 = vld [vmem:[%s1329 + $0xc] sm:$0xf]
      %v1334 = vld [vmem:[%s1329 + $0x10] sm:$0xf]
      %v1335 = vld [vmem:[%s1329 + $0x14] sm:$0xf]
      %v1336 = vld [vmem:[%s1329 + $0x18] sm:$0xf]
      %v1337 = vld [vmem:[%s1329 + $0x1c] sm:$0xf]
      %v1338 = vld [vmem:[%s1329 + $0x20] sm:$0xf]
      %v1339 = vld [vmem:[%s1329 + $0x24] sm:$0xf]
      %v1340 = vld [vmem:[%s1329 + $0x28] sm:$0xf]
      %v1341 = vld [vmem:[%s1329 + $0x2c] sm:$0xf]
      %v1342 = vld [vmem:[%s1329 + $0x30] sm:$0xf]
      %v1343 = vld [vmem:[%s1329 + $0x34] sm:$0xf]
      %v1344 = vld [vmem:[%s1329 + $0x38] sm:$0xf]
      %v1345 = vld [vmem:[%s1329 + $0x3c] sm:$0xf]
      %v1346 = vunpack.c.l.b16 %v1328
      %v1347 = vpack.c.b16 %v1346, %v1051
      %v1365 = vunpack.c.l.b16 %v1330
      %v1366 = vunpack.c.l.b16 %v1331
      %v1367 = vunpack.c.l.b16 %v1332
      %v1368 = vunpack.c.l.b16 %v1333
      %v1369 = vunpack.c.l.b16 %v1334
      %v1370 = vunpack.c.l.b16 %v1335
      %v1371 = vunpack.c.l.b16 %v1336
      %v1372 = vunpack.c.l.b16 %v1337
      %v1373 = vunpack.c.l.b16 %v1338
      %v1374 = vunpack.c.l.b16 %v1339
      %v1375 = vunpack.c.l.b16 %v1340
      %v1376 = vunpack.c.l.b16 %v1341
      %v1377 = vunpack.c.l.b16 %v1342
      %v1378 = vunpack.c.l.b16 %v1343
      %v1379 = vunpack.c.l.b16 %v1344
      %v1380 = vunpack.c.l.b16 %v1345
      %v1381 = vpack.c.b16 %v1366, %v1365
      %v1382 = vpack.c.b16 %v1368, %v1367
      %v1383 = vpack.c.b16 %v1370, %v1369
      %v1384 = vpack.c.b16 %v1372, %v1371
      %v1385 = vpack.c.b16 %v1374, %v1373
      %v1386 = vpack.c.b16 %v1376, %v1375
      %v1387 = vpack.c.b16 %v1378, %v1377
      %v1388 = vpack.c.b16 %v1380, %v1379
      %1397 = vmatpush.bf16.msra.mxu0 %v1388
      %1398 = vmatpush.bf16.msra.mxu0 %v1387
      %1399 = vmatpush.bf16.msra.mxu0 %v1386
      %1400 = vmatpush.bf16.msra.mxu0 %v1385
      %1401 = vmatpush.bf16.msra.mxu0 %v1384
      %1402 = vmatpush.bf16.msra.mxu0 %v1383
      %1403 = vmatpush.bf16.msra.mxu0 %v1382
      %1404 = vmatpush.bf16.msra.mxu0 %v1381
      %1405 = vmatmul.bf16.gmra.mxu0 %v754
      %v1406 = vpop.f32.mrf.mxu0
      %v1407 = vadd.f32 0.0, %v1406
      %v1408 = vpop.f32.mrf.mxu0
      %v1409 = vadd.f32 0.0, %v1408
      %1410 = vmatmul.bf16.gmra.mxu0 %v1347
      %v1411 = vpop.f32.mrf.mxu0
      %v1412 = vadd.f32 0.0, %v1411
      %v1413 = vpop.f32.mrf.mxu0
      %v1414 = vadd.f32 0.0, %v1413
      %1415 = vdwg.mxu0
      %v1416 = vadd.f32 %v1320, %v1407
      %v1417 = vadd.f32 %v1321, %v1409
      %v1418 = vadd.f32 %v1322, %v1412
      %v1419 = vadd.f32 %v1323, %v1414
      %v1420 = vpack.c.bf16 %v1416, %v1416
      %v1421 = vpack.c.bf16 %v1417, %v1417
      %v1422 = vpack.c.bf16 %v1418, %v1418
      %v1423 = vpack.c.bf16 %v1419, %v1419
      %1424 = vst [vmem:[%s296] sm:$0xf] %v1420
      %1425 = vst [vmem:[%s296 + $0x4] sm:$0xf] %v1421
      %1426 = vst [vmem:[%s296 + $0x8] sm:$0xf] %v1422
      %1427 = vst [vmem:[%s296 + $0xc] sm:$0xf] %v1423
      %v1428 = vadd.f32 %v1416, %v1417
      %v1429 = vadd.f32 %v1428, %v1418
      %v1430 = vadd.f32 %v1429, %v1419
      %v1431 = vrot.slane %v1430, 4
      %v1432 = vadd.f32 %v1430, %v1431
      %v1433 = vrot.slane %v1432, 2
      %v1434 = vadd.f32 %v1432, %v1433
      %v1435 = vrot.slane %v1434, 1
      %v1436 = vadd.f32 %v1434, %v1435
      %1437 = vst [vmem:[%s304] sm:$0x1] %v1436
      %v1438 = vmul.f32 %v1416, %v1416
      %v1439 = vmul.f32 %v1417, %v1417
      %v1440 = vmul.f32 %v1418, %v1418
      %v1441 = vmul.f32 %v1419, %v1419
      %v1442 = vadd.f32 %v1438, %v1439
      %v1443 = vadd.f32 %v1442, %v1440
      %v1444 = vadd.f32 %v1443, %v1441
      %v1445 = vrot.slane %v1444, 4
      %v1446 = vadd.f32 %v1444, %v1445
      %v1447 = vrot.slane %v1446, 2
      %v1448 = vadd.f32 %v1446, %v1447
      %v1449 = vrot.slane %v1448, 1
      %v1450 = vadd.f32 %v1448, %v1449
      %1451 = vst [vmem:[%s311] sm:$0x1] %v1450
      %s1452 = smul.u32 4, %s23
      %p1453 = scmp.lt.s32.totalorder %s22, 1
      %s1454 = scalar_select %p1453, %s22, 1
      %p1455 = scmp.lt.s32.totalorder %s1452, 7
      %s1456 = scalar_select %p1455, %s1452, 7
      %s1457 = smul.addr %s1454, 8
      %s1458 = sadd.s32 %s1456, %s1457
      %s1459 = smul.addr %s1458, 4
      %s1460 = scalar_lea.vmem %s4, %s1459
      %p1461 = scmp.lt.s32.totalorder %s22, 1
      %s1462 = scalar_select %p1461, %s22, 1
      %p1463 = scmp.lt.s32.totalorder %s23, 1
      %s1464 = scalar_select %p1463, %s23, 1
      %s1465 = smul.addr %s1462, 2
      %s1466 = sadd.s32 %s1464, %s1465
      %s1467 = scalar_lea.vmem %s5, %s1466
      %p1468 = scmp.lt.s32.totalorder %s22, 1
      %s1469 = scalar_select %p1468, %s22, 1
      %p1470 = scmp.lt.s32.totalorder %s23, 1
      %s1471 = scalar_select %p1470, %s23, 1
      %s1472 = smul.addr %s1469, 2
      %s1473 = sadd.s32 %s1471, %s1472
      %s1474 = scalar_lea.vmem %s6, %s1473
      // Predicated region
      $region37: #{basic_block_forward.4} parent=35 // pred_check
        %p1475 = pneg %p139
      $region38: #{basic_block_forward.4} parent=35 // pred_check_branch
        %1477 = sbr.rel (%p1475) target = $region40
      $region39: #{basic_block_forward.4} parent=35 // pred_region
        %s1478 = smul.u32 4, %s23
      $region40: #{basic_block_forward.4} parent=35 // pred_fallthru
        _
      // Predicated region
      $region41: #{basic_block_forward.4} parent=35 // pred_check
        %p1479 = pneg %p167
      $region42: #{basic_block_forward.4} parent=35 // pred_check_branch
        %1481 = sbr.rel (%p1479) target = $region44
      $region43: #{basic_block_forward.4} parent=35 // pred_region
        _
      $region44: #{basic_block_forward.4} parent=35 // pred_fallthru
        _
      // Predicated region
      $region45: #{basic_block_forward.4} parent=35 // pred_check
        %p1482 = pneg %p195
      $region46: #{basic_block_forward.4} parent=35 // pred_check_branch
        %1484 = sbr.rel (%p1482) target = $region48
      $region47: #{basic_block_forward.4} parent=35 // pred_region
        _
      $region48: #{basic_block_forward.4} parent=35 // pred_fallthru
        _
    $region36: #{basic_block_forward.4} parent=5 // pred_fallthru
      _
    %p1485 = scmp.le.s32.totalorder 2, %s13
    // Predicated region
    $region49: #{basic_block_forward.4} parent=5 // pred_check
      %p1486 = pneg %p1485
    $region50: #{basic_block_forward.4} parent=5 // pred_check_branch
      %1488 = sbr.rel (%p1486) target = $region52
    $region51: #{basic_block_forward.4} parent=5 // pred_region
      %s1489 = ssub.s32 %s13, 2
      // Predicated region
      $region53: #{basic_block_forward.4} parent=51 // pred_check
        %p1490 = pneg %p145
      $region54: #{basic_block_forward.4} parent=51 // pred_check_branch
        %1492 = sbr.rel (%p1490) target = $region56
      $region55: #{basic_block_forward.4} parent=51 // pred_region
        %s1493 = smul.u32 4, %s25
        %p1494 = scmp.lt.s32.totalorder %s24, 1
        %s1495 = scalar_select %p1494, %s24, 1
        %p1496 = scmp.lt.s32.totalorder %s1493, 7
        %s1497 = scalar_select %p1496, %s1493, 7
        %s1498 = smul.addr %s1495, 8
        %s1499 = sadd.s32 %s1497, %s1498
        %s1500 = smul.addr %s1499, 4
        %s1501 = scalar_lea.vmem %s4, %s1500
      $region56: #{basic_block_forward.4} parent=51 // pred_fallthru
        _
      // Predicated region
      $region57: #{basic_block_forward.4} parent=51 // pred_check
        %p1502 = pneg %p173
      $region58: #{basic_block_forward.4} parent=51 // pred_check_branch
        %1504 = sbr.rel (%p1502) target = $region60
      $region59: #{basic_block_forward.4} parent=51 // pred_region
        %p1505 = scmp.lt.s32.totalorder %s24, 1
        %s1506 = scalar_select %p1505, %s24, 1
        %p1507 = scmp.lt.s32.totalorder %s25, 1
        %s1508 = scalar_select %p1507, %s25, 1
        %s1509 = smul.addr %s1506, 2
        %s1510 = sadd.s32 %s1508, %s1509
        %s1511 = scalar_lea.vmem %s5, %s1510
      $region60: #{basic_block_forward.4} parent=51 // pred_fallthru
        _
      // Predicated region
      $region61: #{basic_block_forward.4} parent=51 // pred_check
        %p1512 = pneg %p201
      $region62: #{basic_block_forward.4} parent=51 // pred_check_branch
        %1514 = sbr.rel (%p1512) target = $region64
      $region63: #{basic_block_forward.4} parent=51 // pred_region
        %p1515 = scmp.lt.s32.totalorder %s24, 1
        %s1516 = scalar_select %p1515, %s24, 1
        %p1517 = scmp.lt.s32.totalorder %s25, 1
        %s1518 = scalar_select %p1517, %s25, 1
        %s1519 = smul.addr %s1516, 2
        %s1520 = sadd.s32 %s1518, %s1519
        %s1521 = scalar_lea.vmem %s6, %s1520
      $region64: #{basic_block_forward.4} parent=51 // pred_fallthru
        _
    $region52: #{basic_block_forward.4} parent=5 // pred_fallthru
      _
  $region6: #{basic_block_forward.4} parent=0 // loop_footer
    %s17 = sadd.s32 1, %s13
  $region7: #{basic_block_forward.4} parent=0 // loop_footer_branch
    %12 = sbr.rel target = $region3
  $region8: #{basic_block_forward.4} parent=0 // loop_exit
    _

</llo_original>
